<compile_context>
chip_gen: v5e
topology: v5e:2x2
jax: 0.10.0
libtpu: 0.0.40
codegen_flags: <defaults>
</compile_context>

<pallas_src>
import functools

import jax
import jax.numpy as jnp
from jax.experimental import pallas as pl
from jax.experimental.pallas import tpu as pltpu


_VMEM_LIMIT = 32 * 1024 * 1024  # raises v5e's 16 MiB scoped default; fits v7x (64 MiB phys)


def _round_up(n, m):
    return ((n + m - 1) // m) * m


def _row_tile(m, target, split_min=256):
    """Row-tile size.  Whole extent if it fits; otherwise `target`.  If a single
    tile would cover everything but the extent splits cleanly, halve it so the
    grid keeps >= 2 'parallel' steps (v7x dual TensorCore)."""
    if m > target:
        return target
    if m >= split_min and m % 32 == 0:
        return m // 2
    return m


# ---------------------------------------------------------------------------
# Kernel 1: fused conv (im2col matmul) + bias + ReLU + 2x2 max-pool
# ---------------------------------------------------------------------------

def _conv_relu_pool_kernel(x_ref, w_ref, b_ref, o_ref):
    """x_ref: (4, TM, K) bf16 -- 4 pool-window phases of the im2col patches.
    w_ref: (K, N) bf16, b_ref: (1, N) f32, o_ref: (TM, N) bf16 (pooled rows)."""
    w = w_ref[...]
    acc = jnp.dot(x_ref[0], w, preferred_element_type=jnp.float32)
    for p in range(1, 4):
        acc = jnp.maximum(
            acc, jnp.dot(x_ref[p], w, preferred_element_type=jnp.float32))
    # Bias is shared by all phases (max-then-bias == bias-then-max) and ReLU is
    # monotone (relu-then-pool == pool-then-relu), so this equals pool(relu(conv)).
    o_ref[...] = jnp.maximum(acc + b_ref[...], 0.0).astype(o_ref.dtype)


def _pool_phase_patches(xb, k, pr, pc, k_pad):
    """Strided im2col for pool phase (pr, pc): rows are (b, ph, pw) of the POOLED
    output grid, columns are (kh, kw, cin) taps, zero-padded to k_pad."""
    B, H, W, C = xb.shape
    PH, PW = (H - k + 1) // 2, (W - k + 1) // 2
    cols = [
        xb[:, pr + di: pr + di + 2 * PH: 2, pc + dj: pc + dj + 2 * PW: 2, :]
        for di in range(k) for dj in range(k)
    ]
    if k_pad > k * k * C:
        cols.append(jnp.zeros((B, PH, PW, k_pad - k * k * C), xb.dtype))
    return jnp.concatenate(cols, axis=-1).reshape(B * PH * PW, k_pad)


def conv2d_relu_pool(x, w_mat, b, *, k=3, tile_m=1024):
    """nn.Conv2d(k, valid, stride 1) + ReLU + nn.MaxPool2d(2, 2) (floor), NHWC.

    x:     (B, H, W, C), cast to bf16 internally.
    w_mat: (Kpad, O) bf16, rows in (kh, kw, cin) order then zero padding rows
           (= torch_w.permute(2, 3, 1, 0).reshape(-1, O), padded to Kpad).
    b:     (O,) f32.
    Returns (B, (H-k+1)//2, (W-k+1)//2, O) bf16.
    """
    B, H, W, C = x.shape
    Kp, N = w_mat.shape
    assert Kp == _round_up(k * k * C, 8), (Kp, k, C)
    PH, PW = (H - k + 1) // 2, (W - k + 1) // 2
    xb = x.astype(jnp.bfloat16)
    phases = jnp.stack(
        [_pool_phase_patches(xb, k, pr, pc, Kp) for pr in (0, 1) for pc in (0, 1)],
        axis=0)                                               # (4, M, Kp) bf16
    M = B * PH * PW
    tm = _row_tile(M, tile_m)
    grid = (pl.cdiv(M, tm),)
    cost = pl.CostEstimate(
        flops=2 * 4 * M * Kp * N,
        transcendentals=0,
        bytes_accessed=4 * M * Kp * 2 + Kp * N * 2 + N * 4 + M * N * 2,
    )
    out = pl.pallas_call(
        _conv_relu_pool_kernel,
        out_shape=jax.ShapeDtypeStruct((M, N), jnp.bfloat16),
        grid=grid,
        in_specs=[
            pl.BlockSpec((4, tm, Kp), lambda i: (0, i, 0)),
            pl.BlockSpec((Kp, N), lambda i: (0, 0)),
            pl.BlockSpec((1, N), lambda i: (0, 0)),
        ],
        out_specs=pl.BlockSpec((tm, N), lambda i: (i, 0)),
        compiler_params=pltpu.CompilerParams(
            dimension_semantics=("parallel",),
            vmem_limit_bytes=_VMEM_LIMIT,
        ),
        cost_estimate=cost,
    )(phases, w_mat, b.reshape(1, N))
    return out.reshape(B, PH, PW, N)


# ---------------------------------------------------------------------------
# Kernel 2: tiled matmul + bias (+ ReLU)  (used for get_embedding's fc1)
# ---------------------------------------------------------------------------

def _matmul_bias_kernel(x_ref, w_ref, b_ref, o_ref, *, relu):
    acc = jnp.dot(x_ref[...], w_ref[...], preferred_element_type=jnp.float32)
    acc = acc + b_ref[...]
    if relu:
        acc = jnp.maximum(acc, 0.0)
    o_ref[...] = acc.astype(o_ref.dtype)


def matmul_bias(x, w, b, *, relu, out_dtype=jnp.float32, tile_m=1024):
    """x:(M,K) @ w:(K,N) + b:(N,), optional fused ReLU, row-tiled on the MXU."""
    M, K = x.shape
    K2, N = w.shape
    assert K == K2
    tm = _row_tile(M, tile_m)
    grid = (pl.cdiv(M, tm),)
    kernel = functools.partial(_matmul_bias_kernel, relu=relu)
    out_itemsize = jnp.dtype(out_dtype).itemsize
    cost = pl.CostEstimate(
        flops=2 * M * K * N,
        transcendentals=0,
        bytes_accessed=(M * K * x.dtype.itemsize + K * N * w.dtype.itemsize
                        + N * 4 + M * N * out_itemsize),
    )
    return pl.pallas_call(
        kernel,
        out_shape=jax.ShapeDtypeStruct((M, N), out_dtype),
        grid=grid,
        in_specs=[
            pl.BlockSpec((tm, K), lambda i: (i, 0)),
            pl.BlockSpec((K, N), lambda i: (0, 0)),
            pl.BlockSpec((1, N), lambda i: (0, 0)),
        ],
        out_specs=pl.BlockSpec((tm, N), lambda i: (i, 0)),
        compiler_params=pltpu.CompilerParams(
            dimension_semantics=("parallel",),
            vmem_limit_bytes=_VMEM_LIMIT,
        ),
        cost_estimate=cost,
    )(x, w, b.reshape(1, N))


# ---------------------------------------------------------------------------
# Kernel 3: fused FC head  (fc1 + ReLU -> fc2 + ReLU -> fc3, lane-padded)
# ---------------------------------------------------------------------------

def _fused_fc_kernel(x_ref, w1_ref, b1_ref, w2_ref, b2_ref, w3_ref, b3_ref, o_ref):
    h1 = jnp.dot(x_ref[...], w1_ref[...], preferred_element_type=jnp.float32)
    h1 = jnp.maximum(h1 + b1_ref[...], 0.0)                      # (TM, 64) embedding
    h2 = jnp.dot(h1.astype(jnp.bfloat16), w2_ref[...],
                 preferred_element_type=jnp.float32)
    h2 = jnp.maximum(h2 + b2_ref[...], 0.0)                      # (TM, 128)
    out = jnp.dot(h2.astype(jnp.bfloat16), w3_ref[...],
                  preferred_element_type=jnp.float32)
    o_ref[...] = out + b3_ref[...]                               # (TM, 128) padded logits


def fused_fc_head(x, w1, b1, w2, b2, w3p, b3p, *, tile_m=1024):
    """One pallas_call for the whole MLP head.  Returns (M, 128) padded logits."""
    M, K = x.shape
    H1, H2, NP = w1.shape[1], w2.shape[1], w3p.shape[1]
    tm = _row_tile(M, tile_m)
    grid = (pl.cdiv(M, tm),)
    wbytes = (K * H1 + H1 * H2 + H2 * NP) * 2
    cost = pl.CostEstimate(
        flops=2 * M * (K * H1 + H1 * H2 + H2 * NP),
        transcendentals=0,
        bytes_accessed=M * K * 2 + wbytes + (H1 + H2 + NP) * 4 + M * NP * 4,
    )
    return pl.pallas_call(
        _fused_fc_kernel,
        out_shape=jax.ShapeDtypeStruct((M, NP), jnp.float32),
        grid=grid,
        in_specs=[
            pl.BlockSpec((tm, K), lambda i: (i, 0)),
            pl.BlockSpec((K, H1), lambda i: (0, 0)),
            pl.BlockSpec((1, H1), lambda i: (0, 0)),
            pl.BlockSpec((H1, H2), lambda i: (0, 0)),
            pl.BlockSpec((1, H2), lambda i: (0, 0)),
            pl.BlockSpec((H2, NP), lambda i: (0, 0)),
            pl.BlockSpec((1, NP), lambda i: (0, 0)),
        ],
        out_specs=pl.BlockSpec((tm, NP), lambda i: (i, 0)),
        compiler_params=pltpu.CompilerParams(
            dimension_semantics=("parallel",),
            vmem_limit_bytes=_VMEM_LIMIT,
        ),
        cost_estimate=cost,
    )(x, w1, b1.reshape(1, H1), w2, b2.reshape(1, H2), w3p, b3p.reshape(1, NP))


# ---------------------------------------------------------------------------
# Model: parameters + forward
# ---------------------------------------------------------------------------

def init_params(embedding_dim=64, seed=42):
    keys = jax.random.split(jax.random.PRNGKey(seed), 10)
    s = 0.05
    f32, bf16 = jnp.float32, jnp.bfloat16
    # Conv weights matmul-ready (Kpad, Cout), rows in (kh, kw, cin) order
    # (= torch w.permute(2, 3, 1, 0).reshape(-1, Cout)); padding rows are zero.
    w_conv1 = jnp.zeros((16, 32), f32).at[:9].set(
        s * jax.random.normal(keys[0], (9, 32), f32))            # Kpad(9)=16
    w_conv2 = s * jax.random.normal(keys[2], (3 * 3 * 32, 64), f32)  # 288 rows
    # fc1 consumes the NHWC flatten (h, w, c); from torch:
    # w.view(E, 64, 5, 5).permute(2, 3, 1, 0).reshape(1600, E).
    w_fc1 = s * jax.random.normal(keys[4], (5 * 5 * 64, embedding_dim), f32)
    w_fc2 = s * jax.random.normal(keys[6], (embedding_dim, 128), f32)
    # fc3 zero-padded from N=10 to 128 lanes (lane-dense store); forward slices
    # [:, :10].  Columns/entries 10..127 MUST remain exactly zero.
    w_fc3 = s * jax.random.normal(keys[8], (128, 10), f32)
    b_fc3 = s * jax.random.normal(keys[9], (10,), f32)
    w_fc3_pad = jnp.zeros((128, 128), f32).at[:, :10].set(w_fc3)
    b_fc3_pad = jnp.zeros((128,), f32).at[:10].set(b_fc3)
    return {
        "w_conv1": w_conv1.astype(bf16),
        "b_conv1": s * jax.random.normal(keys[1], (32,), f32),
        "w_conv2": w_conv2.astype(bf16),
        "b_conv2": s * jax.random.normal(keys[3], (64,), f32),
        "w_fc1": w_fc1.astype(bf16),
        "b_fc1": s * jax.random.normal(keys[5], (embedding_dim,), f32),
        "w_fc2": w_fc2.astype(bf16),
        "b_fc2": s * jax.random.normal(keys[7], (128,), f32),
        "w_fc3_pad": w_fc3_pad.astype(bf16),
        "b_fc3_pad": b_fc3_pad,
    }


def _features(params, x_nchw):
    B, C, H, W = x_nchw.shape
    assert C == 1, "EmbedMNISTNet expects 1-channel input"
    x = x_nchw.reshape(B, H, W, 1)                                   # NCHW -> NHWC: zero-copy (C==1)
    x = conv2d_relu_pool(x, params["w_conv1"], params["b_conv1"],
                         tile_m=2048)                                # (B, 13, 13, 32) bf16
    x = conv2d_relu_pool(x, params["w_conv2"], params["b_conv2"],
                         tile_m=1024)                                # (B, 5, 5, 64) bf16
    return x.reshape(B, 5 * 5 * 64)                                  # (B, 1600), (h, w, c) order


def embed_mnist_net_forward(params, x):
    """Forward pass of EmbedMNISTNet.  x: (B, 1, 28, 28) f32 -> (B, 10) f32."""
    feat = _features(params, x)                                      # (B, 1600) bf16
    logits_padded = fused_fc_head(
        feat,
        params["w_fc1"], params["b_fc1"],
        params["w_fc2"], params["b_fc2"],
        params["w_fc3_pad"], params["b_fc3_pad"],
    )                                                                # (B, 128) f32
    return logits_padded[:, :10]


def get_embedding(params, x):
    """embedding = ReLU(fc1(features(x))).  Returns (B, embedding_dim) f32."""
    feat = _features(params, x)
    return matmul_bias(feat, params["w_fc1"], params["b_fc1"],
                       relu=True, out_dtype=jnp.float32)             # (B, 64)


# ---------------------------------------------------------------------------
# Main
# ---------------------------------------------------------------------------

if __name__ == "__main__":
    # MNIST geometry is baked into the module (64*5*5 flatten) -> spatial = 28.
    batch = 2
    key = jax.random.PRNGKey(0)
    x = jax.random.normal(key, (batch, 1, 28, 28), jnp.float32)

    params = init_params(embedding_dim=64)

    logits = jax.jit(embed_mnist_net_forward)(params, x)
    jax.block_until_ready(logits)
    assert logits.shape == (batch, 10), logits.shape
    assert logits.dtype == jnp.float32
    assert bool(jnp.all(jnp.isfinite(logits)))

    emb = jax.jit(get_embedding)(params, x)
    jax.block_until_ready(emb)
    assert emb.shape == (batch, 64), emb.shape
    assert bool(jnp.all(jnp.isfinite(emb)))

    print("KERNEL_OK")
</pallas_src>

<mosaic_0001>
module attributes {stable_mosaic.version = 11 : i64} {
  func.func @_conv_relu_pool_kernel(%arg0: i32, %arg1: memref<4x338x16xbf16, #tpu.memory_space<vmem>>, %arg2: memref<16x32xbf16, #tpu.memory_space<vmem>>, %arg3: memref<1x32xf32, #tpu.memory_space<vmem>>, %arg4: memref<338x32xbf16, #tpu.memory_space<vmem>>) attributes {dimension_semantics = [#tpu.dimension_semantics<parallel>], iteration_bounds = array<i64: 1>, scalar_prefetch = 0 : i64, scratch_operands = 0 : i64, tpu.core_type = #tpu.core_type<tc>, window_params = [{transform_indices = @transform_0, window_bounds = array<i64: 4, 338, 16>}, {pipeline_mode = #tpu.pipeline_mode<synchronous>, transform_indices = @transform_1, window_bounds = array<i64: 16, 32>}, {pipeline_mode = #tpu.pipeline_mode<synchronous>, transform_indices = @transform_2, window_bounds = array<i64: 1, 32>}, {transform_indices = @transform_3, window_bounds = array<i64: 338, 32>}]} {
    %c0 = arith.constant 0 : index
    %c0_0 = arith.constant 0 : index
    %0 = vector.load %arg2[%c0, %c0_0] : memref<16x32xbf16, #tpu.memory_space<vmem>>, vector<16x32xbf16>
    %c0_1 = arith.constant 0 : index
    %c0_2 = arith.constant 0 : index
    %c0_3 = arith.constant 0 : index
    %1 = vector.load %arg1[%c0_1, %c0_2, %c0_3] : memref<4x338x16xbf16, #tpu.memory_space<vmem>>, vector<1x338x16xbf16>
    %2 = vector.shape_cast %1 : vector<1x338x16xbf16> to vector<338x16xbf16>
    %cst = arith.constant dense<0.000000e+00> : vector<338x32xf32>
    %3 = tpu.matmul %2, %0, %cst {dimension_numbers = #tpu.dot_dimension_numbers<[1], [0], [0], [1], [0, 0, 1, 1], [], []>} : vector<338x16xbf16>, vector<16x32xbf16>, vector<338x32xf32> -> vector<338x32xf32>
    %c1 = arith.constant 1 : index
    %c0_4 = arith.constant 0 : index
    %c0_5 = arith.constant 0 : index
    %4 = vector.load %arg1[%c1, %c0_4, %c0_5] : memref<4x338x16xbf16, #tpu.memory_space<vmem>>, vector<1x338x16xbf16>
    %5 = vector.shape_cast %4 : vector<1x338x16xbf16> to vector<338x16xbf16>
    %cst_6 = arith.constant dense<0.000000e+00> : vector<338x32xf32>
    %6 = tpu.matmul %5, %0, %cst_6 {dimension_numbers = #tpu.dot_dimension_numbers<[1], [0], [0], [1], [0, 0, 1, 1], [], []>} : vector<338x16xbf16>, vector<16x32xbf16>, vector<338x32xf32> -> vector<338x32xf32>
    %7 = arith.maximumf %3, %6 : vector<338x32xf32>
    %c2 = arith.constant 2 : index
    %c0_7 = arith.constant 0 : index
    %c0_8 = arith.constant 0 : index
    %8 = vector.load %arg1[%c2, %c0_7, %c0_8] : memref<4x338x16xbf16, #tpu.memory_space<vmem>>, vector<1x338x16xbf16>
    %9 = vector.shape_cast %8 : vector<1x338x16xbf16> to vector<338x16xbf16>
    %cst_9 = arith.constant dense<0.000000e+00> : vector<338x32xf32>
    %10 = tpu.matmul %9, %0, %cst_9 {dimension_numbers = #tpu.dot_dimension_numbers<[1], [0], [0], [1], [0, 0, 1, 1], [], []>} : vector<338x16xbf16>, vector<16x32xbf16>, vector<338x32xf32> -> vector<338x32xf32>
    %11 = arith.maximumf %7, %10 : vector<338x32xf32>
    %c3 = arith.constant 3 : index
    %c0_10 = arith.constant 0 : index
    %c0_11 = arith.constant 0 : index
    %12 = vector.load %arg1[%c3, %c0_10, %c0_11] : memref<4x338x16xbf16, #tpu.memory_space<vmem>>, vector<1x338x16xbf16>
    %13 = vector.shape_cast %12 : vector<1x338x16xbf16> to vector<338x16xbf16>
    %cst_12 = arith.constant dense<0.000000e+00> : vector<338x32xf32>
    %14 = tpu.matmul %13, %0, %cst_12 {dimension_numbers = #tpu.dot_dimension_numbers<[1], [0], [0], [1], [0, 0, 1, 1], [], []>} : vector<338x16xbf16>, vector<16x32xbf16>, vector<338x32xf32> -> vector<338x32xf32>
    %15 = arith.maximumf %11, %14 : vector<338x32xf32>
    %c0_13 = arith.constant 0 : index
    %c0_14 = arith.constant 0 : index
    %16 = vector.load %arg3[%c0_13, %c0_14] : memref<1x32xf32, #tpu.memory_space<vmem>>, vector<1x32xf32>
    %17 = vector.broadcast %16 : vector<1x32xf32> to vector<338x32xf32>
    %18 = arith.addf %15, %17 : vector<338x32xf32>
    %cst_15 = arith.constant 0.000000e+00 : f32
    %19 = vector.broadcast %cst_15 : f32 to vector<338x32xf32>
    %20 = arith.maximumf %18, %19 : vector<338x32xf32>
    %21 = arith.truncf %20 : vector<338x32xf32> to vector<338x32xbf16>
    %c0_16 = arith.constant 0 : index
    %c0_17 = arith.constant 0 : index
    %22 = vector.load %arg4[%c0_16, %c0_17] : memref<338x32xbf16, #tpu.memory_space<vmem>>, vector<338x32xbf16>
    tpu.vector_store %arg4[%c0_16, %c0_17], %21 {strides = array<i32>} : memref<338x32xbf16, #tpu.memory_space<vmem>>, vector<338x32xbf16>,
    return
  }
  func.func @transform_0(%arg0: i32) -> (i32, i32, i32) {
    %c0_i32 = arith.constant 0 : i32
    %c0_i32_0 = arith.constant 0 : i32
    %c0_i32_1 = arith.constant 0 : i32
    return %c0_i32, %arg0, %c0_i32_0 : i32, i32, i32
  }
  func.func @transform_1(%arg0: i32) -> (i32, i32) {
    %c0_i32 = arith.constant 0 : i32
    %c0_i32_0 = arith.constant 0 : i32
    %c0_i32_1 = arith.constant 0 : i32
    return %c0_i32, %c0_i32_0 : i32, i32
  }
  func.func @transform_2(%arg0: i32) -> (i32, i32) {
    %c0_i32 = arith.constant 0 : i32
    %c0_i32_0 = arith.constant 0 : i32
    %c0_i32_1 = arith.constant 0 : i32
    return %c0_i32, %c0_i32_0 : i32, i32
  }
  func.func @transform_3(%arg0: i32) -> (i32, i32) {
    %c0_i32 = arith.constant 0 : i32
    %c0_i32_0 = arith.constant 0 : i32
    return %arg0, %c0_i32 : i32, i32
  }
}

module attributes {stable_mosaic.version = 11 : i64} {
  func.func @_conv_relu_pool_kernel(%arg0: i32, %arg1: memref<4x50x288xbf16, #tpu.memory_space<vmem>>, %arg2: memref<288x64xbf16, #tpu.memory_space<vmem>>, %arg3: memref<1x64xf32, #tpu.memory_space<vmem>>, %arg4: memref<50x64xbf16, #tpu.memory_space<vmem>>) attributes {dimension_semantics = [#tpu.dimension_semantics<parallel>], iteration_bounds = array<i64: 1>, scalar_prefetch = 0 : i64, scratch_operands = 0 : i64, tpu.core_type = #tpu.core_type<tc>, window_params = [{transform_indices = @transform_0, window_bounds = array<i64: 4, 50, 288>}, {pipeline_mode = #tpu.pipeline_mode<synchronous>, transform_indices = @transform_1, window_bounds = array<i64: 288, 64>}, {pipeline_mode = #tpu.pipeline_mode<synchronous>, transform_indices = @transform_2, window_bounds = array<i64: 1, 64>}, {transform_indices = @transform_3, window_bounds = array<i64: 50, 64>}]} {
    %c0 = arith.constant 0 : index
    %c0_0 = arith.constant 0 : index
    %0 = vector.load %arg2[%c0, %c0_0] : memref<288x64xbf16, #tpu.memory_space<vmem>>, vector<288x64xbf16>
    %c0_1 = arith.constant 0 : index
    %c0_2 = arith.constant 0 : index
    %c0_3 = arith.constant 0 : index
    %1 = vector.load %arg1[%c0_1, %c0_2, %c0_3] : memref<4x50x288xbf16, #tpu.memory_space<vmem>>, vector<1x50x288xbf16>
    %2 = vector.shape_cast %1 : vector<1x50x288xbf16> to vector<50x288xbf16>
    %cst = arith.constant dense<0.000000e+00> : vector<50x64xf32>
    %3 = tpu.matmul %2, %0, %cst {dimension_numbers = #tpu.dot_dimension_numbers<[1], [0], [0], [1], [0, 0, 1, 1], [], []>} : vector<50x288xbf16>, vector<288x64xbf16>, vector<50x64xf32> -> vector<50x64xf32>
    %c1 = arith.constant 1 : index
    %c0_4 = arith.constant 0 : index
    %c0_5 = arith.constant 0 : index
    %4 = vector.load %arg1[%c1, %c0_4, %c0_5] : memref<4x50x288xbf16, #tpu.memory_space<vmem>>, vector<1x50x288xbf16>
    %5 = vector.shape_cast %4 : vector<1x50x288xbf16> to vector<50x288xbf16>
    %cst_6 = arith.constant dense<0.000000e+00> : vector<50x64xf32>
    %6 = tpu.matmul %5, %0, %cst_6 {dimension_numbers = #tpu.dot_dimension_numbers<[1], [0], [0], [1], [0, 0, 1, 1], [], []>} : vector<50x288xbf16>, vector<288x64xbf16>, vector<50x64xf32> -> vector<50x64xf32>
    %7 = arith.maximumf %3, %6 : vector<50x64xf32>
    %c2 = arith.constant 2 : index
    %c0_7 = arith.constant 0 : index
    %c0_8 = arith.constant 0 : index
    %8 = vector.load %arg1[%c2, %c0_7, %c0_8] : memref<4x50x288xbf16, #tpu.memory_space<vmem>>, vector<1x50x288xbf16>
    %9 = vector.shape_cast %8 : vector<1x50x288xbf16> to vector<50x288xbf16>
    %cst_9 = arith.constant dense<0.000000e+00> : vector<50x64xf32>
    %10 = tpu.matmul %9, %0, %cst_9 {dimension_numbers = #tpu.dot_dimension_numbers<[1], [0], [0], [1], [0, 0, 1, 1], [], []>} : vector<50x288xbf16>, vector<288x64xbf16>, vector<50x64xf32> -> vector<50x64xf32>
    %11 = arith.maximumf %7, %10 : vector<50x64xf32>
    %c3 = arith.constant 3 : index
    %c0_10 = arith.constant 0 : index
    %c0_11 = arith.constant 0 : index
    %12 = vector.load %arg1[%c3, %c0_10, %c0_11] : memref<4x50x288xbf16, #tpu.memory_space<vmem>>, vector<1x50x288xbf16>
    %13 = vector.shape_cast %12 : vector<1x50x288xbf16> to vector<50x288xbf16>
    %cst_12 = arith.constant dense<0.000000e+00> : vector<50x64xf32>
    %14 = tpu.matmul %13, %0, %cst_12 {dimension_numbers = #tpu.dot_dimension_numbers<[1], [0], [0], [1], [0, 0, 1, 1], [], []>} : vector<50x288xbf16>, vector<288x64xbf16>, vector<50x64xf32> -> vector<50x64xf32>
    %15 = arith.maximumf %11, %14 : vector<50x64xf32>
    %c0_13 = arith.constant 0 : index
    %c0_14 = arith.constant 0 : index
    %16 = vector.load %arg3[%c0_13, %c0_14] : memref<1x64xf32, #tpu.memory_space<vmem>>, vector<1x64xf32>
    %17 = vector.broadcast %16 : vector<1x64xf32> to vector<50x64xf32>
    %18 = arith.addf %15, %17 : vector<50x64xf32>
    %cst_15 = arith.constant 0.000000e+00 : f32
    %19 = vector.broadcast %cst_15 : f32 to vector<50x64xf32>
    %20 = arith.maximumf %18, %19 : vector<50x64xf32>
    %21 = arith.truncf %20 : vector<50x64xf32> to vector<50x64xbf16>
    %c0_16 = arith.constant 0 : index
    %c0_17 = arith.constant 0 : index
    %22 = vector.load %arg4[%c0_16, %c0_17] : memref<50x64xbf16, #tpu.memory_space<vmem>>, vector<50x64xbf16>
    tpu.vector_store %arg4[%c0_16, %c0_17], %21 {strides = array<i32>} : memref<50x64xbf16, #tpu.memory_space<vmem>>, vector<50x64xbf16>,
    return
  }
  func.func @transform_0(%arg0: i32) -> (i32, i32, i32) {
    %c0_i32 = arith.constant 0 : i32
    %c0_i32_0 = arith.constant 0 : i32
    %c0_i32_1 = arith.constant 0 : i32
    return %c0_i32, %arg0, %c0_i32_0 : i32, i32, i32
  }
  func.func @transform_1(%arg0: i32) -> (i32, i32) {
    %c0_i32 = arith.constant 0 : i32
    %c0_i32_0 = arith.constant 0 : i32
    %c0_i32_1 = arith.constant 0 : i32
    return %c0_i32, %c0_i32_0 : i32, i32
  }
  func.func @transform_2(%arg0: i32) -> (i32, i32) {
    %c0_i32 = arith.constant 0 : i32
    %c0_i32_0 = arith.constant 0 : i32
    %c0_i32_1 = arith.constant 0 : i32
    return %c0_i32, %c0_i32_0 : i32, i32
  }
  func.func @transform_3(%arg0: i32) -> (i32, i32) {
    %c0_i32 = arith.constant 0 : i32
    %c0_i32_0 = arith.constant 0 : i32
    return %arg0, %c0_i32 : i32, i32
  }
}

module attributes {stable_mosaic.version = 11 : i64} {
  func.func @_fused_fc_kernel(%arg0: i32, %arg1: memref<2x1600xbf16, #tpu.memory_space<vmem>>, %arg2: memref<1600x64xbf16, #tpu.memory_space<vmem>>, %arg3: memref<1x64xf32, #tpu.memory_space<vmem>>, %arg4: memref<64x128xbf16, #tpu.memory_space<vmem>>, %arg5: memref<1x128xf32, #tpu.memory_space<vmem>>, %arg6: memref<128x128xbf16, #tpu.memory_space<vmem>>, %arg7: memref<1x128xf32, #tpu.memory_space<vmem>>, %arg8: memref<2x128xf32, #tpu.memory_space<vmem>>) attributes {dimension_semantics = [#tpu.dimension_semantics<parallel>], iteration_bounds = array<i64: 1>, scalar_prefetch = 0 : i64, scratch_operands = 0 : i64, tpu.core_type = #tpu.core_type<tc>, window_params = [{transform_indices = @transform_0, window_bounds = array<i64: 2, 1600>}, {pipeline_mode = #tpu.pipeline_mode<synchronous>, transform_indices = @transform_1, window_bounds = array<i64: 1600, 64>}, {pipeline_mode = #tpu.pipeline_mode<synchronous>, transform_indices = @transform_2, window_bounds = array<i64: 1, 64>}, {pipeline_mode = #tpu.pipeline_mode<synchronous>, transform_indices = @transform_3, window_bounds = array<i64: 64, 128>}, {pipeline_mode = #tpu.pipeline_mode<synchronous>, transform_indices = @transform_4, window_bounds = array<i64: 1, 128>}, {pipeline_mode = #tpu.pipeline_mode<synchronous>, transform_indices = @transform_5, window_bounds = array<i64: 128, 128>}, {pipeline_mode = #tpu.pipeline_mode<synchronous>, transform_indices = @transform_6, window_bounds = array<i64: 1, 128>}, {transform_indices = @transform_7, window_bounds = array<i64: 2, 128>}]} {
    %c0 = arith.constant 0 : index
    %c0_0 = arith.constant 0 : index
    %0 = vector.load %arg1[%c0, %c0_0] : memref<2x1600xbf16, #tpu.memory_space<vmem>>, vector<2x1600xbf16>
    %c0_1 = arith.constant 0 : index
    %c0_2 = arith.constant 0 : index
    %1 = vector.load %arg2[%c0_1, %c0_2] : memref<1600x64xbf16, #tpu.memory_space<vmem>>, vector<1600x64xbf16>
    %cst = arith.constant dense<0.000000e+00> : vector<2x64xf32>
    %2 = tpu.matmul %0, %1, %cst {dimension_numbers = #tpu.dot_dimension_numbers<[1], [0], [0], [1], [0, 0, 1, 1], [], []>} : vector<2x1600xbf16>, vector<1600x64xbf16>, vector<2x64xf32> -> vector<2x64xf32>
    %c0_3 = arith.constant 0 : index
    %c0_4 = arith.constant 0 : index
    %3 = vector.load %arg3[%c0_3, %c0_4] : memref<1x64xf32, #tpu.memory_space<vmem>>, vector<1x64xf32>
    %4 = vector.broadcast %3 : vector<1x64xf32> to vector<2x64xf32>
    %5 = arith.addf %2, %4 : vector<2x64xf32>
    %cst_5 = arith.constant 0.000000e+00 : f32
    %6 = vector.broadcast %cst_5 : f32 to vector<2x64xf32>
    %7 = arith.maximumf %5, %6 : vector<2x64xf32>
    %8 = arith.truncf %7 : vector<2x64xf32> to vector<2x64xbf16>
    %c0_6 = arith.constant 0 : index
    %c0_7 = arith.constant 0 : index
    %9 = vector.load %arg4[%c0_6, %c0_7] : memref<64x128xbf16, #tpu.memory_space<vmem>>, vector<64x128xbf16>
    %cst_8 = arith.constant dense<0.000000e+00> : vector<2x128xf32>
    %10 = tpu.matmul %8, %9, %cst_8 {dimension_numbers = #tpu.dot_dimension_numbers<[1], [0], [0], [1], [0, 0, 1, 1], [], []>} : vector<2x64xbf16>, vector<64x128xbf16>, vector<2x128xf32> -> vector<2x128xf32>
    %c0_9 = arith.constant 0 : index
    %c0_10 = arith.constant 0 : index
    %11 = vector.load %arg5[%c0_9, %c0_10] : memref<1x128xf32, #tpu.memory_space<vmem>>, vector<1x128xf32>
    %12 = vector.broadcast %11 : vector<1x128xf32> to vector<2x128xf32>
    %13 = arith.addf %10, %12 : vector<2x128xf32>
    %cst_11 = arith.constant 0.000000e+00 : f32
    %14 = vector.broadcast %cst_11 : f32 to vector<2x128xf32>
    %15 = arith.maximumf %13, %14 : vector<2x128xf32>
    %16 = arith.truncf %15 : vector<2x128xf32> to vector<2x128xbf16>
    %c0_12 = arith.constant 0 : index
    %c0_13 = arith.constant 0 : index
    %17 = vector.load %arg6[%c0_12, %c0_13] : memref<128x128xbf16, #tpu.memory_space<vmem>>, vector<128x128xbf16>
    %cst_14 = arith.constant dense<0.000000e+00> : vector<2x128xf32>
    %18 = tpu.matmul %16, %17, %cst_14 {dimension_numbers = #tpu.dot_dimension_numbers<[1], [0], [0], [1], [0, 0, 1, 1], [], []>} : vector<2x128xbf16>, vector<128x128xbf16>, vector<2x128xf32> -> vector<2x128xf32>
    %c0_15 = arith.constant 0 : index
    %c0_16 = arith.constant 0 : index
    %19 = vector.load %arg7[%c0_15, %c0_16] : memref<1x128xf32, #tpu.memory_space<vmem>>, vector<1x128xf32>
    %20 = vector.broadcast %19 : vector<1x128xf32> to vector<2x128xf32>
    %21 = arith.addf %18, %20 : vector<2x128xf32>
    %c0_17 = arith.constant 0 : index
    %c0_18 = arith.constant 0 : index
    %22 = vector.load %arg8[%c0_17, %c0_18] : memref<2x128xf32, #tpu.memory_space<vmem>>, vector<2x128xf32>
    tpu.vector_store %arg8[%c0_17, %c0_18], %21 {strides = array<i32>} : memref<2x128xf32, #tpu.memory_space<vmem>>, vector<2x128xf32>,
    return
  }
  func.func @transform_0(%arg0: i32) -> (i32, i32) {
    %c0_i32 = arith.constant 0 : i32
    %c0_i32_0 = arith.constant 0 : i32
    return %arg0, %c0_i32 : i32, i32
  }
  func.func @transform_1(%arg0: i32) -> (i32, i32) {
    %c0_i32 = arith.constant 0 : i32
    %c0_i32_0 = arith.constant 0 : i32
    %c0_i32_1 = arith.constant 0 : i32
    return %c0_i32, %c0_i32_0 : i32, i32
  }
  func.func @transform_2(%arg0: i32) -> (i32, i32) {
    %c0_i32 = arith.constant 0 : i32
    %c0_i32_0 = arith.constant 0 : i32
    %c0_i32_1 = arith.constant 0 : i32
    return %c0_i32, %c0_i32_0 : i32, i32
  }
  func.func @transform_3(%arg0: i32) -> (i32, i32) {
    %c0_i32 = arith.constant 0 : i32
    %c0_i32_0 = arith.constant 0 : i32
    %c0_i32_1 = arith.constant 0 : i32
    return %c0_i32, %c0_i32_0 : i32, i32
  }
  func.func @transform_4(%arg0: i32) -> (i32, i32) {
    %c0_i32 = arith.constant 0 : i32
    %c0_i32_0 = arith.constant 0 : i32
    %c0_i32_1 = arith.constant 0 : i32
    return %c0_i32, %c0_i32_0 : i32, i32
  }
  func.func @transform_5(%arg0: i32) -> (i32, i32) {
    %c0_i32 = arith.constant 0 : i32
    %c0_i32_0 = arith.constant 0 : i32
    %c0_i32_1 = arith.constant 0 : i32
    return %c0_i32, %c0_i32_0 : i32, i32
  }
  func.func @transform_6(%arg0: i32) -> (i32, i32) {
    %c0_i32 = arith.constant 0 : i32
    %c0_i32_0 = arith.constant 0 : i32
    %c0_i32_1 = arith.constant 0 : i32
    return %c0_i32, %c0_i32_0 : i32, i32
  }
  func.func @transform_7(%arg0: i32) -> (i32, i32) {
    %c0_i32 = arith.constant 0 : i32
    %c0_i32_0 = arith.constant 0 : i32
    return %arg0, %c0_i32 : i32, i32
  }
}

</mosaic_0001>

<llo_original>
// kernel: embed_mnist_net_forward.3
$region0: #{embed_mnist_net_forward.3}
  #allocation0 [shape = 'u32[]', space=smem, size = 0x4, offset = 0x4, fixed_abs, tag = 'smem constant byte address 0x4 - core index']
  #allocation1 [shape = 'u32[72,128]{1,0:T(1,128)}', space=vmem, size = 0x9000, scoped, tag = 'internal scratch']
  %s0 = inlined_call_operand.vmem [shape: bf16[4,338,16], index: 0, kind: input, shape index: {}]
  %s1 = inlined_call_operand.vmem [shape: bf16[16,32], index: 1, kind: input, shape index: {}]
  %s2 = inlined_call_operand.vmem [shape: f32[1,32], index: 2, kind: input, shape index: {}]
  %s3 = inlined_call_operand.vmem [shape: bf16[338,32], index: 3, kind: output, shape index: {}]
  %s4 = sld [smem:[#allocation0]]
  $region22: #{embed_mnist_net_forward.3} parent=0
    _
  %s6 = ssub.s32 1, %s4
  %s7 = scalar_select 0, %s6, %s4
  // Predicated region
  $region2: #{embed_mnist_net_forward.3} parent=0 // pred_check
    _
  $region3: #{embed_mnist_net_forward.3} parent=0 // pred_check_branch
    %9 = sbr.rel (0) target = $region5
  $region4: #{embed_mnist_net_forward.3} parent=0 // pred_region
    _
  $region5: #{embed_mnist_net_forward.3} parent=0 // pred_fallthru
    _
  // Predicated region
  $region6: #{embed_mnist_net_forward.3} parent=0 // pred_check
    _
  $region7: #{embed_mnist_net_forward.3} parent=0 // pred_check_branch
    %11 = sbr.rel (0) target = $region9
  $region8: #{embed_mnist_net_forward.3} parent=0 // pred_region
    _
  $region9: #{embed_mnist_net_forward.3} parent=0 // pred_fallthru
    _
  // Predicated region
  $region10: #{embed_mnist_net_forward.3} parent=0 // pred_check
    _
  $region11: #{embed_mnist_net_forward.3} parent=0 // pred_check_branch
    %13 = sbr.rel (0) target = $region13
  $region12: #{embed_mnist_net_forward.3} parent=0 // pred_region
    _
  $region13: #{embed_mnist_net_forward.3} parent=0 // pred_fallthru
    _
  %v15 = vld [vmem:[%s1] sm:$0xf]
  %v16 = vld [vmem:[%s1 + $0x4] sm:$0xf]
  %v17 = vld [vmem:[%s0] sm:$0xf]
  %v18 = vld [vmem:[%s0 + $0x4] sm:$0xf]
  %v19 = vld [vmem:[%s0 + $0x8] sm:$0xf]
  %v20 = vld [vmem:[%s0 + $0xc] sm:$0xf]
  %v21 = vld [vmem:[%s0 + $0x10] sm:$0xf]
  %v22 = vld [vmem:[%s0 + $0x14] sm:$0xf]
  %v23 = vld [vmem:[%s0 + $0x18] sm:$0xf]
  %v24 = vld [vmem:[%s0 + $0x1c] sm:$0xf]
  %v25 = vld [vmem:[%s0 + $0x20] sm:$0xf]
  %v26 = vld [vmem:[%s0 + $0x24] sm:$0xf]
  %v27 = vld [vmem:[%s0 + $0x28] sm:$0xf]
  %v28 = vld [vmem:[%s0 + $0x2c] sm:$0xf]
  %v29 = vld [vmem:[%s0 + $0x30] sm:$0xf]
  %v30 = vld [vmem:[%s0 + $0x34] sm:$0xf]
  %v31 = vld [vmem:[%s0 + $0x38] sm:$0xf]
  %v32 = vld [vmem:[%s0 + $0x3c] sm:$0xf]
  %v33 = vld [vmem:[%s0 + $0x40] sm:$0xf]
  %v34 = vld [vmem:[%s0 + $0x44] sm:$0xf]
  %v35 = vld [vmem:[%s0 + $0x48] sm:$0xf]
  %v36 = vld [vmem:[%s0 + $0x4c] sm:$0xf]
  %v37 = vld [vmem:[%s0 + $0x50] sm:$0xf]
  %v38 = vld [vmem:[%s0 + $0x54] sm:$0xf]
  %v39 = vld [vmem:[%s0 + $0x58] sm:$0xf]
  %v40 = vld [vmem:[%s0 + $0x5c] sm:$0xf]
  %v41 = vld [vmem:[%s0 + $0x60] sm:$0xf]
  %v42 = vld [vmem:[%s0 + $0x64] sm:$0xf]
  %v43 = vld [vmem:[%s0 + $0x68] sm:$0xf]
  %v44 = vld [vmem:[%s0 + $0x6c] sm:$0xf]
  %v45 = vld [vmem:[%s0 + $0x70] sm:$0xf]
  %v46 = vld [vmem:[%s0 + $0x74] sm:$0xf]
  %v47 = vld [vmem:[%s0 + $0x78] sm:$0xf]
  %v48 = vld [vmem:[%s0 + $0x7c] sm:$0xf]
  %v49 = vld [vmem:[%s0 + $0x80] sm:$0xf]
  %v50 = vld [vmem:[%s0 + $0x84] sm:$0xf]
  %v51 = vld [vmem:[%s0 + $0x88] sm:$0xf]
  %v52 = vld [vmem:[%s0 + $0x8c] sm:$0xf]
  %v53 = vld [vmem:[%s0 + $0x90] sm:$0xf]
  %v54 = vld [vmem:[%s0 + $0x94] sm:$0xf]
  %v55 = vld [vmem:[%s0 + $0x98] sm:$0xf]
  %v56 = vld [vmem:[%s0 + $0x9c] sm:$0xf]
  %v57 = vld [vmem:[%s0 + $0xa0] sm:$0xf]
  %v58 = vld [vmem:[%s0 + $0xa4] sm:$0xf]
  %v59 = vld [vmem:[%s0 + $0xa8] sm:$0x1]
  %v103 = vunpack.c.l.b16 %v17
  %v104 = vunpack.c.l.b16 %v18
  %v105 = vunpack.c.l.b16 %v19
  %v106 = vunpack.c.l.b16 %v20
  %v107 = vunpack.c.l.b16 %v21
  %v108 = vunpack.c.l.b16 %v22
  %v109 = vunpack.c.l.b16 %v23
  %v110 = vunpack.c.l.b16 %v24
  %v111 = vunpack.c.l.b16 %v25
  %v112 = vunpack.c.l.b16 %v26
  %v113 = vunpack.c.l.b16 %v27
  %v114 = vunpack.c.l.b16 %v28
  %v115 = vunpack.c.l.b16 %v29
  %v116 = vunpack.c.l.b16 %v30
  %v117 = vunpack.c.l.b16 %v31
  %v118 = vunpack.c.l.b16 %v32
  %v119 = vunpack.c.l.b16 %v33
  %v120 = vunpack.c.l.b16 %v34
  %v121 = vunpack.c.l.b16 %v35
  %v122 = vunpack.c.l.b16 %v36
  %v123 = vunpack.c.l.b16 %v37
  %v124 = vunpack.c.l.b16 %v38
  %v125 = vunpack.c.l.b16 %v39
  %v126 = vunpack.c.l.b16 %v40
  %v127 = vunpack.c.l.b16 %v41
  %v128 = vunpack.c.l.b16 %v42
  %v129 = vunpack.c.l.b16 %v43
  %v130 = vunpack.c.l.b16 %v44
  %v131 = vunpack.c.l.b16 %v45
  %v132 = vunpack.c.l.b16 %v46
  %v133 = vunpack.c.l.b16 %v47
  %v134 = vunpack.c.l.b16 %v48
  %v135 = vunpack.c.l.b16 %v49
  %v136 = vunpack.c.l.b16 %v50
  %v137 = vunpack.c.l.b16 %v51
  %v138 = vunpack.c.l.b16 %v52
  %v139 = vunpack.c.l.b16 %v53
  %v140 = vunpack.c.l.b16 %v54
  %v141 = vunpack.c.l.b16 %v55
  %v142 = vunpack.c.l.b16 %v56
  %v143 = vunpack.c.l.b16 %v57
  %v144 = vunpack.c.l.b16 %v58
  %v145 = vunpack.c.l.b16 %v59
  %v146 = vpack.c.b16 %v104, %v103
  %v147 = vpack.c.b16 %v106, %v105
  %v148 = vpack.c.b16 %v108, %v107
  %v149 = vpack.c.b16 %v110, %v109
  %v150 = vpack.c.b16 %v112, %v111
  %v151 = vpack.c.b16 %v114, %v113
  %v152 = vpack.c.b16 %v116, %v115
  %v153 = vpack.c.b16 %v118, %v117
  %v154 = vpack.c.b16 %v120, %v119
  %v155 = vpack.c.b16 %v122, %v121
  %v156 = vpack.c.b16 %v124, %v123
  %v157 = vpack.c.b16 %v126, %v125
  %v158 = vpack.c.b16 %v128, %v127
  %v159 = vpack.c.b16 %v130, %v129
  %v160 = vpack.c.b16 %v132, %v131
  %v161 = vpack.c.b16 %v134, %v133
  %v162 = vpack.c.b16 %v136, %v135
  %v163 = vpack.c.b16 %v138, %v137
  %v164 = vpack.c.b16 %v140, %v139
  %v165 = vpack.c.b16 %v142, %v141
  %v166 = vpack.c.b16 %v144, %v143
  %v167 = vpack.c.b16 %v145, %v145
  %v170 = vunpack.c.l.b16 %v15
  %v171 = vunpack.c.l.b16 %v16
  %v172 = vpack.c.b16 %v171, %v170
  %vm174 = vcmask 130048
  %v176 = vsel %vm174, %v146, 0
  %v179 = vsel %vm174, %v147, 0
  %v182 = vsel %vm174, %v148, 0
  %v185 = vsel %vm174, %v149, 0
  %v188 = vsel %vm174, %v150, 0
  %v191 = vsel %vm174, %v151, 0
  %v194 = vsel %vm174, %v152, 0
  %v197 = vsel %vm174, %v153, 0
  %v200 = vsel %vm174, %v154, 0
  %v203 = vsel %vm174, %v155, 0
  %v206 = vsel %vm174, %v156, 0
  %v209 = vsel %vm174, %v157, 0
  %v212 = vsel %vm174, %v158, 0
  %v215 = vsel %vm174, %v159, 0
  %v218 = vsel %vm174, %v160, 0
  %v221 = vsel %vm174, %v161, 0
  %v224 = vsel %vm174, %v162, 0
  %v227 = vsel %vm174, %v163, 0
  %v230 = vsel %vm174, %v164, 0
  %v233 = vsel %vm174, %v165, 0
  %v236 = vsel %vm174, %v166, 0
  %v239 = vsel %vm174, %v167, 0
  %241 = vmatpush.bf16.msra.mxu0 0
  %242 = vmatpush.bf16.msra.mxu0 0
  %243 = vmatpush.bf16.msra.mxu0 0
  %244 = vmatpush.bf16.msra.mxu0 0
  %245 = vmatpush.bf16.msra.mxu0 0
  %246 = vmatpush.bf16.msra.mxu0 0
  %247 = vmatpush.bf16.msra.mxu0 0
  %248 = vmatpush.bf16.msra.mxu0 %v172
  %249 = vmatmul.bf16.gmra.mxu0 %v176
  %v250 = vpop.f32.mrf.mxu0
  %v251 = vadd.f32 0.0, %v250
  %v252 = vpop.f32.mrf.mxu0
  %v253 = vadd.f32 0.0, %v252
  %254 = vmatmul.bf16.gmra.mxu0 %v179
  %v255 = vpop.f32.mrf.mxu0
  %v256 = vadd.f32 0.0, %v255
  %v257 = vpop.f32.mrf.mxu0
  %v258 = vadd.f32 0.0, %v257
  %259 = vmatmul.bf16.gmra.mxu0 %v182
  %v260 = vpop.f32.mrf.mxu0
  %v261 = vadd.f32 0.0, %v260
  %v262 = vpop.f32.mrf.mxu0
  %v263 = vadd.f32 0.0, %v262
  %264 = vmatmul.bf16.gmra.mxu0 %v185
  %v265 = vpop.f32.mrf.mxu0
  %v266 = vadd.f32 0.0, %v265
  %v267 = vpop.f32.mrf.mxu0
  %v268 = vadd.f32 0.0, %v267
  %269 = vmatmul.bf16.gmra.mxu0 %v188
  %v270 = vpop.f32.mrf.mxu0
  %v271 = vadd.f32 0.0, %v270
  %v272 = vpop.f32.mrf.mxu0
  %v273 = vadd.f32 0.0, %v272
  %274 = vmatmul.bf16.gmra.mxu0 %v191
  %v275 = vpop.f32.mrf.mxu0
  %v276 = vadd.f32 0.0, %v275
  %v277 = vpop.f32.mrf.mxu0
  %v278 = vadd.f32 0.0, %v277
  %279 = vmatmul.bf16.gmra.mxu0 %v194
  %v280 = vpop.f32.mrf.mxu0
  %v281 = vadd.f32 0.0, %v280
  %v282 = vpop.f32.mrf.mxu0
  %v283 = vadd.f32 0.0, %v282
  %284 = vmatmul.bf16.gmra.mxu0 %v197
  %v285 = vpop.f32.mrf.mxu0
  %v286 = vadd.f32 0.0, %v285
  %v287 = vpop.f32.mrf.mxu0
  %v288 = vadd.f32 0.0, %v287
  %289 = vmatmul.bf16.gmra.mxu0 %v200
  %v290 = vpop.f32.mrf.mxu0
  %v291 = vadd.f32 0.0, %v290
  %v292 = vpop.f32.mrf.mxu0
  %v293 = vadd.f32 0.0, %v292
  %294 = vmatmul.bf16.gmra.mxu0 %v203
  %v295 = vpop.f32.mrf.mxu0
  %v296 = vadd.f32 0.0, %v295
  %v297 = vpop.f32.mrf.mxu0
  %v298 = vadd.f32 0.0, %v297
  %299 = vmatmul.bf16.gmra.mxu0 %v206
  %v300 = vpop.f32.mrf.mxu0
  %v301 = vadd.f32 0.0, %v300
  %v302 = vpop.f32.mrf.mxu0
  %v303 = vadd.f32 0.0, %v302
  %304 = vmatmul.bf16.gmra.mxu0 %v209
  %v305 = vpop.f32.mrf.mxu0
  %v306 = vadd.f32 0.0, %v305
  %v307 = vpop.f32.mrf.mxu0
  %v308 = vadd.f32 0.0, %v307
  %309 = vmatmul.bf16.gmra.mxu0 %v212
  %v310 = vpop.f32.mrf.mxu0
  %v311 = vadd.f32 0.0, %v310
  %v312 = vpop.f32.mrf.mxu0
  %v313 = vadd.f32 0.0, %v312
  %314 = vmatmul.bf16.gmra.mxu0 %v215
  %v315 = vpop.f32.mrf.mxu0
  %v316 = vadd.f32 0.0, %v315
  %v317 = vpop.f32.mrf.mxu0
  %v318 = vadd.f32 0.0, %v317
  %319 = vmatmul.bf16.gmra.mxu0 %v218
  %v320 = vpop.f32.mrf.mxu0
  %v321 = vadd.f32 0.0, %v320
  %v322 = vpop.f32.mrf.mxu0
  %v323 = vadd.f32 0.0, %v322
  %324 = vmatmul.bf16.gmra.mxu0 %v221
  %v325 = vpop.f32.mrf.mxu0
  %v326 = vadd.f32 0.0, %v325
  %v327 = vpop.f32.mrf.mxu0
  %v328 = vadd.f32 0.0, %v327
  %329 = vmatmul.bf16.gmra.mxu0 %v224
  %v330 = vpop.f32.mrf.mxu0
  %v331 = vadd.f32 0.0, %v330
  %v332 = vpop.f32.mrf.mxu0
  %v333 = vadd.f32 0.0, %v332
  %334 = vmatmul.bf16.gmra.mxu0 %v227
  %v335 = vpop.f32.mrf.mxu0
  %v336 = vadd.f32 0.0, %v335
  %v337 = vpop.f32.mrf.mxu0
  %v338 = vadd.f32 0.0, %v337
  %339 = vmatmul.bf16.gmra.mxu0 %v230
  %v340 = vpop.f32.mrf.mxu0
  %v341 = vadd.f32 0.0, %v340
  %v342 = vpop.f32.mrf.mxu0
  %v343 = vadd.f32 0.0, %v342
  %344 = vmatmul.bf16.gmra.mxu0 %v233
  %v345 = vpop.f32.mrf.mxu0
  %v346 = vadd.f32 0.0, %v345
  %v347 = vpop.f32.mrf.mxu0
  %v348 = vadd.f32 0.0, %v347
  %349 = vmatmul.bf16.gmra.mxu0 %v236
  %v350 = vpop.f32.mrf.mxu0
  %v351 = vadd.f32 0.0, %v350
  %v352 = vpop.f32.mrf.mxu0
  %v353 = vadd.f32 0.0, %v352
  %354 = vmatmul.bf16.gmra.mxu0 %v239
  %v355 = vpop.f32.mrf.mxu0
  %v356 = vadd.f32 0.0, %v355
  %v357 = vpop.f32.mrf.mxu0
  %358 = vdwg.mxu0
  %s359 = scalar_lea.vmem %s0, 172
  %v360 = vld [vmem:[%s359] sm:$0xf]
  %v361 = vld [vmem:[%s359 + $0x4] sm:$0xf]
  %v362 = vld [vmem:[%s359 + $0x8] sm:$0xf]
  %v363 = vld [vmem:[%s359 + $0xc] sm:$0xf]
  %v364 = vld [vmem:[%s359 + $0x10] sm:$0xf]
  %v365 = vld [vmem:[%s359 + $0x14] sm:$0xf]
  %v366 = vld [vmem:[%s359 + $0x18] sm:$0xf]
  %v367 = vld [vmem:[%s359 + $0x1c] sm:$0xf]
  %v368 = vld [vmem:[%s359 + $0x20] sm:$0xf]
  %v369 = vld [vmem:[%s359 + $0x24] sm:$0xf]
  %v370 = vld [vmem:[%s359 + $0x28] sm:$0xf]
  %v371 = vld [vmem:[%s359 + $0x2c] sm:$0xf]
  %v372 = vld [vmem:[%s359 + $0x30] sm:$0xf]
  %v373 = vld [vmem:[%s359 + $0x34] sm:$0xf]
  %v374 = vld [vmem:[%s359 + $0x38] sm:$0xf]
  %v375 = vld [vmem:[%s359 + $0x3c] sm:$0xf]
  %v376 = vld [vmem:[%s359 + $0x40] sm:$0xf]
  %v377 = vld [vmem:[%s359 + $0x44] sm:$0xf]
  %v378 = vld [vmem:[%s359 + $0x48] sm:$0xf]
  %v379 = vld [vmem:[%s359 + $0x4c] sm:$0xf]
  %v380 = vld [vmem:[%s359 + $0x50] sm:$0xf]
  %v381 = vld [vmem:[%s359 + $0x54] sm:$0xf]
  %v382 = vld [vmem:[%s359 + $0x58] sm:$0xf]
  %v383 = vld [vmem:[%s359 + $0x5c] sm:$0xf]
  %v384 = vld [vmem:[%s359 + $0x60] sm:$0xf]
  %v385 = vld [vmem:[%s359 + $0x64] sm:$0xf]
  %v386 = vld [vmem:[%s359 + $0x68] sm:$0xf]
  %v387 = vld [vmem:[%s359 + $0x6c] sm:$0xf]
  %v388 = vld [vmem:[%s359 + $0x70] sm:$0xf]
  %v389 = vld [vmem:[%s359 + $0x74] sm:$0xf]
  %v390 = vld [vmem:[%s359 + $0x78] sm:$0xf]
  %v391 = vld [vmem:[%s359 + $0x7c] sm:$0xf]
  %v392 = vld [vmem:[%s359 + $0x80] sm:$0xf]
  %v393 = vld [vmem:[%s359 + $0x84] sm:$0xf]
  %v394 = vld [vmem:[%s359 + $0x88] sm:$0xf]
  %v395 = vld [vmem:[%s359 + $0x8c] sm:$0xf]
  %v396 = vld [vmem:[%s359 + $0x90] sm:$0xf]
  %v397 = vld [vmem:[%s359 + $0x94] sm:$0xf]
  %v398 = vld [vmem:[%s359 + $0x98] sm:$0xf]
  %v399 = vld [vmem:[%s359 + $0x9c] sm:$0xf]
  %v400 = vld [vmem:[%s359 + $0xa0] sm:$0xf]
  %v401 = vld [vmem:[%s359 + $0xa4] sm:$0xf]
  %v402 = vld [vmem:[%s359 + $0xa8] sm:$0x1]
  %v446 = vunpack.c.l.b16 %v360
  %v447 = vunpack.c.l.b16 %v361
  %v448 = vunpack.c.l.b16 %v362
  %v449 = vunpack.c.l.b16 %v363
  %v450 = vunpack.c.l.b16 %v364
  %v451 = vunpack.c.l.b16 %v365
  %v452 = vunpack.c.l.b16 %v366
  %v453 = vunpack.c.l.b16 %v367
  %v454 = vunpack.c.l.b16 %v368
  %v455 = vunpack.c.l.b16 %v369
  %v456 = vunpack.c.l.b16 %v370
  %v457 = vunpack.c.l.b16 %v371
  %v458 = vunpack.c.l.b16 %v372
  %v459 = vunpack.c.l.b16 %v373
  %v460 = vunpack.c.l.b16 %v374
  %v461 = vunpack.c.l.b16 %v375
  %v462 = vunpack.c.l.b16 %v376
  %v463 = vunpack.c.l.b16 %v377
  %v464 = vunpack.c.l.b16 %v378
  %v465 = vunpack.c.l.b16 %v379
  %v466 = vunpack.c.l.b16 %v380
  %v467 = vunpack.c.l.b16 %v381
  %v468 = vunpack.c.l.b16 %v382
  %v469 = vunpack.c.l.b16 %v383
  %v470 = vunpack.c.l.b16 %v384
  %v471 = vunpack.c.l.b16 %v385
  %v472 = vunpack.c.l.b16 %v386
  %v473 = vunpack.c.l.b16 %v387
  %v474 = vunpack.c.l.b16 %v388
  %v475 = vunpack.c.l.b16 %v389
  %v476 = vunpack.c.l.b16 %v390
  %v477 = vunpack.c.l.b16 %v391
  %v478 = vunpack.c.l.b16 %v392
  %v479 = vunpack.c.l.b16 %v393
  %v480 = vunpack.c.l.b16 %v394
  %v481 = vunpack.c.l.b16 %v395
  %v482 = vunpack.c.l.b16 %v396
  %v483 = vunpack.c.l.b16 %v397
  %v484 = vunpack.c.l.b16 %v398
  %v485 = vunpack.c.l.b16 %v399
  %v486 = vunpack.c.l.b16 %v400
  %v487 = vunpack.c.l.b16 %v401
  %v488 = vunpack.c.l.b16 %v402
  %v489 = vpack.c.b16 %v447, %v446
  %v490 = vpack.c.b16 %v449, %v448
  %v491 = vpack.c.b16 %v451, %v450
  %v492 = vpack.c.b16 %v453, %v452
  %v493 = vpack.c.b16 %v455, %v454
  %v494 = vpack.c.b16 %v457, %v456
  %v495 = vpack.c.b16 %v459, %v458
  %v496 = vpack.c.b16 %v461, %v460
  %v497 = vpack.c.b16 %v463, %v462
  %v498 = vpack.c.b16 %v465, %v464
  %v499 = vpack.c.b16 %v467, %v466
  %v500 = vpack.c.b16 %v469, %v468
  %v501 = vpack.c.b16 %v471, %v470
  %v502 = vpack.c.b16 %v473, %v472
  %v503 = vpack.c.b16 %v475, %v474
  %v504 = vpack.c.b16 %v477, %v476
  %v505 = vpack.c.b16 %v479, %v478
  %v506 = vpack.c.b16 %v481, %v480
  %v507 = vpack.c.b16 %v483, %v482
  %v508 = vpack.c.b16 %v485, %v484
  %v509 = vpack.c.b16 %v487, %v486
  %v510 = vpack.c.b16 %v488, %v488
  %v512 = vsel %vm174, %v489, 0
  %v515 = vsel %vm174, %v490, 0
  %v518 = vsel %vm174, %v491, 0
  %v521 = vsel %vm174, %v492, 0
  %v524 = vsel %vm174, %v493, 0
  %v527 = vsel %vm174, %v494, 0
  %v530 = vsel %vm174, %v495, 0
  %v533 = vsel %vm174, %v496, 0
  %v536 = vsel %vm174, %v497, 0
  %v539 = vsel %vm174, %v498, 0
  %v542 = vsel %vm174, %v499, 0
  %v545 = vsel %vm174, %v500, 0
  %v548 = vsel %vm174, %v501, 0
  %v551 = vsel %vm174, %v502, 0
  %v554 = vsel %vm174, %v503, 0
  %v557 = vsel %vm174, %v504, 0
  %v560 = vsel %vm174, %v505, 0
  %v563 = vsel %vm174, %v506, 0
  %v566 = vsel %vm174, %v507, 0
  %v569 = vsel %vm174, %v508, 0
  %v572 = vsel %vm174, %v509, 0
  %v575 = vsel %vm174, %v510, 0
  %577 = vmatpush.bf16.msra.mxu0 0
  %578 = vmatpush.bf16.msra.mxu0 0
  %579 = vmatpush.bf16.msra.mxu0 0
  %580 = vmatpush.bf16.msra.mxu0 0
  %581 = vmatpush.bf16.msra.mxu0 0
  %582 = vmatpush.bf16.msra.mxu0 0
  %583 = vmatpush.bf16.msra.mxu0 0
  %584 = vmatpush.bf16.msra.mxu0 %v172
  %585 = vmatmul.bf16.gmra.mxu0 %v512
  %v586 = vpop.f32.mrf.mxu0
  %v587 = vadd.f32 0.0, %v586
  %v588 = vpop.f32.mrf.mxu0
  %v589 = vadd.f32 0.0, %v588
  %590 = vmatmul.bf16.gmra.mxu0 %v515
  %v591 = vpop.f32.mrf.mxu0
  %v592 = vadd.f32 0.0, %v591
  %v593 = vpop.f32.mrf.mxu0
  %v594 = vadd.f32 0.0, %v593
  %595 = vmatmul.bf16.gmra.mxu0 %v518
  %v596 = vpop.f32.mrf.mxu0
  %v597 = vadd.f32 0.0, %v596
  %v598 = vpop.f32.mrf.mxu0
  %v599 = vadd.f32 0.0, %v598
  %600 = vmatmul.bf16.gmra.mxu0 %v521
  %v601 = vpop.f32.mrf.mxu0
  %v602 = vadd.f32 0.0, %v601
  %v603 = vpop.f32.mrf.mxu0
  %v604 = vadd.f32 0.0, %v603
  %605 = vmatmul.bf16.gmra.mxu0 %v524
  %v606 = vpop.f32.mrf.mxu0
  %v607 = vadd.f32 0.0, %v606
  %v608 = vpop.f32.mrf.mxu0
  %v609 = vadd.f32 0.0, %v608
  %610 = vmatmul.bf16.gmra.mxu0 %v527
  %v611 = vpop.f32.mrf.mxu0
  %v612 = vadd.f32 0.0, %v611
  %v613 = vpop.f32.mrf.mxu0
  %v614 = vadd.f32 0.0, %v613
  %615 = vmatmul.bf16.gmra.mxu0 %v530
  %v616 = vpop.f32.mrf.mxu0
  %v617 = vadd.f32 0.0, %v616
  %v618 = vpop.f32.mrf.mxu0
  %v619 = vadd.f32 0.0, %v618
  %620 = vmatmul.bf16.gmra.mxu0 %v533
  %v621 = vpop.f32.mrf.mxu0
  %v622 = vadd.f32 0.0, %v621
  %v623 = vpop.f32.mrf.mxu0
  %v624 = vadd.f32 0.0, %v623
  %625 = vmatmul.bf16.gmra.mxu0 %v536
  %v626 = vpop.f32.mrf.mxu0
  %v627 = vadd.f32 0.0, %v626
  %v628 = vpop.f32.mrf.mxu0
  %v629 = vadd.f32 0.0, %v628
  %630 = vmatmul.bf16.gmra.mxu0 %v539
  %v631 = vpop.f32.mrf.mxu0
  %v632 = vadd.f32 0.0, %v631
  %v633 = vpop.f32.mrf.mxu0
  %v634 = vadd.f32 0.0, %v633
  %635 = vmatmul.bf16.gmra.mxu0 %v542
  %v636 = vpop.f32.mrf.mxu0
  %v637 = vadd.f32 0.0, %v636
  %v638 = vpop.f32.mrf.mxu0
  %v639 = vadd.f32 0.0, %v638
  %640 = vmatmul.bf16.gmra.mxu0 %v545
  %v641 = vpop.f32.mrf.mxu0
  %v642 = vadd.f32 0.0, %v641
  %v643 = vpop.f32.mrf.mxu0
  %v644 = vadd.f32 0.0, %v643
  %645 = vmatmul.bf16.gmra.mxu0 %v548
  %v646 = vpop.f32.mrf.mxu0
  %v647 = vadd.f32 0.0, %v646
  %v648 = vpop.f32.mrf.mxu0
  %v649 = vadd.f32 0.0, %v648
  %650 = vmatmul.bf16.gmra.mxu0 %v551
  %v651 = vpop.f32.mrf.mxu0
  %v652 = vadd.f32 0.0, %v651
  %v653 = vpop.f32.mrf.mxu0
  %v654 = vadd.f32 0.0, %v653
  %655 = vmatmul.bf16.gmra.mxu0 %v554
  %v656 = vpop.f32.mrf.mxu0
  %v657 = vadd.f32 0.0, %v656
  %v658 = vpop.f32.mrf.mxu0
  %v659 = vadd.f32 0.0, %v658
  %660 = vmatmul.bf16.gmra.mxu0 %v557
  %v661 = vpop.f32.mrf.mxu0
  %v662 = vadd.f32 0.0, %v661
  %v663 = vpop.f32.mrf.mxu0
  %v664 = vadd.f32 0.0, %v663
  %665 = vmatmul.bf16.gmra.mxu0 %v560
  %v666 = vpop.f32.mrf.mxu0
  %v667 = vadd.f32 0.0, %v666
  %v668 = vpop.f32.mrf.mxu0
  %v669 = vadd.f32 0.0, %v668
  %670 = vmatmul.bf16.gmra.mxu0 %v563
  %v671 = vpop.f32.mrf.mxu0
  %v672 = vadd.f32 0.0, %v671
  %v673 = vpop.f32.mrf.mxu0
  %v674 = vadd.f32 0.0, %v673
  %675 = vmatmul.bf16.gmra.mxu0 %v566
  %v676 = vpop.f32.mrf.mxu0
  %v677 = vadd.f32 0.0, %v676
  %v678 = vpop.f32.mrf.mxu0
  %v679 = vadd.f32 0.0, %v678
  %680 = vmatmul.bf16.gmra.mxu0 %v569
  %v681 = vpop.f32.mrf.mxu0
  %v682 = vadd.f32 0.0, %v681
  %v683 = vpop.f32.mrf.mxu0
  %v684 = vadd.f32 0.0, %v683
  %685 = vmatmul.bf16.gmra.mxu0 %v572
  %v686 = vpop.f32.mrf.mxu0
  %v687 = vadd.f32 0.0, %v686
  %v688 = vpop.f32.mrf.mxu0
  %v689 = vadd.f32 0.0, %v688
  %690 = vmatmul.bf16.gmra.mxu0 %v575
  %v691 = vpop.f32.mrf.mxu0
  %v692 = vadd.f32 0.0, %v691
  %v693 = vpop.f32.mrf.mxu0
  %694 = vdwg.mxu0
  %v695 = vmax.f32 %v251, %v587
  %v696 = vmax.f32 %v253, %v589
  %v697 = vmax.f32 %v256, %v592
  %v698 = vmax.f32 %v258, %v594
  %v699 = vmax.f32 %v261, %v597
  %v700 = vmax.f32 %v263, %v599
  %v701 = vmax.f32 %v266, %v602
  %v702 = vmax.f32 %v268, %v604
  %v703 = vmax.f32 %v271, %v607
  %v704 = vmax.f32 %v273, %v609
  %v705 = vmax.f32 %v276, %v612
  %v706 = vmax.f32 %v278, %v614
  %v707 = vmax.f32 %v281, %v617
  %v708 = vmax.f32 %v283, %v619
  %v709 = vmax.f32 %v286, %v622
  %v710 = vmax.f32 %v288, %v624
  %v711 = vmax.f32 %v291, %v627
  %v712 = vmax.f32 %v293, %v629
  %v713 = vmax.f32 %v296, %v632
  %v714 = vmax.f32 %v298, %v634
  %v715 = vmax.f32 %v301, %v637
  %v716 = vmax.f32 %v303, %v639
  %v717 = vmax.f32 %v306, %v642
  %v718 = vmax.f32 %v308, %v644
  %v719 = vmax.f32 %v311, %v647
  %v720 = vmax.f32 %v313, %v649
  %v721 = vmax.f32 %v316, %v652
  %v722 = vmax.f32 %v318, %v654
  %v723 = vmax.f32 %v321, %v657
  %v724 = vmax.f32 %v323, %v659
  %v725 = vmax.f32 %v326, %v662
  %v726 = vmax.f32 %v328, %v664
  %v727 = vmax.f32 %v331, %v667
  %v728 = vmax.f32 %v333, %v669
  %v729 = vmax.f32 %v336, %v672
  %v730 = vmax.f32 %v338, %v674
  %v731 = vmax.f32 %v341, %v677
  %v732 = vmax.f32 %v343, %v679
  %v733 = vmax.f32 %v346, %v682
  %v734 = vmax.f32 %v348, %v684
  %v735 = vmax.f32 %v351, %v687
  %v736 = vmax.f32 %v353, %v689
  %v737 = vmax.f32 %v356, %v692
  %s738 = scalar_lea.vmem %s0, 344
  %v739 = vld [vmem:[%s738] sm:$0xf]
  %v740 = vld [vmem:[%s738 + $0x4] sm:$0xf]
  %v741 = vld [vmem:[%s738 + $0x8] sm:$0xf]
  %v742 = vld [vmem:[%s738 + $0xc] sm:$0xf]
  %v743 = vld [vmem:[%s738 + $0x10] sm:$0xf]
  %v744 = vld [vmem:[%s738 + $0x14] sm:$0xf]
  %v745 = vld [vmem:[%s738 + $0x18] sm:$0xf]
  %v746 = vld [vmem:[%s738 + $0x1c] sm:$0xf]
  %v747 = vld [vmem:[%s738 + $0x20] sm:$0xf]
  %v748 = vld [vmem:[%s738 + $0x24] sm:$0xf]
  %v749 = vld [vmem:[%s738 + $0x28] sm:$0xf]
  %v750 = vld [vmem:[%s738 + $0x2c] sm:$0xf]
  %v751 = vld [vmem:[%s738 + $0x30] sm:$0xf]
  %v752 = vld [vmem:[%s738 + $0x34] sm:$0xf]
  %v753 = vld [vmem:[%s738 + $0x38] sm:$0xf]
  %v754 = vld [vmem:[%s738 + $0x3c] sm:$0xf]
  %v755 = vld [vmem:[%s738 + $0x40] sm:$0xf]
  %v756 = vld [vmem:[%s738 + $0x44] sm:$0xf]
  %v757 = vld [vmem:[%s738 + $0x48] sm:$0xf]
  %v758 = vld [vmem:[%s738 + $0x4c] sm:$0xf]
  %v759 = vld [vmem:[%s738 + $0x50] sm:$0xf]
  %v760 = vld [vmem:[%s738 + $0x54] sm:$0xf]
  %v761 = vld [vmem:[%s738 + $0x58] sm:$0xf]
  %v762 = vld [vmem:[%s738 + $0x5c] sm:$0xf]
  %v763 = vld [vmem:[%s738 + $0x60] sm:$0xf]
  %v764 = vld [vmem:[%s738 + $0x64] sm:$0xf]
  %v765 = vld [vmem:[%s738 + $0x68] sm:$0xf]
  %v766 = vld [vmem:[%s738 + $0x6c] sm:$0xf]
  %v767 = vld [vmem:[%s738 + $0x70] sm:$0xf]
  %v768 = vld [vmem:[%s738 + $0x74] sm:$0xf]
  %v769 = vld [vmem:[%s738 + $0x78] sm:$0xf]
  %v770 = vld [vmem:[%s738 + $0x7c] sm:$0xf]
  %v771 = vld [vmem:[%s738 + $0x80] sm:$0xf]
  %v772 = vld [vmem:[%s738 + $0x84] sm:$0xf]
  %v773 = vld [vmem:[%s738 + $0x88] sm:$0xf]
  %v774 = vld [vmem:[%s738 + $0x8c] sm:$0xf]
  %v775 = vld [vmem:[%s738 + $0x90] sm:$0xf]
  %v776 = vld [vmem:[%s738 + $0x94] sm:$0xf]
  %v777 = vld [vmem:[%s738 + $0x98] sm:$0xf]
  %v778 = vld [vmem:[%s738 + $0x9c] sm:$0xf]
  %v779 = vld [vmem:[%s738 + $0xa0] sm:$0xf]
  %v780 = vld [vmem:[%s738 + $0xa4] sm:$0xf]
  %v781 = vld [vmem:[%s738 + $0xa8] sm:$0x1]
  %v825 = vunpack.c.l.b16 %v739
  %v826 = vunpack.c.l.b16 %v740
  %v827 = vunpack.c.l.b16 %v741
  %v828 = vunpack.c.l.b16 %v742
  %v829 = vunpack.c.l.b16 %v743
  %v830 = vunpack.c.l.b16 %v744
  %v831 = vunpack.c.l.b16 %v745
  %v832 = vunpack.c.l.b16 %v746
  %v833 = vunpack.c.l.b16 %v747
  %v834 = vunpack.c.l.b16 %v748
  %v835 = vunpack.c.l.b16 %v749
  %v836 = vunpack.c.l.b16 %v750
  %v837 = vunpack.c.l.b16 %v751
  %v838 = vunpack.c.l.b16 %v752
  %v839 = vunpack.c.l.b16 %v753
  %v840 = vunpack.c.l.b16 %v754
  %v841 = vunpack.c.l.b16 %v755
  %v842 = vunpack.c.l.b16 %v756
  %v843 = vunpack.c.l.b16 %v757
  %v844 = vunpack.c.l.b16 %v758
  %v845 = vunpack.c.l.b16 %v759
  %v846 = vunpack.c.l.b16 %v760
  %v847 = vunpack.c.l.b16 %v761
  %v848 = vunpack.c.l.b16 %v762
  %v849 = vunpack.c.l.b16 %v763
  %v850 = vunpack.c.l.b16 %v764
  %v851 = vunpack.c.l.b16 %v765
  %v852 = vunpack.c.l.b16 %v766
  %v853 = vunpack.c.l.b16 %v767
  %v854 = vunpack.c.l.b16 %v768
  %v855 = vunpack.c.l.b16 %v769
  %v856 = vunpack.c.l.b16 %v770
  %v857 = vunpack.c.l.b16 %v771
  %v858 = vunpack.c.l.b16 %v772
  %v859 = vunpack.c.l.b16 %v773
  %v860 = vunpack.c.l.b16 %v774
  %v861 = vunpack.c.l.b16 %v775
  %v862 = vunpack.c.l.b16 %v776
  %v863 = vunpack.c.l.b16 %v777
  %v864 = vunpack.c.l.b16 %v778
  %v865 = vunpack.c.l.b16 %v779
  %v866 = vunpack.c.l.b16 %v780
  %v867 = vunpack.c.l.b16 %v781
  %v868 = vpack.c.b16 %v826, %v825
  %v869 = vpack.c.b16 %v828, %v827
  %v870 = vpack.c.b16 %v830, %v829
  %v871 = vpack.c.b16 %v832, %v831
  %v872 = vpack.c.b16 %v834, %v833
  %v873 = vpack.c.b16 %v836, %v835
  %v874 = vpack.c.b16 %v838, %v837
  %v875 = vpack.c.b16 %v840, %v839
  %v876 = vpack.c.b16 %v842, %v841
  %v877 = vpack.c.b16 %v844, %v843
  %v878 = vpack.c.b16 %v846, %v845
  %v879 = vpack.c.b16 %v848, %v847
  %v880 = vpack.c.b16 %v850, %v849
  %v881 = vpack.c.b16 %v852, %v851
  %v882 = vpack.c.b16 %v854, %v853
  %v883 = vpack.c.b16 %v856, %v855
  %v884 = vpack.c.b16 %v858, %v857
  %v885 = vpack.c.b16 %v860, %v859
  %v886 = vpack.c.b16 %v862, %v861
  %v887 = vpack.c.b16 %v864, %v863
  %v888 = vpack.c.b16 %v866, %v865
  %v889 = vpack.c.b16 %v867, %v867
  %v891 = vsel %vm174, %v868, 0
  %v894 = vsel %vm174, %v869, 0
  %v897 = vsel %vm174, %v870, 0
  %v900 = vsel %vm174, %v871, 0
  %v903 = vsel %vm174, %v872, 0
  %v906 = vsel %vm174, %v873, 0
  %v909 = vsel %vm174, %v874, 0
  %v912 = vsel %vm174, %v875, 0
  %v915 = vsel %vm174, %v876, 0
  %v918 = vsel %vm174, %v877, 0
  %v921 = vsel %vm174, %v878, 0
  %v924 = vsel %vm174, %v879, 0
  %v927 = vsel %vm174, %v880, 0
  %v930 = vsel %vm174, %v881, 0
  %v933 = vsel %vm174, %v882, 0
  %v936 = vsel %vm174, %v883, 0
  %v939 = vsel %vm174, %v884, 0
  %v942 = vsel %vm174, %v885, 0
  %v945 = vsel %vm174, %v886, 0
  %v948 = vsel %vm174, %v887, 0
  %v951 = vsel %vm174, %v888, 0
  %v954 = vsel %vm174, %v889, 0
  %956 = vmatpush.bf16.msra.mxu0 0
  %957 = vmatpush.bf16.msra.mxu0 0
  %958 = vmatpush.bf16.msra.mxu0 0
  %959 = vmatpush.bf16.msra.mxu0 0
  %960 = vmatpush.bf16.msra.mxu0 0
  %961 = vmatpush.bf16.msra.mxu0 0
  %962 = vmatpush.bf16.msra.mxu0 0
  %963 = vmatpush.bf16.msra.mxu0 %v172
  %964 = vmatmul.bf16.gmra.mxu0 %v891
  %v965 = vpop.f32.mrf.mxu0
  %v966 = vadd.f32 0.0, %v965
  %v967 = vpop.f32.mrf.mxu0
  %v968 = vadd.f32 0.0, %v967
  %969 = vmatmul.bf16.gmra.mxu0 %v894
  %v970 = vpop.f32.mrf.mxu0
  %v971 = vadd.f32 0.0, %v970
  %v972 = vpop.f32.mrf.mxu0
  %v973 = vadd.f32 0.0, %v972
  %974 = vmatmul.bf16.gmra.mxu0 %v897
  %v975 = vpop.f32.mrf.mxu0
  %v976 = vadd.f32 0.0, %v975
  %v977 = vpop.f32.mrf.mxu0
  %v978 = vadd.f32 0.0, %v977
  %979 = vmatmul.bf16.gmra.mxu0 %v900
  %v980 = vpop.f32.mrf.mxu0
  %v981 = vadd.f32 0.0, %v980
  %v982 = vpop.f32.mrf.mxu0
  %v983 = vadd.f32 0.0, %v982
  %984 = vmatmul.bf16.gmra.mxu0 %v903
  %v985 = vpop.f32.mrf.mxu0
  %v986 = vadd.f32 0.0, %v985
  %v987 = vpop.f32.mrf.mxu0
  %v988 = vadd.f32 0.0, %v987
  %989 = vmatmul.bf16.gmra.mxu0 %v906
  %v990 = vpop.f32.mrf.mxu0
  %v991 = vadd.f32 0.0, %v990
  %v992 = vpop.f32.mrf.mxu0
  %v993 = vadd.f32 0.0, %v992
  %994 = vmatmul.bf16.gmra.mxu0 %v909
  %v995 = vpop.f32.mrf.mxu0
  %v996 = vadd.f32 0.0, %v995
  %v997 = vpop.f32.mrf.mxu0
  %v998 = vadd.f32 0.0, %v997
  %999 = vmatmul.bf16.gmra.mxu0 %v912
  %v1000 = vpop.f32.mrf.mxu0
  %v1001 = vadd.f32 0.0, %v1000
  %v1002 = vpop.f32.mrf.mxu0
  %v1003 = vadd.f32 0.0, %v1002
  %1004 = vmatmul.bf16.gmra.mxu0 %v915
  %v1005 = vpop.f32.mrf.mxu0
  %v1006 = vadd.f32 0.0, %v1005
  %v1007 = vpop.f32.mrf.mxu0
  %v1008 = vadd.f32 0.0, %v1007
  %1009 = vmatmul.bf16.gmra.mxu0 %v918
  %v1010 = vpop.f32.mrf.mxu0
  %v1011 = vadd.f32 0.0, %v1010
  %v1012 = vpop.f32.mrf.mxu0
  %v1013 = vadd.f32 0.0, %v1012
  %1014 = vmatmul.bf16.gmra.mxu0 %v921
  %v1015 = vpop.f32.mrf.mxu0
  %v1016 = vadd.f32 0.0, %v1015
  %v1017 = vpop.f32.mrf.mxu0
  %v1018 = vadd.f32 0.0, %v1017
  %1019 = vmatmul.bf16.gmra.mxu0 %v924
  %v1020 = vpop.f32.mrf.mxu0
  %v1021 = vadd.f32 0.0, %v1020
  %v1022 = vpop.f32.mrf.mxu0
  %v1023 = vadd.f32 0.0, %v1022
  %1024 = vmatmul.bf16.gmra.mxu0 %v927
  %v1025 = vpop.f32.mrf.mxu0
  %v1026 = vadd.f32 0.0, %v1025
  %v1027 = vpop.f32.mrf.mxu0
  %v1028 = vadd.f32 0.0, %v1027
  %1029 = vmatmul.bf16.gmra.mxu0 %v930
  %v1030 = vpop.f32.mrf.mxu0
  %v1031 = vadd.f32 0.0, %v1030
  %v1032 = vpop.f32.mrf.mxu0
  %v1033 = vadd.f32 0.0, %v1032
  %1034 = vmatmul.bf16.gmra.mxu0 %v933
  %v1035 = vpop.f32.mrf.mxu0
  %v1036 = vadd.f32 0.0, %v1035
  %v1037 = vpop.f32.mrf.mxu0
  %v1038 = vadd.f32 0.0, %v1037
  %1039 = vmatmul.bf16.gmra.mxu0 %v936
  %v1040 = vpop.f32.mrf.mxu0
  %v1041 = vadd.f32 0.0, %v1040
  %v1042 = vpop.f32.mrf.mxu0
  %v1043 = vadd.f32 0.0, %v1042
  %1044 = vmatmul.bf16.gmra.mxu0 %v939
  %v1045 = vpop.f32.mrf.mxu0
  %v1046 = vadd.f32 0.0, %v1045
  %v1047 = vpop.f32.mrf.mxu0
  %v1048 = vadd.f32 0.0, %v1047
  %1049 = vmatmul.bf16.gmra.mxu0 %v942
  %v1050 = vpop.f32.mrf.mxu0
  %v1051 = vadd.f32 0.0, %v1050
  %v1052 = vpop.f32.mrf.mxu0
  %v1053 = vadd.f32 0.0, %v1052
  %1054 = vmatmul.bf16.gmra.mxu0 %v945
  %v1055 = vpop.f32.mrf.mxu0
  %v1056 = vadd.f32 0.0, %v1055
  %v1057 = vpop.f32.mrf.mxu0
  %v1058 = vadd.f32 0.0, %v1057
  %1059 = vmatmul.bf16.gmra.mxu0 %v948
  %v1060 = vpop.f32.mrf.mxu0
  %v1061 = vadd.f32 0.0, %v1060
  %v1062 = vpop.f32.mrf.mxu0
  %v1063 = vadd.f32 0.0, %v1062
  %1064 = vmatmul.bf16.gmra.mxu0 %v951
  %v1065 = vpop.f32.mrf.mxu0
  %v1066 = vadd.f32 0.0, %v1065
  %v1067 = vpop.f32.mrf.mxu0
  %v1068 = vadd.f32 0.0, %v1067
  %1069 = vmatmul.bf16.gmra.mxu0 %v954
  %v1070 = vpop.f32.mrf.mxu0
  %v1071 = vadd.f32 0.0, %v1070
  %v1072 = vpop.f32.mrf.mxu0
  %1073 = vdwg.mxu0
  %v1074 = vmax.f32 %v695, %v966
  %v1075 = vmax.f32 %v696, %v968
  %v1076 = vmax.f32 %v697, %v971
  %v1077 = vmax.f32 %v698, %v973
  %v1078 = vmax.f32 %v699, %v976
  %v1079 = vmax.f32 %v700, %v978
  %v1080 = vmax.f32 %v701, %v981
  %v1081 = vmax.f32 %v702, %v983
  %v1082 = vmax.f32 %v703, %v986
  %v1083 = vmax.f32 %v704, %v988
  %v1084 = vmax.f32 %v705, %v991
  %v1085 = vmax.f32 %v706, %v993
  %v1086 = vmax.f32 %v707, %v996
  %v1087 = vmax.f32 %v708, %v998
  %v1088 = vmax.f32 %v709, %v1001
  %v1089 = vmax.f32 %v710, %v1003
  %v1090 = vmax.f32 %v711, %v1006
  %v1091 = vmax.f32 %v712, %v1008
  %v1092 = vmax.f32 %v713, %v1011
  %v1093 = vmax.f32 %v714, %v1013
  %v1094 = vmax.f32 %v715, %v1016
  %v1095 = vmax.f32 %v716, %v1018
  %v1096 = vmax.f32 %v717, %v1021
  %v1097 = vmax.f32 %v718, %v1023
  %v1098 = vmax.f32 %v719, %v1026
  %v1099 = vmax.f32 %v720, %v1028
  %v1100 = vmax.f32 %v721, %v1031
  %v1101 = vmax.f32 %v722, %v1033
  %v1102 = vmax.f32 %v723, %v1036
  %v1103 = vmax.f32 %v724, %v1038
  %v1104 = vmax.f32 %v725, %v1041
  %v1105 = vmax.f32 %v726, %v1043
  %v1106 = vmax.f32 %v727, %v1046
  %v1107 = vmax.f32 %v728, %v1048
  %v1108 = vmax.f32 %v729, %v1051
  %v1109 = vmax.f32 %v730, %v1053
  %v1110 = vmax.f32 %v731, %v1056
  %v1111 = vmax.f32 %v732, %v1058
  %v1112 = vmax.f32 %v733, %v1061
  %v1113 = vmax.f32 %v734, %v1063
  %v1114 = vmax.f32 %v735, %v1066
  %v1115 = vmax.f32 %v736, %v1068
  %v1116 = vmax.f32 %v737, %v1071
  %s1117 = scalar_lea.vmem %s0, 516
  %v1118 = vld [vmem:[%s1117] sm:$0xf]
  %v1119 = vld [vmem:[%s1117 + $0x4] sm:$0xf]
  %v1120 = vld [vmem:[%s1117 + $0x8] sm:$0xf]
  %v1121 = vld [vmem:[%s1117 + $0xc] sm:$0xf]
  %v1122 = vld [vmem:[%s1117 + $0x10] sm:$0xf]
  %v1123 = vld [vmem:[%s1117 + $0x14] sm:$0xf]
  %v1124 = vld [vmem:[%s1117 + $0x18] sm:$0xf]
  %v1125 = vld [vmem:[%s1117 + $0x1c] sm:$0xf]
  %v1126 = vld [vmem:[%s1117 + $0x20] sm:$0xf]
  %v1127 = vld [vmem:[%s1117 + $0x24] sm:$0xf]
  %v1128 = vld [vmem:[%s1117 + $0x28] sm:$0xf]
  %v1129 = vld [vmem:[%s1117 + $0x2c] sm:$0xf]
  %v1130 = vld [vmem:[%s1117 + $0x30] sm:$0xf]
  %v1131 = vld [vmem:[%s1117 + $0x34] sm:$0xf]
  %v1132 = vld [vmem:[%s1117 + $0x38] sm:$0xf]
  %v1133 = vld [vmem:[%s1117 + $0x3c] sm:$0xf]
  %v1134 = vld [vmem:[%s1117 + $0x40] sm:$0xf]
  %v1135 = vld [vmem:[%s1117 + $0x44] sm:$0xf]
  %v1136 = vld [vmem:[%s1117 + $0x48] sm:$0xf]
  %v1137 = vld [vmem:[%s1117 + $0x4c] sm:$0xf]
  %v1138 = vld [vmem:[%s1117 + $0x50] sm:$0xf]
  %v1139 = vld [vmem:[%s1117 + $0x54] sm:$0xf]
  %v1140 = vld [vmem:[%s1117 + $0x58] sm:$0xf]
  %v1141 = vld [vmem:[%s1117 + $0x5c] sm:$0xf]
  %v1142 = vld [vmem:[%s1117 + $0x60] sm:$0xf]
  %v1143 = vld [vmem:[%s1117 + $0x64] sm:$0xf]
  %v1144 = vld [vmem:[%s1117 + $0x68] sm:$0xf]
  %v1145 = vld [vmem:[%s1117 + $0x6c] sm:$0xf]
  %v1146 = vld [vmem:[%s1117 + $0x70] sm:$0xf]
  %v1147 = vld [vmem:[%s1117 + $0x74] sm:$0xf]
  %v1148 = vld [vmem:[%s1117 + $0x78] sm:$0xf]
  %v1149 = vld [vmem:[%s1117 + $0x7c] sm:$0xf]
  %v1150 = vld [vmem:[%s1117 + $0x80] sm:$0xf]
  %v1151 = vld [vmem:[%s1117 + $0x84] sm:$0xf]
  %v1152 = vld [vmem:[%s1117 + $0x88] sm:$0xf]
  %v1153 = vld [vmem:[%s1117 + $0x8c] sm:$0xf]
  %v1154 = vld [vmem:[%s1117 + $0x90] sm:$0xf]
  %v1155 = vld [vmem:[%s1117 + $0x94] sm:$0xf]
  %v1156 = vld [vmem:[%s1117 + $0x98] sm:$0xf]
  %v1157 = vld [vmem:[%s1117 + $0x9c] sm:$0xf]
  %v1158 = vld [vmem:[%s1117 + $0xa0] sm:$0xf]
  %v1159 = vld [vmem:[%s1117 + $0xa4] sm:$0xf]
  %v1160 = vld [vmem:[%s1117 + $0xa8] sm:$0x1]
  %v1204 = vunpack.c.l.b16 %v1118
  %v1205 = vunpack.c.l.b16 %v1119
  %v1206 = vunpack.c.l.b16 %v1120
  %v1207 = vunpack.c.l.b16 %v1121
  %v1208 = vunpack.c.l.b16 %v1122
  %v1209 = vunpack.c.l.b16 %v1123
  %v1210 = vunpack.c.l.b16 %v1124
  %v1211 = vunpack.c.l.b16 %v1125
  %v1212 = vunpack.c.l.b16 %v1126
  %v1213 = vunpack.c.l.b16 %v1127
  %v1214 = vunpack.c.l.b16 %v1128
  %v1215 = vunpack.c.l.b16 %v1129
  %v1216 = vunpack.c.l.b16 %v1130
  %v1217 = vunpack.c.l.b16 %v1131
  %v1218 = vunpack.c.l.b16 %v1132
  %v1219 = vunpack.c.l.b16 %v1133
  %v1220 = vunpack.c.l.b16 %v1134
  %v1221 = vunpack.c.l.b16 %v1135
  %v1222 = vunpack.c.l.b16 %v1136
  %v1223 = vunpack.c.l.b16 %v1137
  %v1224 = vunpack.c.l.b16 %v1138
  %v1225 = vunpack.c.l.b16 %v1139
  %v1226 = vunpack.c.l.b16 %v1140
  %v1227 = vunpack.c.l.b16 %v1141
  %v1228 = vunpack.c.l.b16 %v1142
  %v1229 = vunpack.c.l.b16 %v1143
  %v1230 = vunpack.c.l.b16 %v1144
  %v1231 = vunpack.c.l.b16 %v1145
  %v1232 = vunpack.c.l.b16 %v1146
  %v1233 = vunpack.c.l.b16 %v1147
  %v1234 = vunpack.c.l.b16 %v1148
  %v1235 = vunpack.c.l.b16 %v1149
  %v1236 = vunpack.c.l.b16 %v1150
  %v1237 = vunpack.c.l.b16 %v1151
  %v1238 = vunpack.c.l.b16 %v1152
  %v1239 = vunpack.c.l.b16 %v1153
  %v1240 = vunpack.c.l.b16 %v1154
  %v1241 = vunpack.c.l.b16 %v1155
  %v1242 = vunpack.c.l.b16 %v1156
  %v1243 = vunpack.c.l.b16 %v1157
  %v1244 = vunpack.c.l.b16 %v1158
  %v1245 = vunpack.c.l.b16 %v1159
  %v1246 = vunpack.c.l.b16 %v1160
  %v1247 = vpack.c.b16 %v1205, %v1204
  %v1248 = vpack.c.b16 %v1207, %v1206
  %v1249 = vpack.c.b16 %v1209, %v1208
  %v1250 = vpack.c.b16 %v1211, %v1210
  %v1251 = vpack.c.b16 %v1213, %v1212
  %v1252 = vpack.c.b16 %v1215, %v1214
  %v1253 = vpack.c.b16 %v1217, %v1216
  %v1254 = vpack.c.b16 %v1219, %v1218
  %v1255 = vpack.c.b16 %v1221, %v1220
  %v1256 = vpack.c.b16 %v1223, %v1222
  %v1257 = vpack.c.b16 %v1225, %v1224
  %v1258 = vpack.c.b16 %v1227, %v1226
  %v1259 = vpack.c.b16 %v1229, %v1228
  %v1260 = vpack.c.b16 %v1231, %v1230
  %v1261 = vpack.c.b16 %v1233, %v1232
  %v1262 = vpack.c.b16 %v1235, %v1234
  %v1263 = vpack.c.b16 %v1237, %v1236
  %v1264 = vpack.c.b16 %v1239, %v1238
  %v1265 = vpack.c.b16 %v1241, %v1240
  %v1266 = vpack.c.b16 %v1243, %v1242
  %v1267 = vpack.c.b16 %v1245, %v1244
  %v1268 = vpack.c.b16 %v1246, %v1246
  %v1270 = vsel %vm174, %v1247, 0
  %v1273 = vsel %vm174, %v1248, 0
  %v1276 = vsel %vm174, %v1249, 0
  %v1279 = vsel %vm174, %v1250, 0
  %v1282 = vsel %vm174, %v1251, 0
  %v1285 = vsel %vm174, %v1252, 0
  %v1288 = vsel %vm174, %v1253, 0
  %v1291 = vsel %vm174, %v1254, 0
  %v1294 = vsel %vm174, %v1255, 0
  %v1297 = vsel %vm174, %v1256, 0
  %v1300 = vsel %vm174, %v1257, 0
  %v1303 = vsel %vm174, %v1258, 0
  %v1306 = vsel %vm174, %v1259, 0
  %v1309 = vsel %vm174, %v1260, 0
  %v1312 = vsel %vm174, %v1261, 0
  %v1315 = vsel %vm174, %v1262, 0
  %v1318 = vsel %vm174, %v1263, 0
  %v1321 = vsel %vm174, %v1264, 0
  %v1324 = vsel %vm174, %v1265, 0
  %v1327 = vsel %vm174, %v1266, 0
  %v1330 = vsel %vm174, %v1267, 0
  %v1333 = vsel %vm174, %v1268, 0
  %1335 = vmatpush.bf16.msra.mxu0 0
  %1336 = vmatpush.bf16.msra.mxu0 0
  %1337 = vmatpush.bf16.msra.mxu0 0
  %1338 = vmatpush.bf16.msra.mxu0 0
  %1339 = vmatpush.bf16.msra.mxu0 0
  %1340 = vmatpush.bf16.msra.mxu0 0
  %1341 = vmatpush.bf16.msra.mxu0 0
  %1342 = vmatpush.bf16.msra.mxu0 %v172
  %1343 = vmatmul.bf16.gmra.mxu0 %v1270
  %v1344 = vpop.f32.mrf.mxu0
  %v1345 = vadd.f32 0.0, %v1344
  %v1346 = vpop.f32.mrf.mxu0
  %v1347 = vadd.f32 0.0, %v1346
  %1348 = vmatmul.bf16.gmra.mxu0 %v1273
  %v1349 = vpop.f32.mrf.mxu0
  %v1350 = vadd.f32 0.0, %v1349
  %v1351 = vpop.f32.mrf.mxu0
  %v1352 = vadd.f32 0.0, %v1351
  %1353 = vmatmul.bf16.gmra.mxu0 %v1276
  %v1354 = vpop.f32.mrf.mxu0
  %v1355 = vadd.f32 0.0, %v1354
  %v1356 = vpop.f32.mrf.mxu0
  %v1357 = vadd.f32 0.0, %v1356
  %1358 = vmatmul.bf16.gmra.mxu0 %v1279
  %v1359 = vpop.f32.mrf.mxu0
  %v1360 = vadd.f32 0.0, %v1359
  %v1361 = vpop.f32.mrf.mxu0
  %v1362 = vadd.f32 0.0, %v1361
  %1363 = vmatmul.bf16.gmra.mxu0 %v1282
  %v1364 = vpop.f32.mrf.mxu0
  %v1365 = vadd.f32 0.0, %v1364
  %v1366 = vpop.f32.mrf.mxu0
  %v1367 = vadd.f32 0.0, %v1366
  %1368 = vmatmul.bf16.gmra.mxu0 %v1285
  %v1369 = vpop.f32.mrf.mxu0
  %v1370 = vadd.f32 0.0, %v1369
  %v1371 = vpop.f32.mrf.mxu0
  %v1372 = vadd.f32 0.0, %v1371
  %1373 = vmatmul.bf16.gmra.mxu0 %v1288
  %v1374 = vpop.f32.mrf.mxu0
  %v1375 = vadd.f32 0.0, %v1374
  %v1376 = vpop.f32.mrf.mxu0
  %v1377 = vadd.f32 0.0, %v1376
  %1378 = vmatmul.bf16.gmra.mxu0 %v1291
  %v1379 = vpop.f32.mrf.mxu0
  %v1380 = vadd.f32 0.0, %v1379
  %v1381 = vpop.f32.mrf.mxu0
  %v1382 = vadd.f32 0.0, %v1381
  %1383 = vmatmul.bf16.gmra.mxu0 %v1294
  %v1384 = vpop.f32.mrf.mxu0
  %v1385 = vadd.f32 0.0, %v1384
  %v1386 = vpop.f32.mrf.mxu0
  %v1387 = vadd.f32 0.0, %v1386
  %1388 = vmatmul.bf16.gmra.mxu0 %v1297
  %v1389 = vpop.f32.mrf.mxu0
  %v1390 = vadd.f32 0.0, %v1389
  %v1391 = vpop.f32.mrf.mxu0
  %v1392 = vadd.f32 0.0, %v1391
  %1393 = vmatmul.bf16.gmra.mxu0 %v1300
  %v1394 = vpop.f32.mrf.mxu0
  %v1395 = vadd.f32 0.0, %v1394
  %v1396 = vpop.f32.mrf.mxu0
  %v1397 = vadd.f32 0.0, %v1396
  %1398 = vmatmul.bf16.gmra.mxu0 %v1303
  %v1399 = vpop.f32.mrf.mxu0
  %v1400 = vadd.f32 0.0, %v1399
  %v1401 = vpop.f32.mrf.mxu0
  %v1402 = vadd.f32 0.0, %v1401
  %1403 = vmatmul.bf16.gmra.mxu0 %v1306
  %v1404 = vpop.f32.mrf.mxu0
  %v1405 = vadd.f32 0.0, %v1404
  %v1406 = vpop.f32.mrf.mxu0
  %v1407 = vadd.f32 0.0, %v1406
  %1408 = vmatmul.bf16.gmra.mxu0 %v1309
  %v1409 = vpop.f32.mrf.mxu0
  %v1410 = vadd.f32 0.0, %v1409
  %v1411 = vpop.f32.mrf.mxu0
  %v1412 = vadd.f32 0.0, %v1411
  %1413 = vmatmul.bf16.gmra.mxu0 %v1312
  %v1414 = vpop.f32.mrf.mxu0
  %v1415 = vadd.f32 0.0, %v1414
  %v1416 = vpop.f32.mrf.mxu0
  %v1417 = vadd.f32 0.0, %v1416
  %1418 = vmatmul.bf16.gmra.mxu0 %v1315
  %v1419 = vpop.f32.mrf.mxu0
  %v1420 = vadd.f32 0.0, %v1419
  %v1421 = vpop.f32.mrf.mxu0
  %v1422 = vadd.f32 0.0, %v1421
  %1423 = vmatmul.bf16.gmra.mxu0 %v1318
  %v1424 = vpop.f32.mrf.mxu0
  %v1425 = vadd.f32 0.0, %v1424
  %v1426 = vpop.f32.mrf.mxu0
  %v1427 = vadd.f32 0.0, %v1426
  %1428 = vmatmul.bf16.gmra.mxu0 %v1321
  %v1429 = vpop.f32.mrf.mxu0
  %v1430 = vadd.f32 0.0, %v1429
  %v1431 = vpop.f32.mrf.mxu0
  %v1432 = vadd.f32 0.0, %v1431
  %1433 = vmatmul.bf16.gmra.mxu0 %v1324
  %v1434 = vpop.f32.mrf.mxu0
  %v1435 = vadd.f32 0.0, %v1434
  %v1436 = vpop.f32.mrf.mxu0
  %v1437 = vadd.f32 0.0, %v1436
  %1438 = vmatmul.bf16.gmra.mxu0 %v1327
  %v1439 = vpop.f32.mrf.mxu0
  %v1440 = vadd.f32 0.0, %v1439
  %v1441 = vpop.f32.mrf.mxu0
  %v1442 = vadd.f32 0.0, %v1441
  %1443 = vmatmul.bf16.gmra.mxu0 %v1330
  %v1444 = vpop.f32.mrf.mxu0
  %v1445 = vadd.f32 0.0, %v1444
  %v1446 = vpop.f32.mrf.mxu0
  %v1447 = vadd.f32 0.0, %v1446
  %1448 = vmatmul.bf16.gmra.mxu0 %v1333
  %v1449 = vpop.f32.mrf.mxu0
  %v1450 = vadd.f32 0.0, %v1449
  %v1451 = vpop.f32.mrf.mxu0
  %1452 = vdwg.mxu0
  %v1453 = vmax.f32 %v1074, %v1345
  %v1454 = vmax.f32 %v1075, %v1347
  %v1455 = vmax.f32 %v1076, %v1350
  %v1456 = vmax.f32 %v1077, %v1352
  %v1457 = vmax.f32 %v1078, %v1355
  %v1458 = vmax.f32 %v1079, %v1357
  %v1459 = vmax.f32 %v1080, %v1360
  %v1460 = vmax.f32 %v1081, %v1362
  %v1461 = vmax.f32 %v1082, %v1365
  %v1462 = vmax.f32 %v1083, %v1367
  %v1463 = vmax.f32 %v1084, %v1370
  %v1464 = vmax.f32 %v1085, %v1372
  %v1465 = vmax.f32 %v1086, %v1375
  %v1466 = vmax.f32 %v1087, %v1377
  %v1467 = vmax.f32 %v1088, %v1380
  %v1468 = vmax.f32 %v1089, %v1382
  %v1469 = vmax.f32 %v1090, %v1385
  %v1470 = vmax.f32 %v1091, %v1387
  %v1471 = vmax.f32 %v1092, %v1390
  %v1472 = vmax.f32 %v1093, %v1392
  %v1473 = vmax.f32 %v1094, %v1395
  %v1474 = vmax.f32 %v1095, %v1397
  %v1475 = vmax.f32 %v1096, %v1400
  %v1476 = vmax.f32 %v1097, %v1402
  %v1477 = vmax.f32 %v1098, %v1405
  %v1478 = vmax.f32 %v1099, %v1407
  %v1479 = vmax.f32 %v1100, %v1410
  %v1480 = vmax.f32 %v1101, %v1412
  %v1481 = vmax.f32 %v1102, %v1415
  %v1482 = vmax.f32 %v1103, %v1417
  %v1483 = vmax.f32 %v1104, %v1420
  %v1484 = vmax.f32 %v1105, %v1422
  %v1485 = vmax.f32 %v1106, %v1425
  %v1486 = vmax.f32 %v1107, %v1427
  %v1487 = vmax.f32 %v1108, %v1430
  %v1488 = vmax.f32 %v1109, %v1432
  %v1489 = vmax.f32 %v1110, %v1435
  %v1490 = vmax.f32 %v1111, %v1437
  %v1491 = vmax.f32 %v1112, %v1440
  %v1492 = vmax.f32 %v1113, %v1442
  %v1493 = vmax.f32 %v1114, %v1445
  %v1494 = vmax.f32 %v1115, %v1447
  %v1495 = vmax.f32 %v1116, %v1450
  %v1496 = vld [vmem:[%s2] sm:$0x1]
  %v1498 = vperm.slane %v1496, 0
  %v1500 = vadd.f32 %v1453, %v1498
  %v1501 = vadd.f32 %v1454, %v1498
  %v1502 = vadd.f32 %v1455, %v1498
  %v1503 = vadd.f32 %v1456, %v1498
  %v1504 = vadd.f32 %v1457, %v1498
  %v1505 = vadd.f32 %v1458, %v1498
  %v1506 = vadd.f32 %v1459, %v1498
  %v1507 = vadd.f32 %v1460, %v1498
  %v1508 = vadd.f32 %v1461, %v1498
  %v1509 = vadd.f32 %v1462, %v1498
  %v1510 = vadd.f32 %v1463, %v1498
  %v1511 = vadd.f32 %v1464, %v1498
  %v1512 = vadd.f32 %v1465, %v1498
  %v1513 = vadd.f32 %v1466, %v1498
  %v1514 = vadd.f32 %v1467, %v1498
  %v1515 = vadd.f32 %v1468, %v1498
  %v1516 = vadd.f32 %v1469, %v1498
  %v1517 = vadd.f32 %v1470, %v1498
  %v1518 = vadd.f32 %v1471, %v1498
  %v1519 = vadd.f32 %v1472, %v1498
  %v1520 = vadd.f32 %v1473, %v1498
  %v1521 = vadd.f32 %v1474, %v1498
  %v1522 = vadd.f32 %v1475, %v1498
  %v1523 = vadd.f32 %v1476, %v1498
  %v1524 = vadd.f32 %v1477, %v1498
  %v1525 = vadd.f32 %v1478, %v1498
  %v1526 = vadd.f32 %v1479, %v1498
  %v1527 = vadd.f32 %v1480, %v1498
  %v1528 = vadd.f32 %v1481, %v1498
  %v1529 = vadd.f32 %v1482, %v1498
  %v1530 = vadd.f32 %v1483, %v1498
  %v1531 = vadd.f32 %v1484, %v1498
  %v1532 = vadd.f32 %v1485, %v1498
  %v1533 = vadd.f32 %v1486, %v1498
  %v1534 = vadd.f32 %v1487, %v1498
  %v1535 = vadd.f32 %v1488, %v1498
  %v1536 = vadd.f32 %v1489, %v1498
  %v1537 = vadd.f32 %v1490, %v1498
  %v1538 = vadd.f32 %v1491, %v1498
  %v1539 = vadd.f32 %v1492, %v1498
  %v1540 = vadd.f32 %v1493, %v1498
  %v1541 = vadd.f32 %v1494, %v1498
  %v1542 = vadd.f32 %v1495, %v1498
  %v1543 = vmax.f32 %v1500, 0.0
  %v1544 = vmax.f32 %v1501, 0.0
  %v1545 = vmax.f32 %v1502, 0.0
  %v1546 = vmax.f32 %v1503, 0.0
  %v1547 = vmax.f32 %v1504, 0.0
  %v1548 = vmax.f32 %v1505, 0.0
  %v1549 = vmax.f32 %v1506, 0.0
  %v1550 = vmax.f32 %v1507, 0.0
  %v1551 = vmax.f32 %v1508, 0.0
  %v1552 = vmax.f32 %v1509, 0.0
  %v1553 = vmax.f32 %v1510, 0.0
  %v1554 = vmax.f32 %v1511, 0.0
  %v1555 = vmax.f32 %v1512, 0.0
  %v1556 = vmax.f32 %v1513, 0.0
  %v1557 = vmax.f32 %v1514, 0.0
  %v1558 = vmax.f32 %v1515, 0.0
  %v1559 = vmax.f32 %v1516, 0.0
  %v1560 = vmax.f32 %v1517, 0.0
  %v1561 = vmax.f32 %v1518, 0.0
  %v1562 = vmax.f32 %v1519, 0.0
  %v1563 = vmax.f32 %v1520, 0.0
  %v1564 = vmax.f32 %v1521, 0.0
  %v1565 = vmax.f32 %v1522, 0.0
  %v1566 = vmax.f32 %v1523, 0.0
  %v1567 = vmax.f32 %v1524, 0.0
  %v1568 = vmax.f32 %v1525, 0.0
  %v1569 = vmax.f32 %v1526, 0.0
  %v1570 = vmax.f32 %v1527, 0.0
  %v1571 = vmax.f32 %v1528, 0.0
  %v1572 = vmax.f32 %v1529, 0.0
  %v1573 = vmax.f32 %v1530, 0.0
  %v1574 = vmax.f32 %v1531, 0.0
  %v1575 = vmax.f32 %v1532, 0.0
  %v1576 = vmax.f32 %v1533, 0.0
  %v1577 = vmax.f32 %v1534, 0.0
  %v1578 = vmax.f32 %v1535, 0.0
  %v1579 = vmax.f32 %v1536, 0.0
  %v1580 = vmax.f32 %v1537, 0.0
  %v1581 = vmax.f32 %v1538, 0.0
  %v1582 = vmax.f32 %v1539, 0.0
  %v1583 = vmax.f32 %v1540, 0.0
  %v1584 = vmax.f32 %v1541, 0.0
  %v1585 = vmax.f32 %v1542, 0.0
  %v1586 = vpack.c.bf16 %v1543, %v1543
  %v1587 = vpack.c.bf16 %v1544, %v1544
  %v1588 = vpack.c.bf16 %v1545, %v1545
  %v1589 = vpack.c.bf16 %v1546, %v1546
  %v1590 = vpack.c.bf16 %v1547, %v1547
  %v1591 = vpack.c.bf16 %v1548, %v1548
  %v1592 = vpack.c.bf16 %v1549, %v1549
  %v1593 = vpack.c.bf16 %v1550, %v1550
  %v1594 = vpack.c.bf16 %v1551, %v1551
  %v1595 = vpack.c.bf16 %v1552, %v1552
  %v1596 = vpack.c.bf16 %v1553, %v1553
  %v1597 = vpack.c.bf16 %v1554, %v1554
  %v1598 = vpack.c.bf16 %v1555, %v1555
  %v1599 = vpack.c.bf16 %v1556, %v1556
  %v1600 = vpack.c.bf16 %v1557, %v1557
  %v1601 = vpack.c.bf16 %v1558, %v1558
  %v1602 = vpack.c.bf16 %v1559, %v1559
  %v1603 = vpack.c.bf16 %v1560, %v1560
  %v1604 = vpack.c.bf16 %v1561, %v1561
  %v1605 = vpack.c.bf16 %v1562, %v1562
  %v1606 = vpack.c.bf16 %v1563, %v1563
  %v1607 = vpack.c.bf16 %v1564, %v1564
  %v1608 = vpack.c.bf16 %v1565, %v1565
  %v1609 = vpack.c.bf16 %v1566, %v1566
  %v1610 = vpack.c.bf16 %v1567, %v1567
  %v1611 = vpack.c.bf16 %v1568, %v1568
  %v1612 = vpack.c.bf16 %v1569, %v1569
  %v1613 = vpack.c.bf16 %v1570, %v1570
  %v1614 = vpack.c.bf16 %v1571, %v1571
  %v1615 = vpack.c.bf16 %v1572, %v1572
  %v1616 = vpack.c.bf16 %v1573, %v1573
  %v1617 = vpack.c.bf16 %v1574, %v1574
  %v1618 = vpack.c.bf16 %v1575, %v1575
  %v1619 = vpack.c.bf16 %v1576, %v1576
  %v1620 = vpack.c.bf16 %v1577, %v1577
  %v1621 = vpack.c.bf16 %v1578, %v1578
  %v1622 = vpack.c.bf16 %v1579, %v1579
  %v1623 = vpack.c.bf16 %v1580, %v1580
  %v1624 = vpack.c.bf16 %v1581, %v1581
  %v1625 = vpack.c.bf16 %v1582, %v1582
  %v1626 = vpack.c.bf16 %v1583, %v1583
  %v1627 = vpack.c.bf16 %v1584, %v1584
  %v1628 = vpack.c.bf16 %v1585, %v1585
  %vm1629 = vcmask 257024
  %1630 = vst.msk [vmem:[%s3] sm:$0xf] %vm1629, %v1586
  %1631 = vst.msk [vmem:[%s3 + $0x4] sm:$0xf] %vm1629, %v1587
  %1632 = vst.msk [vmem:[%s3 + $0x8] sm:$0xf] %vm1629, %v1588
  %1633 = vst.msk [vmem:[%s3 + $0xc] sm:$0xf] %vm1629, %v1589
  %1634 = vst.msk [vmem:[%s3 + $0x10] sm:$0xf] %vm1629, %v1590
  %1635 = vst.msk [vmem:[%s3 + $0x14] sm:$0xf] %vm1629, %v1591
  %1636 = vst.msk [vmem:[%s3 + $0x18] sm:$0xf] %vm1629, %v1592
  %1637 = vst.msk [vmem:[%s3 + $0x1c] sm:$0xf] %vm1629, %v1593
  %1638 = vst.msk [vmem:[%s3 + $0x20] sm:$0xf] %vm1629, %v1594
  %1639 = vst.msk [vmem:[%s3 + $0x24] sm:$0xf] %vm1629, %v1595
  %1640 = vst.msk [vmem:[%s3 + $0x28] sm:$0xf] %vm1629, %v1596
  %1641 = vst.msk [vmem:[%s3 + $0x2c] sm:$0xf] %vm1629, %v1597
  %1642 = vst.msk [vmem:[%s3 + $0x30] sm:$0xf] %vm1629, %v1598
  %1643 = vst.msk [vmem:[%s3 + $0x34] sm:$0xf] %vm1629, %v1599
  %1644 = vst.msk [vmem:[%s3 + $0x38] sm:$0xf] %vm1629, %v1600
  %1645 = vst.msk [vmem:[%s3 + $0x3c] sm:$0xf] %vm1629, %v1601
  %1646 = vst.msk [vmem:[%s3 + $0x40] sm:$0xf] %vm1629, %v1602
  %1647 = vst.msk [vmem:[%s3 + $0x44] sm:$0xf] %vm1629, %v1603
  %1648 = vst.msk [vmem:[%s3 + $0x48] sm:$0xf] %vm1629, %v1604
  %1649 = vst.msk [vmem:[%s3 + $0x4c] sm:$0xf] %vm1629, %v1605
  %1650 = vst.msk [vmem:[%s3 + $0x50] sm:$0xf] %vm1629, %v1606
  %1651 = vst.msk [vmem:[%s3 + $0x54] sm:$0xf] %vm1629, %v1607
  %1652 = vst.msk [vmem:[%s3 + $0x58] sm:$0xf] %vm1629, %v1608
  %1653 = vst.msk [vmem:[%s3 + $0x5c] sm:$0xf] %vm1629, %v1609
  %1654 = vst.msk [vmem:[%s3 + $0x60] sm:$0xf] %vm1629, %v1610
  %1655 = vst.msk [vmem:[%s3 + $0x64] sm:$0xf] %vm1629, %v1611
  %1656 = vst.msk [vmem:[%s3 + $0x68] sm:$0xf] %vm1629, %v1612
  %1657 = vst.msk [vmem:[%s3 + $0x6c] sm:$0xf] %vm1629, %v1613
  %1658 = vst.msk [vmem:[%s3 + $0x70] sm:$0xf] %vm1629, %v1614
  %1659 = vst.msk [vmem:[%s3 + $0x74] sm:$0xf] %vm1629, %v1615
  %1660 = vst.msk [vmem:[%s3 + $0x78] sm:$0xf] %vm1629, %v1616
  %1661 = vst.msk [vmem:[%s3 + $0x7c] sm:$0xf] %vm1629, %v1617
  %1662 = vst.msk [vmem:[%s3 + $0x80] sm:$0xf] %vm1629, %v1618
  %1663 = vst.msk [vmem:[%s3 + $0x84] sm:$0xf] %vm1629, %v1619
  %1664 = vst.msk [vmem:[%s3 + $0x88] sm:$0xf] %vm1629, %v1620
  %1665 = vst.msk [vmem:[%s3 + $0x8c] sm:$0xf] %vm1629, %v1621
  %1666 = vst.msk [vmem:[%s3 + $0x90] sm:$0xf] %vm1629, %v1622
  %1667 = vst.msk [vmem:[%s3 + $0x94] sm:$0xf] %vm1629, %v1623
  %1668 = vst.msk [vmem:[%s3 + $0x98] sm:$0xf] %vm1629, %v1624
  %1669 = vst.msk [vmem:[%s3 + $0x9c] sm:$0xf] %vm1629, %v1625
  %1670 = vst.msk [vmem:[%s3 + $0xa0] sm:$0xf] %vm1629, %v1626
  %1671 = vst.msk [vmem:[%s3 + $0xa4] sm:$0xf] %vm1629, %v1627
  %vm1672 = vcmask 253952
  %1673 = vst.msk [vmem:[%s3 + $0xa8] sm:$0x1] %vm1672, %v1628
  // Predicated region
  $region14: #{embed_mnist_net_forward.3} parent=0 // pred_check
    _
  $region15: #{embed_mnist_net_forward.3} parent=0 // pred_check_branch
    %1675 = sbr.rel (0) target = $region17
  $region16: #{embed_mnist_net_forward.3} parent=0 // pred_region
    _
  $region17: #{embed_mnist_net_forward.3} parent=0 // pred_fallthru
    _
  // Predicated region
  $region18: #{embed_mnist_net_forward.3} parent=0 // pred_check
    _
  $region19: #{embed_mnist_net_forward.3} parent=0 // pred_check_branch
    %1677 = sbr.rel (0) target = $region21
  $region20: #{embed_mnist_net_forward.3} parent=0 // pred_region
    _
  $region21: #{embed_mnist_net_forward.3} parent=0 // pred_fallthru
    _

// kernel: embed_mnist_net_forward.4
$region0: #{embed_mnist_net_forward.4}
  #allocation0 [shape = 'u32[]', space=smem, size = 0x4, offset = 0x4, fixed_abs, tag = 'smem constant byte address 0x4 - core index']
  #allocation1 [shape = 'u32[72,128]{1,0:T(1,128)}', space=vmem, size = 0x9000, scoped, tag = 'internal scratch']
  %s0 = inlined_call_operand.vmem [shape: bf16[4,50,288], index: 0, kind: input, shape index: {}]
  %s1 = inlined_call_operand.vmem [shape: bf16[288,64], index: 1, kind: input, shape index: {}]
  %s2 = inlined_call_operand.vmem [shape: f32[1,64], index: 2, kind: input, shape index: {}]
  %s3 = inlined_call_operand.vmem [shape: bf16[50,64], index: 3, kind: output, shape index: {}]
  %s4 = sld [smem:[#allocation0]]
  $region22: #{embed_mnist_net_forward.4} parent=0
    _
  %s6 = ssub.s32 1, %s4
  %s7 = scalar_select 0, %s6, %s4
  // Predicated region
  $region2: #{embed_mnist_net_forward.4} parent=0 // pred_check
    _
  $region3: #{embed_mnist_net_forward.4} parent=0 // pred_check_branch
    %9 = sbr.rel (0) target = $region5
  $region4: #{embed_mnist_net_forward.4} parent=0 // pred_region
    _
  $region5: #{embed_mnist_net_forward.4} parent=0 // pred_fallthru
    _
  // Predicated region
  $region6: #{embed_mnist_net_forward.4} parent=0 // pred_check
    _
  $region7: #{embed_mnist_net_forward.4} parent=0 // pred_check_branch
    %11 = sbr.rel (0) target = $region9
  $region8: #{embed_mnist_net_forward.4} parent=0 // pred_region
    _
  $region9: #{embed_mnist_net_forward.4} parent=0 // pred_fallthru
    _
  // Predicated region
  $region10: #{embed_mnist_net_forward.4} parent=0 // pred_check
    _
  $region11: #{embed_mnist_net_forward.4} parent=0 // pred_check_branch
    %13 = sbr.rel (0) target = $region13
  $region12: #{embed_mnist_net_forward.4} parent=0 // pred_region
    _
  $region13: #{embed_mnist_net_forward.4} parent=0 // pred_fallthru
    _
  %v15 = vld [vmem:[%s1] sm:$0xf]
  %v16 = vld [vmem:[%s1 + $0x4] sm:$0xf]
  %v17 = vld [vmem:[%s1 + $0x8] sm:$0xf]
  %v18 = vld [vmem:[%s1 + $0xc] sm:$0xf]
  %v19 = vld [vmem:[%s1 + $0x10] sm:$0xf]
  %v20 = vld [vmem:[%s1 + $0x14] sm:$0xf]
  %v21 = vld [vmem:[%s1 + $0x18] sm:$0xf]
  %v22 = vld [vmem:[%s1 + $0x1c] sm:$0xf]
  %v23 = vld [vmem:[%s1 + $0x20] sm:$0xf]
  %v24 = vld [vmem:[%s1 + $0x24] sm:$0xf]
  %v25 = vld [vmem:[%s1 + $0x28] sm:$0xf]
  %v26 = vld [vmem:[%s1 + $0x2c] sm:$0xf]
  %v27 = vld [vmem:[%s1 + $0x30] sm:$0xf]
  %v28 = vld [vmem:[%s1 + $0x34] sm:$0xf]
  %v29 = vld [vmem:[%s1 + $0x38] sm:$0xf]
  %v30 = vld [vmem:[%s1 + $0x3c] sm:$0xf]
  %v31 = vld [vmem:[%s1 + $0x40] sm:$0xf]
  %v32 = vld [vmem:[%s1 + $0x44] sm:$0xf]
  %v33 = vld [vmem:[%s1 + $0x48] sm:$0xf]
  %v34 = vld [vmem:[%s1 + $0x4c] sm:$0xf]
  %v35 = vld [vmem:[%s1 + $0x50] sm:$0xf]
  %v36 = vld [vmem:[%s1 + $0x54] sm:$0xf]
  %v37 = vld [vmem:[%s1 + $0x58] sm:$0xf]
  %v38 = vld [vmem:[%s1 + $0x5c] sm:$0xf]
  %v39 = vld [vmem:[%s1 + $0x60] sm:$0xf]
  %v40 = vld [vmem:[%s1 + $0x64] sm:$0xf]
  %v41 = vld [vmem:[%s1 + $0x68] sm:$0xf]
  %v42 = vld [vmem:[%s1 + $0x6c] sm:$0xf]
  %v43 = vld [vmem:[%s1 + $0x70] sm:$0xf]
  %v44 = vld [vmem:[%s1 + $0x74] sm:$0xf]
  %v45 = vld [vmem:[%s1 + $0x78] sm:$0xf]
  %v46 = vld [vmem:[%s1 + $0x7c] sm:$0xf]
  %v47 = vld [vmem:[%s1 + $0x80] sm:$0xf]
  %v48 = vld [vmem:[%s1 + $0x84] sm:$0xf]
  %v49 = vld [vmem:[%s1 + $0x88] sm:$0xf]
  %v50 = vld [vmem:[%s1 + $0x8c] sm:$0xf]
  %v51 = vld [vmem:[%s0] sm:$0xff]
  %v52 = vld [vmem:[%s0 + $0x8] sm:$0xf]
  %v53 = vld [vmem:[%s0 + $0xc] sm:$0xff]
  %v54 = vld [vmem:[%s0 + $0x14] sm:$0xf]
  %v55 = vld [vmem:[%s0 + $0x18] sm:$0xff]
  %v56 = vld [vmem:[%s0 + $0x20] sm:$0xf]
  %v57 = vld [vmem:[%s0 + $0x24] sm:$0xff]
  %v58 = vld [vmem:[%s0 + $0x2c] sm:$0xf]
  %v59 = vld [vmem:[%s0 + $0x30] sm:$0xff]
  %v60 = vld [vmem:[%s0 + $0x38] sm:$0xf]
  %v61 = vld [vmem:[%s0 + $0x3c] sm:$0xff]
  %v62 = vld [vmem:[%s0 + $0x44] sm:$0xf]
  %v63 = vld [vmem:[%s0 + $0x48] sm:$0x11]
  %v64 = vld [vmem:[%s0 + $0x50] sm:$0x1]
  %v79 = vunpack.c.l.b16 %v51
  %v80 = vunpack.c.h.b16 %v51
  %v81 = vunpack.c.l.b16 %v52
  %v82 = vunpack.c.l.b16 %v53
  %v83 = vunpack.c.h.b16 %v53
  %v84 = vunpack.c.l.b16 %v54
  %v85 = vunpack.c.l.b16 %v55
  %v86 = vunpack.c.h.b16 %v55
  %v87 = vunpack.c.l.b16 %v56
  %v88 = vunpack.c.l.b16 %v57
  %v89 = vunpack.c.h.b16 %v57
  %v90 = vunpack.c.l.b16 %v58
  %v91 = vunpack.c.l.b16 %v59
  %v92 = vunpack.c.h.b16 %v59
  %v93 = vunpack.c.l.b16 %v60
  %v94 = vunpack.c.l.b16 %v61
  %v95 = vunpack.c.h.b16 %v61
  %v96 = vunpack.c.l.b16 %v62
  %v97 = vunpack.c.l.b16 %v63
  %v98 = vunpack.c.h.b16 %v63
  %v99 = vunpack.c.l.b16 %v64
  %v100 = vpack.c.b16 %v82, %v79
  %v101 = vpack.c.b16 %v83, %v80
  %v102 = vpack.c.b16 %v84, %v81
  %v103 = vpack.c.b16 %v88, %v85
  %v104 = vpack.c.b16 %v89, %v86
  %v105 = vpack.c.b16 %v90, %v87
  %v106 = vpack.c.b16 %v94, %v91
  %v107 = vpack.c.b16 %v95, %v92
  %v108 = vpack.c.b16 %v96, %v93
  %v109 = vpack.c.b16 %v97, %v97
  %v110 = vpack.c.b16 %v98, %v98
  %v111 = vpack.c.b16 %v99, %v99
  %v156 = vunpack.c.l.b16 %v15
  %v157 = vunpack.c.l.b16 %v16
  %v158 = vunpack.c.l.b16 %v17
  %v159 = vunpack.c.l.b16 %v18
  %v160 = vunpack.c.l.b16 %v19
  %v161 = vunpack.c.l.b16 %v20
  %v162 = vunpack.c.l.b16 %v21
  %v163 = vunpack.c.l.b16 %v22
  %v164 = vunpack.c.l.b16 %v23
  %v165 = vunpack.c.l.b16 %v24
  %v166 = vunpack.c.l.b16 %v25
  %v167 = vunpack.c.l.b16 %v26
  %v168 = vunpack.c.l.b16 %v27
  %v169 = vunpack.c.l.b16 %v28
  %v170 = vunpack.c.l.b16 %v29
  %v171 = vunpack.c.l.b16 %v30
  %v172 = vunpack.c.l.b16 %v31
  %v173 = vunpack.c.l.b16 %v32
  %v174 = vunpack.c.l.b16 %v33
  %v175 = vunpack.c.l.b16 %v34
  %v176 = vunpack.c.l.b16 %v35
  %v177 = vunpack.c.l.b16 %v36
  %v178 = vunpack.c.l.b16 %v37
  %v179 = vunpack.c.l.b16 %v38
  %v180 = vunpack.c.l.b16 %v39
  %v181 = vunpack.c.l.b16 %v40
  %v182 = vunpack.c.l.b16 %v41
  %v183 = vunpack.c.l.b16 %v42
  %v184 = vunpack.c.l.b16 %v43
  %v185 = vunpack.c.l.b16 %v44
  %v186 = vunpack.c.l.b16 %v45
  %v187 = vunpack.c.l.b16 %v46
  %v188 = vunpack.c.l.b16 %v47
  %v189 = vunpack.c.l.b16 %v48
  %v190 = vunpack.c.l.b16 %v49
  %v191 = vunpack.c.l.b16 %v50
  %v192 = vpack.c.b16 %v157, %v156
  %v193 = vpack.c.b16 %v159, %v158
  %v194 = vpack.c.b16 %v161, %v160
  %v195 = vpack.c.b16 %v163, %v162
  %v196 = vpack.c.b16 %v165, %v164
  %v197 = vpack.c.b16 %v167, %v166
  %v198 = vpack.c.b16 %v169, %v168
  %v199 = vpack.c.b16 %v171, %v170
  %v200 = vpack.c.b16 %v173, %v172
  %v201 = vpack.c.b16 %v175, %v174
  %v202 = vpack.c.b16 %v177, %v176
  %v203 = vpack.c.b16 %v179, %v178
  %v204 = vpack.c.b16 %v181, %v180
  %v205 = vpack.c.b16 %v183, %v182
  %v206 = vpack.c.b16 %v185, %v184
  %v207 = vpack.c.b16 %v187, %v186
  %v208 = vpack.c.b16 %v189, %v188
  %v209 = vpack.c.b16 %v191, %v190
  %vm228 = vcmask 261120
  %v230 = vsel %vm228, %v102, 0
  %v233 = vsel %vm228, %v105, 0
  %v236 = vsel %vm228, %v108, 0
  %v239 = vsel %vm228, %v111, 0
  %241 = vmatpush.bf16.msra.mxu0 %v199
  %242 = vmatpush.bf16.msra.mxu0 %v198
  %243 = vmatpush.bf16.msra.mxu0 %v197
  %244 = vmatpush.bf16.msra.mxu0 %v196
  %245 = vmatpush.bf16.msra.mxu0 %v195
  %246 = vmatpush.bf16.msra.mxu0 %v194
  %247 = vmatpush.bf16.msra.mxu0 %v193
  %248 = vmatpush.bf16.msra.mxu0 %v192
  %249 = vmatmul.bf16.gmra.mxu0 %v100
  %v250 = vpop.f32.mrf.mxu0
  %v251 = vadd.f32 0.0, %v250
  %v252 = vpop.f32.mrf.mxu0
  %v253 = vadd.f32 0.0, %v252
  %254 = vmatmul.bf16.gmra.mxu0 %v103
  %v255 = vpop.f32.mrf.mxu0
  %v256 = vadd.f32 0.0, %v255
  %v257 = vpop.f32.mrf.mxu0
  %v258 = vadd.f32 0.0, %v257
  %259 = vmatmul.bf16.gmra.mxu0 %v106
  %v260 = vpop.f32.mrf.mxu0
  %v261 = vadd.f32 0.0, %v260
  %v262 = vpop.f32.mrf.mxu0
  %v263 = vadd.f32 0.0, %v262
  %264 = vmatmul.bf16.gmra.mxu0 %v109
  %v265 = vpop.f32.mrf.mxu0
  %v266 = vadd.f32 0.0, %v265
  %v267 = vpop.f32.mrf.mxu0
  %268 = vdwg.mxu0
  %269 = vmatpush.bf16.msra.mxu0 %v207
  %270 = vmatpush.bf16.msra.mxu0 %v206
  %271 = vmatpush.bf16.msra.mxu0 %v205
  %272 = vmatpush.bf16.msra.mxu0 %v204
  %273 = vmatpush.bf16.msra.mxu0 %v203
  %274 = vmatpush.bf16.msra.mxu0 %v202
  %275 = vmatpush.bf16.msra.mxu0 %v201
  %276 = vmatpush.bf16.msra.mxu0 %v200
  %277 = vmatmul.bf16.gmra.mxu0 %v101
  %v278 = vpop.f32.mrf.mxu0
  %v279 = vadd.f32 %v251, %v278
  %v280 = vpop.f32.mrf.mxu0
  %v281 = vadd.f32 %v253, %v280
  %282 = vmatmul.bf16.gmra.mxu0 %v104
  %v283 = vpop.f32.mrf.mxu0
  %v284 = vadd.f32 %v256, %v283
  %v285 = vpop.f32.mrf.mxu0
  %v286 = vadd.f32 %v258, %v285
  %287 = vmatmul.bf16.gmra.mxu0 %v107
  %v288 = vpop.f32.mrf.mxu0
  %v289 = vadd.f32 %v261, %v288
  %v290 = vpop.f32.mrf.mxu0
  %v291 = vadd.f32 %v263, %v290
  %292 = vmatmul.bf16.gmra.mxu0 %v110
  %v293 = vpop.f32.mrf.mxu0
  %v294 = vadd.f32 %v266, %v293
  %v295 = vpop.f32.mrf.mxu0
  %296 = vdwg.mxu0
  %297 = vmatpush.bf16.msra.mxu0 0
  %298 = vmatpush.bf16.msra.mxu0 0
  %299 = vmatpush.bf16.msra.mxu0 0
  %300 = vmatpush.bf16.msra.mxu0 0
  %301 = vmatpush.bf16.msra.mxu0 0
  %302 = vmatpush.bf16.msra.mxu0 0
  %303 = vmatpush.bf16.msra.mxu0 %v209
  %304 = vmatpush.bf16.msra.mxu0 %v208
  %305 = vmatmul.bf16.gmra.mxu0 %v230
  %v306 = vpop.f32.mrf.mxu0
  %v307 = vadd.f32 %v279, %v306
  %v308 = vpop.f32.mrf.mxu0
  %v309 = vadd.f32 %v281, %v308
  %310 = vmatmul.bf16.gmra.mxu0 %v233
  %v311 = vpop.f32.mrf.mxu0
  %v312 = vadd.f32 %v284, %v311
  %v313 = vpop.f32.mrf.mxu0
  %v314 = vadd.f32 %v286, %v313
  %315 = vmatmul.bf16.gmra.mxu0 %v236
  %v316 = vpop.f32.mrf.mxu0
  %v317 = vadd.f32 %v289, %v316
  %v318 = vpop.f32.mrf.mxu0
  %v319 = vadd.f32 %v291, %v318
  %320 = vmatmul.bf16.gmra.mxu0 %v239
  %v321 = vpop.f32.mrf.mxu0
  %v322 = vadd.f32 %v294, %v321
  %v323 = vpop.f32.mrf.mxu0
  %324 = vdwg.mxu0
  %s325 = scalar_lea.vmem %s0, 84
  %v326 = vld [vmem:[%s325] sm:$0xff]
  %v327 = vld [vmem:[%s325 + $0x8] sm:$0xf]
  %v328 = vld [vmem:[%s325 + $0xc] sm:$0xff]
  %v329 = vld [vmem:[%s325 + $0x14] sm:$0xf]
  %v330 = vld [vmem:[%s325 + $0x18] sm:$0xff]
  %v331 = vld [vmem:[%s325 + $0x20] sm:$0xf]
  %v332 = vld [vmem:[%s325 + $0x24] sm:$0xff]
  %v333 = vld [vmem:[%s325 + $0x2c] sm:$0xf]
  %v334 = vld [vmem:[%s325 + $0x30] sm:$0xff]
  %v335 = vld [vmem:[%s325 + $0x38] sm:$0xf]
  %v336 = vld [vmem:[%s325 + $0x3c] sm:$0xff]
  %v337 = vld [vmem:[%s325 + $0x44] sm:$0xf]
  %v338 = vld [vmem:[%s325 + $0x48] sm:$0x11]
  %v339 = vld [vmem:[%s325 + $0x50] sm:$0x1]
  %v354 = vunpack.c.l.b16 %v326
  %v355 = vunpack.c.h.b16 %v326
  %v356 = vunpack.c.l.b16 %v327
  %v357 = vunpack.c.l.b16 %v328
  %v358 = vunpack.c.h.b16 %v328
  %v359 = vunpack.c.l.b16 %v329
  %v360 = vunpack.c.l.b16 %v330
  %v361 = vunpack.c.h.b16 %v330
  %v362 = vunpack.c.l.b16 %v331
  %v363 = vunpack.c.l.b16 %v332
  %v364 = vunpack.c.h.b16 %v332
  %v365 = vunpack.c.l.b16 %v333
  %v366 = vunpack.c.l.b16 %v334
  %v367 = vunpack.c.h.b16 %v334
  %v368 = vunpack.c.l.b16 %v335
  %v369 = vunpack.c.l.b16 %v336
  %v370 = vunpack.c.h.b16 %v336
  %v371 = vunpack.c.l.b16 %v337
  %v372 = vunpack.c.l.b16 %v338
  %v373 = vunpack.c.h.b16 %v338
  %v374 = vunpack.c.l.b16 %v339
  %v375 = vpack.c.b16 %v357, %v354
  %v376 = vpack.c.b16 %v358, %v355
  %v377 = vpack.c.b16 %v359, %v356
  %v378 = vpack.c.b16 %v363, %v360
  %v379 = vpack.c.b16 %v364, %v361
  %v380 = vpack.c.b16 %v365, %v362
  %v381 = vpack.c.b16 %v369, %v366
  %v382 = vpack.c.b16 %v370, %v367
  %v383 = vpack.c.b16 %v371, %v368
  %v384 = vpack.c.b16 %v372, %v372
  %v385 = vpack.c.b16 %v373, %v373
  %v386 = vpack.c.b16 %v374, %v374
  %v396 = vsel %vm228, %v377, 0
  %v399 = vsel %vm228, %v380, 0
  %v402 = vsel %vm228, %v383, 0
  %v405 = vsel %vm228, %v386, 0
  %407 = vmatpush.bf16.msra.mxu0 %v199
  %408 = vmatpush.bf16.msra.mxu0 %v198
  %409 = vmatpush.bf16.msra.mxu0 %v197
  %410 = vmatpush.bf16.msra.mxu0 %v196
  %411 = vmatpush.bf16.msra.mxu0 %v195
  %412 = vmatpush.bf16.msra.mxu0 %v194
  %413 = vmatpush.bf16.msra.mxu0 %v193
  %414 = vmatpush.bf16.msra.mxu0 %v192
  %415 = vmatmul.bf16.gmra.mxu0 %v375
  %v416 = vpop.f32.mrf.mxu0
  %v417 = vadd.f32 0.0, %v416
  %v418 = vpop.f32.mrf.mxu0
  %v419 = vadd.f32 0.0, %v418
  %420 = vmatmul.bf16.gmra.mxu0 %v378
  %v421 = vpop.f32.mrf.mxu0
  %v422 = vadd.f32 0.0, %v421
  %v423 = vpop.f32.mrf.mxu0
  %v424 = vadd.f32 0.0, %v423
  %425 = vmatmul.bf16.gmra.mxu0 %v381
  %v426 = vpop.f32.mrf.mxu0
  %v427 = vadd.f32 0.0, %v426
  %v428 = vpop.f32.mrf.mxu0
  %v429 = vadd.f32 0.0, %v428
  %430 = vmatmul.bf16.gmra.mxu0 %v384
  %v431 = vpop.f32.mrf.mxu0
  %v432 = vadd.f32 0.0, %v431
  %v433 = vpop.f32.mrf.mxu0
  %434 = vdwg.mxu0
  %435 = vmatpush.bf16.msra.mxu0 %v207
  %436 = vmatpush.bf16.msra.mxu0 %v206
  %437 = vmatpush.bf16.msra.mxu0 %v205
  %438 = vmatpush.bf16.msra.mxu0 %v204
  %439 = vmatpush.bf16.msra.mxu0 %v203
  %440 = vmatpush.bf16.msra.mxu0 %v202
  %441 = vmatpush.bf16.msra.mxu0 %v201
  %442 = vmatpush.bf16.msra.mxu0 %v200
  %443 = vmatmul.bf16.gmra.mxu0 %v376
  %v444 = vpop.f32.mrf.mxu0
  %v445 = vadd.f32 %v417, %v444
  %v446 = vpop.f32.mrf.mxu0
  %v447 = vadd.f32 %v419, %v446
  %448 = vmatmul.bf16.gmra.mxu0 %v379
  %v449 = vpop.f32.mrf.mxu0
  %v450 = vadd.f32 %v422, %v449
  %v451 = vpop.f32.mrf.mxu0
  %v452 = vadd.f32 %v424, %v451
  %453 = vmatmul.bf16.gmra.mxu0 %v382
  %v454 = vpop.f32.mrf.mxu0
  %v455 = vadd.f32 %v427, %v454
  %v456 = vpop.f32.mrf.mxu0
  %v457 = vadd.f32 %v429, %v456
  %458 = vmatmul.bf16.gmra.mxu0 %v385
  %v459 = vpop.f32.mrf.mxu0
  %v460 = vadd.f32 %v432, %v459
  %v461 = vpop.f32.mrf.mxu0
  %462 = vdwg.mxu0
  %463 = vmatpush.bf16.msra.mxu0 0
  %464 = vmatpush.bf16.msra.mxu0 0
  %465 = vmatpush.bf16.msra.mxu0 0
  %466 = vmatpush.bf16.msra.mxu0 0
  %467 = vmatpush.bf16.msra.mxu0 0
  %468 = vmatpush.bf16.msra.mxu0 0
  %469 = vmatpush.bf16.msra.mxu0 %v209
  %470 = vmatpush.bf16.msra.mxu0 %v208
  %471 = vmatmul.bf16.gmra.mxu0 %v396
  %v472 = vpop.f32.mrf.mxu0
  %v473 = vadd.f32 %v445, %v472
  %v474 = vpop.f32.mrf.mxu0
  %v475 = vadd.f32 %v447, %v474
  %476 = vmatmul.bf16.gmra.mxu0 %v399
  %v477 = vpop.f32.mrf.mxu0
  %v478 = vadd.f32 %v450, %v477
  %v479 = vpop.f32.mrf.mxu0
  %v480 = vadd.f32 %v452, %v479
  %481 = vmatmul.bf16.gmra.mxu0 %v402
  %v482 = vpop.f32.mrf.mxu0
  %v483 = vadd.f32 %v455, %v482
  %v484 = vpop.f32.mrf.mxu0
  %v485 = vadd.f32 %v457, %v484
  %486 = vmatmul.bf16.gmra.mxu0 %v405
  %v487 = vpop.f32.mrf.mxu0
  %v488 = vadd.f32 %v460, %v487
  %v489 = vpop.f32.mrf.mxu0
  %490 = vdwg.mxu0
  %v491 = vmax.f32 %v307, %v473
  %v492 = vmax.f32 %v309, %v475
  %v493 = vmax.f32 %v312, %v478
  %v494 = vmax.f32 %v314, %v480
  %v495 = vmax.f32 %v317, %v483
  %v496 = vmax.f32 %v319, %v485
  %v497 = vmax.f32 %v322, %v488
  %s498 = scalar_lea.vmem %s0, 168
  %v499 = vld [vmem:[%s498] sm:$0xff]
  %v500 = vld [vmem:[%s498 + $0x8] sm:$0xf]
  %v501 = vld [vmem:[%s498 + $0xc] sm:$0xff]
  %v502 = vld [vmem:[%s498 + $0x14] sm:$0xf]
  %v503 = vld [vmem:[%s498 + $0x18] sm:$0xff]
  %v504 = vld [vmem:[%s498 + $0x20] sm:$0xf]
  %v505 = vld [vmem:[%s498 + $0x24] sm:$0xff]
  %v506 = vld [vmem:[%s498 + $0x2c] sm:$0xf]
  %v507 = vld [vmem:[%s498 + $0x30] sm:$0xff]
  %v508 = vld [vmem:[%s498 + $0x38] sm:$0xf]
  %v509 = vld [vmem:[%s498 + $0x3c] sm:$0xff]
  %v510 = vld [vmem:[%s498 + $0x44] sm:$0xf]
  %v511 = vld [vmem:[%s498 + $0x48] sm:$0x11]
  %v512 = vld [vmem:[%s498 + $0x50] sm:$0x1]
  %v527 = vunpack.c.l.b16 %v499
  %v528 = vunpack.c.h.b16 %v499
  %v529 = vunpack.c.l.b16 %v500
  %v530 = vunpack.c.l.b16 %v501
  %v531 = vunpack.c.h.b16 %v501
  %v532 = vunpack.c.l.b16 %v502
  %v533 = vunpack.c.l.b16 %v503
  %v534 = vunpack.c.h.b16 %v503
  %v535 = vunpack.c.l.b16 %v504
  %v536 = vunpack.c.l.b16 %v505
  %v537 = vunpack.c.h.b16 %v505
  %v538 = vunpack.c.l.b16 %v506
  %v539 = vunpack.c.l.b16 %v507
  %v540 = vunpack.c.h.b16 %v507
  %v541 = vunpack.c.l.b16 %v508
  %v542 = vunpack.c.l.b16 %v509
  %v543 = vunpack.c.h.b16 %v509
  %v544 = vunpack.c.l.b16 %v510
  %v545 = vunpack.c.l.b16 %v511
  %v546 = vunpack.c.h.b16 %v511
  %v547 = vunpack.c.l.b16 %v512
  %v548 = vpack.c.b16 %v530, %v527
  %v549 = vpack.c.b16 %v531, %v528
  %v550 = vpack.c.b16 %v532, %v529
  %v551 = vpack.c.b16 %v536, %v533
  %v552 = vpack.c.b16 %v537, %v534
  %v553 = vpack.c.b16 %v538, %v535
  %v554 = vpack.c.b16 %v542, %v539
  %v555 = vpack.c.b16 %v543, %v540
  %v556 = vpack.c.b16 %v544, %v541
  %v557 = vpack.c.b16 %v545, %v545
  %v558 = vpack.c.b16 %v546, %v546
  %v559 = vpack.c.b16 %v547, %v547
  %v569 = vsel %vm228, %v550, 0
  %v572 = vsel %vm228, %v553, 0
  %v575 = vsel %vm228, %v556, 0
  %v578 = vsel %vm228, %v559, 0
  %580 = vmatpush.bf16.msra.mxu0 %v199
  %581 = vmatpush.bf16.msra.mxu0 %v198
  %582 = vmatpush.bf16.msra.mxu0 %v197
  %583 = vmatpush.bf16.msra.mxu0 %v196
  %584 = vmatpush.bf16.msra.mxu0 %v195
  %585 = vmatpush.bf16.msra.mxu0 %v194
  %586 = vmatpush.bf16.msra.mxu0 %v193
  %587 = vmatpush.bf16.msra.mxu0 %v192
  %588 = vmatmul.bf16.gmra.mxu0 %v548
  %v589 = vpop.f32.mrf.mxu0
  %v590 = vadd.f32 0.0, %v589
  %v591 = vpop.f32.mrf.mxu0
  %v592 = vadd.f32 0.0, %v591
  %593 = vmatmul.bf16.gmra.mxu0 %v551
  %v594 = vpop.f32.mrf.mxu0
  %v595 = vadd.f32 0.0, %v594
  %v596 = vpop.f32.mrf.mxu0
  %v597 = vadd.f32 0.0, %v596
  %598 = vmatmul.bf16.gmra.mxu0 %v554
  %v599 = vpop.f32.mrf.mxu0
  %v600 = vadd.f32 0.0, %v599
  %v601 = vpop.f32.mrf.mxu0
  %v602 = vadd.f32 0.0, %v601
  %603 = vmatmul.bf16.gmra.mxu0 %v557
  %v604 = vpop.f32.mrf.mxu0
  %v605 = vadd.f32 0.0, %v604
  %v606 = vpop.f32.mrf.mxu0
  %607 = vdwg.mxu0
  %608 = vmatpush.bf16.msra.mxu0 %v207
  %609 = vmatpush.bf16.msra.mxu0 %v206
  %610 = vmatpush.bf16.msra.mxu0 %v205
  %611 = vmatpush.bf16.msra.mxu0 %v204
  %612 = vmatpush.bf16.msra.mxu0 %v203
  %613 = vmatpush.bf16.msra.mxu0 %v202
  %614 = vmatpush.bf16.msra.mxu0 %v201
  %615 = vmatpush.bf16.msra.mxu0 %v200
  %616 = vmatmul.bf16.gmra.mxu0 %v549
  %v617 = vpop.f32.mrf.mxu0
  %v618 = vadd.f32 %v590, %v617
  %v619 = vpop.f32.mrf.mxu0
  %v620 = vadd.f32 %v592, %v619
  %621 = vmatmul.bf16.gmra.mxu0 %v552
  %v622 = vpop.f32.mrf.mxu0
  %v623 = vadd.f32 %v595, %v622
  %v624 = vpop.f32.mrf.mxu0
  %v625 = vadd.f32 %v597, %v624
  %626 = vmatmul.bf16.gmra.mxu0 %v555
  %v627 = vpop.f32.mrf.mxu0
  %v628 = vadd.f32 %v600, %v627
  %v629 = vpop.f32.mrf.mxu0
  %v630 = vadd.f32 %v602, %v629
  %631 = vmatmul.bf16.gmra.mxu0 %v558
  %v632 = vpop.f32.mrf.mxu0
  %v633 = vadd.f32 %v605, %v632
  %v634 = vpop.f32.mrf.mxu0
  %635 = vdwg.mxu0
  %636 = vmatpush.bf16.msra.mxu0 0
  %637 = vmatpush.bf16.msra.mxu0 0
  %638 = vmatpush.bf16.msra.mxu0 0
  %639 = vmatpush.bf16.msra.mxu0 0
  %640 = vmatpush.bf16.msra.mxu0 0
  %641 = vmatpush.bf16.msra.mxu0 0
  %642 = vmatpush.bf16.msra.mxu0 %v209
  %643 = vmatpush.bf16.msra.mxu0 %v208
  %644 = vmatmul.bf16.gmra.mxu0 %v569
  %v645 = vpop.f32.mrf.mxu0
  %v646 = vadd.f32 %v618, %v645
  %v647 = vpop.f32.mrf.mxu0
  %v648 = vadd.f32 %v620, %v647
  %649 = vmatmul.bf16.gmra.mxu0 %v572
  %v650 = vpop.f32.mrf.mxu0
  %v651 = vadd.f32 %v623, %v650
  %v652 = vpop.f32.mrf.mxu0
  %v653 = vadd.f32 %v625, %v652
  %654 = vmatmul.bf16.gmra.mxu0 %v575
  %v655 = vpop.f32.mrf.mxu0
  %v656 = vadd.f32 %v628, %v655
  %v657 = vpop.f32.mrf.mxu0
  %v658 = vadd.f32 %v630, %v657
  %659 = vmatmul.bf16.gmra.mxu0 %v578
  %v660 = vpop.f32.mrf.mxu0
  %v661 = vadd.f32 %v633, %v660
  %v662 = vpop.f32.mrf.mxu0
  %663 = vdwg.mxu0
  %v664 = vmax.f32 %v491, %v646
  %v665 = vmax.f32 %v492, %v648
  %v666 = vmax.f32 %v493, %v651
  %v667 = vmax.f32 %v494, %v653
  %v668 = vmax.f32 %v495, %v656
  %v669 = vmax.f32 %v496, %v658
  %v670 = vmax.f32 %v497, %v661
  %s671 = scalar_lea.vmem %s0, 252
  %v672 = vld [vmem:[%s671] sm:$0xff]
  %v673 = vld [vmem:[%s671 + $0x8] sm:$0xf]
  %v674 = vld [vmem:[%s671 + $0xc] sm:$0xff]
  %v675 = vld [vmem:[%s671 + $0x14] sm:$0xf]
  %v676 = vld [vmem:[%s671 + $0x18] sm:$0xff]
  %v677 = vld [vmem:[%s671 + $0x20] sm:$0xf]
  %v678 = vld [vmem:[%s671 + $0x24] sm:$0xff]
  %v679 = vld [vmem:[%s671 + $0x2c] sm:$0xf]
  %v680 = vld [vmem:[%s671 + $0x30] sm:$0xff]
  %v681 = vld [vmem:[%s671 + $0x38] sm:$0xf]
  %v682 = vld [vmem:[%s671 + $0x3c] sm:$0xff]
  %v683 = vld [vmem:[%s671 + $0x44] sm:$0xf]
  %v684 = vld [vmem:[%s671 + $0x48] sm:$0x11]
  %v685 = vld [vmem:[%s671 + $0x50] sm:$0x1]
  %v700 = vunpack.c.l.b16 %v672
  %v701 = vunpack.c.h.b16 %v672
  %v702 = vunpack.c.l.b16 %v673
  %v703 = vunpack.c.l.b16 %v674
  %v704 = vunpack.c.h.b16 %v674
  %v705 = vunpack.c.l.b16 %v675
  %v706 = vunpack.c.l.b16 %v676
  %v707 = vunpack.c.h.b16 %v676
  %v708 = vunpack.c.l.b16 %v677
  %v709 = vunpack.c.l.b16 %v678
  %v710 = vunpack.c.h.b16 %v678
  %v711 = vunpack.c.l.b16 %v679
  %v712 = vunpack.c.l.b16 %v680
  %v713 = vunpack.c.h.b16 %v680
  %v714 = vunpack.c.l.b16 %v681
  %v715 = vunpack.c.l.b16 %v682
  %v716 = vunpack.c.h.b16 %v682
  %v717 = vunpack.c.l.b16 %v683
  %v718 = vunpack.c.l.b16 %v684
  %v719 = vunpack.c.h.b16 %v684
  %v720 = vunpack.c.l.b16 %v685
  %v721 = vpack.c.b16 %v703, %v700
  %v722 = vpack.c.b16 %v704, %v701
  %v723 = vpack.c.b16 %v705, %v702
  %v724 = vpack.c.b16 %v709, %v706
  %v725 = vpack.c.b16 %v710, %v707
  %v726 = vpack.c.b16 %v711, %v708
  %v727 = vpack.c.b16 %v715, %v712
  %v728 = vpack.c.b16 %v716, %v713
  %v729 = vpack.c.b16 %v717, %v714
  %v730 = vpack.c.b16 %v718, %v718
  %v731 = vpack.c.b16 %v719, %v719
  %v732 = vpack.c.b16 %v720, %v720
  %v742 = vsel %vm228, %v723, 0
  %v745 = vsel %vm228, %v726, 0
  %v748 = vsel %vm228, %v729, 0
  %v751 = vsel %vm228, %v732, 0
  %753 = vmatpush.bf16.msra.mxu0 %v199
  %754 = vmatpush.bf16.msra.mxu0 %v198
  %755 = vmatpush.bf16.msra.mxu0 %v197
  %756 = vmatpush.bf16.msra.mxu0 %v196
  %757 = vmatpush.bf16.msra.mxu0 %v195
  %758 = vmatpush.bf16.msra.mxu0 %v194
  %759 = vmatpush.bf16.msra.mxu0 %v193
  %760 = vmatpush.bf16.msra.mxu0 %v192
  %761 = vmatmul.bf16.gmra.mxu0 %v721
  %v762 = vpop.f32.mrf.mxu0
  %v763 = vadd.f32 0.0, %v762
  %v764 = vpop.f32.mrf.mxu0
  %v765 = vadd.f32 0.0, %v764
  %766 = vmatmul.bf16.gmra.mxu0 %v724
  %v767 = vpop.f32.mrf.mxu0
  %v768 = vadd.f32 0.0, %v767
  %v769 = vpop.f32.mrf.mxu0
  %v770 = vadd.f32 0.0, %v769
  %771 = vmatmul.bf16.gmra.mxu0 %v727
  %v772 = vpop.f32.mrf.mxu0
  %v773 = vadd.f32 0.0, %v772
  %v774 = vpop.f32.mrf.mxu0
  %v775 = vadd.f32 0.0, %v774
  %776 = vmatmul.bf16.gmra.mxu0 %v730
  %v777 = vpop.f32.mrf.mxu0
  %v778 = vadd.f32 0.0, %v777
  %v779 = vpop.f32.mrf.mxu0
  %780 = vdwg.mxu0
  %781 = vmatpush.bf16.msra.mxu0 %v207
  %782 = vmatpush.bf16.msra.mxu0 %v206
  %783 = vmatpush.bf16.msra.mxu0 %v205
  %784 = vmatpush.bf16.msra.mxu0 %v204
  %785 = vmatpush.bf16.msra.mxu0 %v203
  %786 = vmatpush.bf16.msra.mxu0 %v202
  %787 = vmatpush.bf16.msra.mxu0 %v201
  %788 = vmatpush.bf16.msra.mxu0 %v200
  %789 = vmatmul.bf16.gmra.mxu0 %v722
  %v790 = vpop.f32.mrf.mxu0
  %v791 = vadd.f32 %v763, %v790
  %v792 = vpop.f32.mrf.mxu0
  %v793 = vadd.f32 %v765, %v792
  %794 = vmatmul.bf16.gmra.mxu0 %v725
  %v795 = vpop.f32.mrf.mxu0
  %v796 = vadd.f32 %v768, %v795
  %v797 = vpop.f32.mrf.mxu0
  %v798 = vadd.f32 %v770, %v797
  %799 = vmatmul.bf16.gmra.mxu0 %v728
  %v800 = vpop.f32.mrf.mxu0
  %v801 = vadd.f32 %v773, %v800
  %v802 = vpop.f32.mrf.mxu0
  %v803 = vadd.f32 %v775, %v802
  %804 = vmatmul.bf16.gmra.mxu0 %v731
  %v805 = vpop.f32.mrf.mxu0
  %v806 = vadd.f32 %v778, %v805
  %v807 = vpop.f32.mrf.mxu0
  %808 = vdwg.mxu0
  %809 = vmatpush.bf16.msra.mxu0 0
  %810 = vmatpush.bf16.msra.mxu0 0
  %811 = vmatpush.bf16.msra.mxu0 0
  %812 = vmatpush.bf16.msra.mxu0 0
  %813 = vmatpush.bf16.msra.mxu0 0
  %814 = vmatpush.bf16.msra.mxu0 0
  %815 = vmatpush.bf16.msra.mxu0 %v209
  %816 = vmatpush.bf16.msra.mxu0 %v208
  %817 = vmatmul.bf16.gmra.mxu0 %v742
  %v818 = vpop.f32.mrf.mxu0
  %v819 = vadd.f32 %v791, %v818
  %v820 = vpop.f32.mrf.mxu0
  %v821 = vadd.f32 %v793, %v820
  %822 = vmatmul.bf16.gmra.mxu0 %v745
  %v823 = vpop.f32.mrf.mxu0
  %v824 = vadd.f32 %v796, %v823
  %v825 = vpop.f32.mrf.mxu0
  %v826 = vadd.f32 %v798, %v825
  %827 = vmatmul.bf16.gmra.mxu0 %v748
  %v828 = vpop.f32.mrf.mxu0
  %v829 = vadd.f32 %v801, %v828
  %v830 = vpop.f32.mrf.mxu0
  %v831 = vadd.f32 %v803, %v830
  %832 = vmatmul.bf16.gmra.mxu0 %v751
  %v833 = vpop.f32.mrf.mxu0
  %v834 = vadd.f32 %v806, %v833
  %v835 = vpop.f32.mrf.mxu0
  %836 = vdwg.mxu0
  %v837 = vmax.f32 %v664, %v819
  %v838 = vmax.f32 %v665, %v821
  %v839 = vmax.f32 %v666, %v824
  %v840 = vmax.f32 %v667, %v826
  %v841 = vmax.f32 %v668, %v829
  %v842 = vmax.f32 %v669, %v831
  %v843 = vmax.f32 %v670, %v834
  %v844 = vld [vmem:[%s2] sm:$0x1]
  %v846 = vperm.slane %v844, 0
  %v848 = vadd.f32 %v837, %v846
  %v849 = vadd.f32 %v838, %v846
  %v850 = vadd.f32 %v839, %v846
  %v851 = vadd.f32 %v840, %v846
  %v852 = vadd.f32 %v841, %v846
  %v853 = vadd.f32 %v842, %v846
  %v854 = vadd.f32 %v843, %v846
  %v855 = vmax.f32 %v848, 0.0
  %v856 = vmax.f32 %v849, 0.0
  %v857 = vmax.f32 %v850, 0.0
  %v858 = vmax.f32 %v851, 0.0
  %v859 = vmax.f32 %v852, 0.0
  %v860 = vmax.f32 %v853, 0.0
  %v861 = vmax.f32 %v854, 0.0
  %v862 = vpack.c.bf16 %v855, %v855
  %v863 = vpack.c.bf16 %v856, %v856
  %v864 = vpack.c.bf16 %v857, %v857
  %v865 = vpack.c.bf16 %v858, %v858
  %v866 = vpack.c.bf16 %v859, %v859
  %v867 = vpack.c.bf16 %v860, %v860
  %v868 = vpack.c.bf16 %v861, %v861
  %vm869 = vcmask 519168
  %870 = vst.msk [vmem:[%s3] sm:$0xf] %vm869, %v862
  %871 = vst.msk [vmem:[%s3 + $0x4] sm:$0xf] %vm869, %v863
  %872 = vst.msk [vmem:[%s3 + $0x8] sm:$0xf] %vm869, %v864
  %873 = vst.msk [vmem:[%s3 + $0xc] sm:$0xf] %vm869, %v865
  %874 = vst.msk [vmem:[%s3 + $0x10] sm:$0xf] %vm869, %v866
  %875 = vst.msk [vmem:[%s3 + $0x14] sm:$0xf] %vm869, %v867
  %vm876 = vcmask 516096
  %877 = vst.msk [vmem:[%s3 + $0x18] sm:$0x1] %vm876, %v868
  // Predicated region
  $region14: #{embed_mnist_net_forward.4} parent=0 // pred_check
    _
  $region15: #{embed_mnist_net_forward.4} parent=0 // pred_check_branch
    %879 = sbr.rel (0) target = $region17
  $region16: #{embed_mnist_net_forward.4} parent=0 // pred_region
    _
  $region17: #{embed_mnist_net_forward.4} parent=0 // pred_fallthru
    _
  // Predicated region
  $region18: #{embed_mnist_net_forward.4} parent=0 // pred_check
    _
  $region19: #{embed_mnist_net_forward.4} parent=0 // pred_check_branch
    %881 = sbr.rel (0) target = $region21
  $region20: #{embed_mnist_net_forward.4} parent=0 // pred_region
    _
  $region21: #{embed_mnist_net_forward.4} parent=0 // pred_fallthru
    _

// kernel: embed_mnist_net_forward.5
$region0: #{embed_mnist_net_forward.5}
  #allocation0 [shape = 'u32[]', space=smem, size = 0x4, offset = 0x4, fixed_abs, tag = 'smem constant byte address 0x4 - core index']
  #allocation1 [shape = 'u32[72,128]{1,0:T(1,128)}', space=vmem, size = 0x9000, scoped, tag = 'internal scratch']
  %s0 = inlined_call_operand.vmem [shape: bf16[2,1600], index: 0, kind: input, shape index: {}]
  %s1 = inlined_call_operand.vmem [shape: bf16[1600,64], index: 1, kind: input, shape index: {}]
  %s2 = inlined_call_operand.vmem [shape: f32[1,64], index: 2, kind: input, shape index: {}]
  %s3 = inlined_call_operand.vmem [shape: bf16[64,128], index: 3, kind: input, shape index: {}]
  %s4 = inlined_call_operand.vmem [shape: f32[1,128], index: 4, kind: input, shape index: {}]
  %s5 = inlined_call_operand.vmem [shape: bf16[128,128], index: 5, kind: input, shape index: {}]
  %s6 = inlined_call_operand.vmem [shape: f32[1,128], index: 6, kind: input, shape index: {}]
  %s7 = inlined_call_operand.hbm [shape: f32[2,128], index: 7, kind: output, shape index: {}]
  %s8 = sld [smem:[#allocation0]]
  $region38: #{embed_mnist_net_forward.5} parent=0
    _
  %s10 = ssub.s32 1, %s8
  %s11 = scalar_select 0, %s10, %s8
  $region1: #{embed_mnist_net_forward.5} parent=0
    #allocation2 [shape = 'u8[1024]{0}', space=vmem, size = 0x400, scoped, tag = 'output window, operand 0, single buffered']
    #allocation3 [shape = 's32[1]{0}', space=sflag, size = 0x4, scoped, tag = 'scoped memory for embed_mnist_net_forward.5']
    %12 = vsyncpa [#allocation3], 0
    // Predicated region
    $region2: #{embed_mnist_net_forward.5} parent=1 // pred_check
      _
    $region3: #{embed_mnist_net_forward.5} parent=1 // pred_check_branch
      %14 = sbr.rel (0) target = $region5
    $region4: #{embed_mnist_net_forward.5} parent=1 // pred_region
      _
    $region5: #{embed_mnist_net_forward.5} parent=1 // pred_fallthru
      _
    // Predicated region
    $region6: #{embed_mnist_net_forward.5} parent=1 // pred_check
      _
    $region7: #{embed_mnist_net_forward.5} parent=1 // pred_check_branch
      %16 = sbr.rel (0) target = $region9
    $region8: #{embed_mnist_net_forward.5} parent=1 // pred_region
      _
    $region9: #{embed_mnist_net_forward.5} parent=1 // pred_fallthru
      _
    // Predicated region
    $region10: #{embed_mnist_net_forward.5} parent=1 // pred_check
      _
    $region11: #{embed_mnist_net_forward.5} parent=1 // pred_check_branch
      %18 = sbr.rel (0) target = $region13
    $region12: #{embed_mnist_net_forward.5} parent=1 // pred_region
      _
    $region13: #{embed_mnist_net_forward.5} parent=1 // pred_fallthru
      _
    // Predicated region
    $region14: #{embed_mnist_net_forward.5} parent=1 // pred_check
      _
    $region15: #{embed_mnist_net_forward.5} parent=1 // pred_check_branch
      %20 = sbr.rel (0) target = $region17
    $region16: #{embed_mnist_net_forward.5} parent=1 // pred_region
      _
    $region17: #{embed_mnist_net_forward.5} parent=1 // pred_fallthru
      _
    // Predicated region
    $region18: #{embed_mnist_net_forward.5} parent=1 // pred_check
      _
    $region19: #{embed_mnist_net_forward.5} parent=1 // pred_check_branch
      %22 = sbr.rel (0) target = $region21
    $region20: #{embed_mnist_net_forward.5} parent=1 // pred_region
      _
    $region21: #{embed_mnist_net_forward.5} parent=1 // pred_fallthru
      _
    // Predicated region
    $region22: #{embed_mnist_net_forward.5} parent=1 // pred_check
      _
    $region23: #{embed_mnist_net_forward.5} parent=1 // pred_check_branch
      %24 = sbr.rel (0) target = $region25
    $region24: #{embed_mnist_net_forward.5} parent=1 // pred_region
      _
    $region25: #{embed_mnist_net_forward.5} parent=1 // pred_fallthru
      _
    // Predicated region
    $region26: #{embed_mnist_net_forward.5} parent=1 // pred_check
      _
    $region27: #{embed_mnist_net_forward.5} parent=1 // pred_check_branch
      %26 = sbr.rel (0) target = $region29
    $region28: #{embed_mnist_net_forward.5} parent=1 // pred_region
      _
    $region29: #{embed_mnist_net_forward.5} parent=1 // pred_fallthru
      _
    %v28 = vld [vmem:[%s0] sm:$0xff]
    %v29 = vld [vmem:[%s0 + $0x8] sm:$0x1f]
    %v30 = vld [vmem:[%s1] sm:$0xf]
    %v31 = vld [vmem:[%s1 + $0x4] sm:$0xf]
    %v32 = vld [vmem:[%s1 + $0x8] sm:$0xf]
    %v33 = vld [vmem:[%s1 + $0xc] sm:$0xf]
    %v34 = vld [vmem:[%s1 + $0x10] sm:$0xf]
    %v35 = vld [vmem:[%s1 + $0x14] sm:$0xf]
    %v36 = vld [vmem:[%s1 + $0x18] sm:$0xf]
    %v37 = vld [vmem:[%s1 + $0x1c] sm:$0xf]
    %v38 = vld [vmem:[%s1 + $0x20] sm:$0xf]
    %v39 = vld [vmem:[%s1 + $0x24] sm:$0xf]
    %v40 = vld [vmem:[%s1 + $0x28] sm:$0xf]
    %v41 = vld [vmem:[%s1 + $0x2c] sm:$0xf]
    %v42 = vld [vmem:[%s1 + $0x30] sm:$0xf]
    %v43 = vld [vmem:[%s1 + $0x34] sm:$0xf]
    %v44 = vld [vmem:[%s1 + $0x38] sm:$0xf]
    %v45 = vld [vmem:[%s1 + $0x3c] sm:$0xf]
    %v46 = vld [vmem:[%s1 + $0x40] sm:$0xf]
    %v47 = vld [vmem:[%s1 + $0x44] sm:$0xf]
    %v48 = vld [vmem:[%s1 + $0x48] sm:$0xf]
    %v49 = vld [vmem:[%s1 + $0x4c] sm:$0xf]
    %v50 = vld [vmem:[%s1 + $0x50] sm:$0xf]
    %v51 = vld [vmem:[%s1 + $0x54] sm:$0xf]
    %v52 = vld [vmem:[%s1 + $0x58] sm:$0xf]
    %v53 = vld [vmem:[%s1 + $0x5c] sm:$0xf]
    %v54 = vld [vmem:[%s1 + $0x60] sm:$0xf]
    %v55 = vld [vmem:[%s1 + $0x64] sm:$0xf]
    %v56 = vld [vmem:[%s1 + $0x68] sm:$0xf]
    %v57 = vld [vmem:[%s1 + $0x6c] sm:$0xf]
    %v58 = vld [vmem:[%s1 + $0x70] sm:$0xf]
    %v59 = vld [vmem:[%s1 + $0x74] sm:$0xf]
    %v60 = vld [vmem:[%s1 + $0x78] sm:$0xf]
    %v61 = vld [vmem:[%s1 + $0x7c] sm:$0xf]
    %v62 = vld [vmem:[%s1 + $0x80] sm:$0xf]
    %v63 = vld [vmem:[%s1 + $0x84] sm:$0xf]
    %v64 = vld [vmem:[%s1 + $0x88] sm:$0xf]
    %v65 = vld [vmem:[%s1 + $0x8c] sm:$0xf]
    %v66 = vld [vmem:[%s1 + $0x90] sm:$0xf]
    %v67 = vld [vmem:[%s1 + $0x94] sm:$0xf]
    %v68 = vld [vmem:[%s1 + $0x98] sm:$0xf]
    %v69 = vld [vmem:[%s1 + $0x9c] sm:$0xf]
    %v70 = vld [vmem:[%s1 + $0xa0] sm:$0xf]
    %v71 = vld [vmem:[%s1 + $0xa4] sm:$0xf]
    %v72 = vld [vmem:[%s1 + $0xa8] sm:$0xf]
    %v73 = vld [vmem:[%s1 + $0xac] sm:$0xf]
    %v74 = vld [vmem:[%s1 + $0xb0] sm:$0xf]
    %v75 = vld [vmem:[%s1 + $0xb4] sm:$0xf]
    %v76 = vld [vmem:[%s1 + $0xb8] sm:$0xf]
    %v77 = vld [vmem:[%s1 + $0xbc] sm:$0xf]
    %v78 = vld [vmem:[%s1 + $0xc0] sm:$0xf]
    %v79 = vld [vmem:[%s1 + $0xc4] sm:$0xf]
    %v80 = vld [vmem:[%s1 + $0xc8] sm:$0xf]
    %v81 = vld [vmem:[%s1 + $0xcc] sm:$0xf]
    %v82 = vld [vmem:[%s1 + $0xd0] sm:$0xf]
    %v83 = vld [vmem:[%s1 + $0xd4] sm:$0xf]
    %v84 = vld [vmem:[%s1 + $0xd8] sm:$0xf]
    %v85 = vld [vmem:[%s1 + $0xdc] sm:$0xf]
    %v86 = vld [vmem:[%s1 + $0xe0] sm:$0xf]
    %v87 = vld [vmem:[%s1 + $0xe4] sm:$0xf]
    %v88 = vld [vmem:[%s1 + $0xe8] sm:$0xf]
    %v89 = vld [vmem:[%s1 + $0xec] sm:$0xf]
    %v90 = vld [vmem:[%s1 + $0xf0] sm:$0xf]
    %v91 = vld [vmem:[%s1 + $0xf4] sm:$0xf]
    %v92 = vld [vmem:[%s1 + $0xf8] sm:$0xf]
    %v93 = vld [vmem:[%s1 + $0xfc] sm:$0xf]
    %v94 = vld [vmem:[%s1 + $0x100] sm:$0xf]
    %v95 = vld [vmem:[%s1 + $0x104] sm:$0xf]
    %v96 = vld [vmem:[%s1 + $0x108] sm:$0xf]
    %v97 = vld [vmem:[%s1 + $0x10c] sm:$0xf]
    %v98 = vld [vmem:[%s1 + $0x110] sm:$0xf]
    %v99 = vld [vmem:[%s1 + $0x114] sm:$0xf]
    %v100 = vld [vmem:[%s1 + $0x118] sm:$0xf]
    %v101 = vld [vmem:[%s1 + $0x11c] sm:$0xf]
    %v102 = vld [vmem:[%s1 + $0x120] sm:$0xf]
    %v103 = vld [vmem:[%s1 + $0x124] sm:$0xf]
    %v104 = vld [vmem:[%s1 + $0x128] sm:$0xf]
    %v105 = vld [vmem:[%s1 + $0x12c] sm:$0xf]
    %v106 = vld [vmem:[%s1 + $0x130] sm:$0xf]
    %v107 = vld [vmem:[%s1 + $0x134] sm:$0xf]
    %v108 = vld [vmem:[%s1 + $0x138] sm:$0xf]
    %v109 = vld [vmem:[%s1 + $0x13c] sm:$0xf]
    %v110 = vld [vmem:[%s1 + $0x140] sm:$0xf]
    %v111 = vld [vmem:[%s1 + $0x144] sm:$0xf]
    %v112 = vld [vmem:[%s1 + $0x148] sm:$0xf]
    %v113 = vld [vmem:[%s1 + $0x14c] sm:$0xf]
    %v114 = vld [vmem:[%s1 + $0x150] sm:$0xf]
    %v115 = vld [vmem:[%s1 + $0x154] sm:$0xf]
    %v116 = vld [vmem:[%s1 + $0x158] sm:$0xf]
    %v117 = vld [vmem:[%s1 + $0x15c] sm:$0xf]
    %v118 = vld [vmem:[%s1 + $0x160] sm:$0xf]
    %v119 = vld [vmem:[%s1 + $0x164] sm:$0xf]
    %v120 = vld [vmem:[%s1 + $0x168] sm:$0xf]
    %v121 = vld [vmem:[%s1 + $0x16c] sm:$0xf]
    %v122 = vld [vmem:[%s1 + $0x170] sm:$0xf]
    %v123 = vld [vmem:[%s1 + $0x174] sm:$0xf]
    %v124 = vld [vmem:[%s1 + $0x178] sm:$0xf]
    %v125 = vld [vmem:[%s1 + $0x17c] sm:$0xf]
    %v126 = vld [vmem:[%s1 + $0x180] sm:$0xf]
    %v127 = vld [vmem:[%s1 + $0x184] sm:$0xf]
    %v128 = vld [vmem:[%s1 + $0x188] sm:$0xf]
    %v129 = vld [vmem:[%s1 + $0x18c] sm:$0xf]
    %v130 = vld [vmem:[%s1 + $0x190] sm:$0xf]
    %v131 = vld [vmem:[%s1 + $0x194] sm:$0xf]
    %v132 = vld [vmem:[%s1 + $0x198] sm:$0xf]
    %v133 = vld [vmem:[%s1 + $0x19c] sm:$0xf]
    %v134 = vld [vmem:[%s1 + $0x1a0] sm:$0xf]
    %v135 = vld [vmem:[%s1 + $0x1a4] sm:$0xf]
    %v136 = vld [vmem:[%s1 + $0x1a8] sm:$0xf]
    %v137 = vld [vmem:[%s1 + $0x1ac] sm:$0xf]
    %v138 = vld [vmem:[%s1 + $0x1b0] sm:$0xf]
    %v139 = vld [vmem:[%s1 + $0x1b4] sm:$0xf]
    %v140 = vld [vmem:[%s1 + $0x1b8] sm:$0xf]
    %v141 = vld [vmem:[%s1 + $0x1bc] sm:$0xf]
    %v142 = vld [vmem:[%s1 + $0x1c0] sm:$0xf]
    %v143 = vld [vmem:[%s1 + $0x1c4] sm:$0xf]
    %v144 = vld [vmem:[%s1 + $0x1c8] sm:$0xf]
    %v145 = vld [vmem:[%s1 + $0x1cc] sm:$0xf]
    %v146 = vld [vmem:[%s1 + $0x1d0] sm:$0xf]
    %v147 = vld [vmem:[%s1 + $0x1d4] sm:$0xf]
    %v148 = vld [vmem:[%s1 + $0x1d8] sm:$0xf]
    %v149 = vld [vmem:[%s1 + $0x1dc] sm:$0xf]
    %v150 = vld [vmem:[%s1 + $0x1e0] sm:$0xf]
    %v151 = vld [vmem:[%s1 + $0x1e4] sm:$0xf]
    %v152 = vld [vmem:[%s1 + $0x1e8] sm:$0xf]
    %v153 = vld [vmem:[%s1 + $0x1ec] sm:$0xf]
    %v154 = vld [vmem:[%s1 + $0x1f0] sm:$0xf]
    %v155 = vld [vmem:[%s1 + $0x1f4] sm:$0xf]
    %v156 = vld [vmem:[%s1 + $0x1f8] sm:$0xf]
    %v157 = vld [vmem:[%s1 + $0x1fc] sm:$0xf]
    %v158 = vld [vmem:[%s1 + $0x200] sm:$0xf]
    %v159 = vld [vmem:[%s1 + $0x204] sm:$0xf]
    %v160 = vld [vmem:[%s1 + $0x208] sm:$0xf]
    %v161 = vld [vmem:[%s1 + $0x20c] sm:$0xf]
    %v162 = vld [vmem:[%s1 + $0x210] sm:$0xf]
    %v163 = vld [vmem:[%s1 + $0x214] sm:$0xf]
    %v164 = vld [vmem:[%s1 + $0x218] sm:$0xf]
    %v165 = vld [vmem:[%s1 + $0x21c] sm:$0xf]
    %v166 = vld [vmem:[%s1 + $0x220] sm:$0xf]
    %v167 = vld [vmem:[%s1 + $0x224] sm:$0xf]
    %v168 = vld [vmem:[%s1 + $0x228] sm:$0xf]
    %v169 = vld [vmem:[%s1 + $0x22c] sm:$0xf]
    %v170 = vld [vmem:[%s1 + $0x230] sm:$0xf]
    %v171 = vld [vmem:[%s1 + $0x234] sm:$0xf]
    %v172 = vld [vmem:[%s1 + $0x238] sm:$0xf]
    %v173 = vld [vmem:[%s1 + $0x23c] sm:$0xf]
    %v174 = vld [vmem:[%s1 + $0x240] sm:$0xf]
    %v175 = vld [vmem:[%s1 + $0x244] sm:$0xf]
    %v176 = vld [vmem:[%s1 + $0x248] sm:$0xf]
    %v177 = vld [vmem:[%s1 + $0x24c] sm:$0xf]
    %v178 = vld [vmem:[%s1 + $0x250] sm:$0xf]
    %v179 = vld [vmem:[%s1 + $0x254] sm:$0xf]
    %v180 = vld [vmem:[%s1 + $0x258] sm:$0xf]
    %v181 = vld [vmem:[%s1 + $0x25c] sm:$0xf]
    %v182 = vld [vmem:[%s1 + $0x260] sm:$0xf]
    %v183 = vld [vmem:[%s1 + $0x264] sm:$0xf]
    %v184 = vld [vmem:[%s1 + $0x268] sm:$0xf]
    %v185 = vld [vmem:[%s1 + $0x26c] sm:$0xf]
    %v186 = vld [vmem:[%s1 + $0x270] sm:$0xf]
    %v187 = vld [vmem:[%s1 + $0x274] sm:$0xf]
    %v188 = vld [vmem:[%s1 + $0x278] sm:$0xf]
    %v189 = vld [vmem:[%s1 + $0x27c] sm:$0xf]
    %v190 = vld [vmem:[%s1 + $0x280] sm:$0xf]
    %v191 = vld [vmem:[%s1 + $0x284] sm:$0xf]
    %v192 = vld [vmem:[%s1 + $0x288] sm:$0xf]
    %v193 = vld [vmem:[%s1 + $0x28c] sm:$0xf]
    %v194 = vld [vmem:[%s1 + $0x290] sm:$0xf]
    %v195 = vld [vmem:[%s1 + $0x294] sm:$0xf]
    %v196 = vld [vmem:[%s1 + $0x298] sm:$0xf]
    %v197 = vld [vmem:[%s1 + $0x29c] sm:$0xf]
    %v198 = vld [vmem:[%s1 + $0x2a0] sm:$0xf]
    %v199 = vld [vmem:[%s1 + $0x2a4] sm:$0xf]
    %v200 = vld [vmem:[%s1 + $0x2a8] sm:$0xf]
    %v201 = vld [vmem:[%s1 + $0x2ac] sm:$0xf]
    %v202 = vld [vmem:[%s1 + $0x2b0] sm:$0xf]
    %v203 = vld [vmem:[%s1 + $0x2b4] sm:$0xf]
    %v204 = vld [vmem:[%s1 + $0x2b8] sm:$0xf]
    %v205 = vld [vmem:[%s1 + $0x2bc] sm:$0xf]
    %v206 = vld [vmem:[%s1 + $0x2c0] sm:$0xf]
    %v207 = vld [vmem:[%s1 + $0x2c4] sm:$0xf]
    %v208 = vld [vmem:[%s1 + $0x2c8] sm:$0xf]
    %v209 = vld [vmem:[%s1 + $0x2cc] sm:$0xf]
    %v210 = vld [vmem:[%s1 + $0x2d0] sm:$0xf]
    %v211 = vld [vmem:[%s1 + $0x2d4] sm:$0xf]
    %v212 = vld [vmem:[%s1 + $0x2d8] sm:$0xf]
    %v213 = vld [vmem:[%s1 + $0x2dc] sm:$0xf]
    %v214 = vld [vmem:[%s1 + $0x2e0] sm:$0xf]
    %v215 = vld [vmem:[%s1 + $0x2e4] sm:$0xf]
    %v216 = vld [vmem:[%s1 + $0x2e8] sm:$0xf]
    %v217 = vld [vmem:[%s1 + $0x2ec] sm:$0xf]
    %v218 = vld [vmem:[%s1 + $0x2f0] sm:$0xf]
    %v219 = vld [vmem:[%s1 + $0x2f4] sm:$0xf]
    %v220 = vld [vmem:[%s1 + $0x2f8] sm:$0xf]
    %v221 = vld [vmem:[%s1 + $0x2fc] sm:$0xf]
    %v222 = vld [vmem:[%s1 + $0x300] sm:$0xf]
    %v223 = vld [vmem:[%s1 + $0x304] sm:$0xf]
    %v224 = vld [vmem:[%s1 + $0x308] sm:$0xf]
    %v225 = vld [vmem:[%s1 + $0x30c] sm:$0xf]
    %v226 = vld [vmem:[%s1 + $0x310] sm:$0xf]
    %v227 = vld [vmem:[%s1 + $0x314] sm:$0xf]
    %v228 = vld [vmem:[%s1 + $0x318] sm:$0xf]
    %v229 = vld [vmem:[%s1 + $0x31c] sm:$0xf]
    %v230 = vld [vmem:[%s2] sm:$0x1]
    %v232 = vperm.slane %v230, 0
    %235 = vst [vmem:[#allocation1] ss:$9 sm:$0xff] %v28
    %v236 = vld [vmem:[#allocation1] sm:$0xff]
    %v237 = vld [vmem:[#allocation1 + $0x9] sm:$0xff]
    %v238 = vld [vmem:[#allocation1 + $0x12] sm:$0xff]
    %v239 = vld [vmem:[#allocation1 + $0x1b] sm:$0xff]
    %v240 = vld [vmem:[#allocation1 + $0x24] sm:$0xff]
    %v241 = vld [vmem:[#allocation1 + $0x2d] sm:$0xff]
    %v242 = vld [vmem:[#allocation1 + $0x36] sm:$0xff]
    %v243 = vld [vmem:[#allocation1 + $0x3f] sm:$0xff]
    %245 = vst [vmem:[#allocation1] ss:$9 sm:$0xff] %v29
    %v246 = vld [vmem:[#allocation1] sm:$0xff]
    %v247 = vld [vmem:[#allocation1 + $0x9] sm:$0xff]
    %v248 = vld [vmem:[#allocation1 + $0x12] sm:$0xff]
    %v249 = vld [vmem:[#allocation1 + $0x1b] sm:$0xff]
    %v250 = vld [vmem:[#allocation1 + $0x24] sm:$0xff]
    %v463 = vunpack.c.l.b16 %v30
    %v464 = vunpack.c.l.b16 %v31
    %v465 = vunpack.c.l.b16 %v32
    %v466 = vunpack.c.l.b16 %v33
    %v467 = vunpack.c.l.b16 %v34
    %v468 = vunpack.c.l.b16 %v35
    %v469 = vunpack.c.l.b16 %v36
    %v470 = vunpack.c.l.b16 %v37
    %v471 = vunpack.c.l.b16 %v38
    %v472 = vunpack.c.l.b16 %v39
    %v473 = vunpack.c.l.b16 %v40
    %v474 = vunpack.c.l.b16 %v41
    %v475 = vunpack.c.l.b16 %v42
    %v476 = vunpack.c.l.b16 %v43
    %v477 = vunpack.c.l.b16 %v44
    %v478 = vunpack.c.l.b16 %v45
    %v479 = vunpack.c.l.b16 %v46
    %v480 = vunpack.c.l.b16 %v47
    %v481 = vunpack.c.l.b16 %v48
    %v482 = vunpack.c.l.b16 %v49
    %v483 = vunpack.c.l.b16 %v50
    %v484 = vunpack.c.l.b16 %v51
    %v485 = vunpack.c.l.b16 %v52
    %v486 = vunpack.c.l.b16 %v53
    %v487 = vunpack.c.l.b16 %v54
    %v488 = vunpack.c.l.b16 %v55
    %v489 = vunpack.c.l.b16 %v56
    %v490 = vunpack.c.l.b16 %v57
    %v491 = vunpack.c.l.b16 %v58
    %v492 = vunpack.c.l.b16 %v59
    %v493 = vunpack.c.l.b16 %v60
    %v494 = vunpack.c.l.b16 %v61
    %v495 = vunpack.c.l.b16 %v62
    %v496 = vunpack.c.l.b16 %v63
    %v497 = vunpack.c.l.b16 %v64
    %v498 = vunpack.c.l.b16 %v65
    %v499 = vunpack.c.l.b16 %v66
    %v500 = vunpack.c.l.b16 %v67
    %v501 = vunpack.c.l.b16 %v68
    %v502 = vunpack.c.l.b16 %v69
    %v503 = vunpack.c.l.b16 %v70
    %v504 = vunpack.c.l.b16 %v71
    %v505 = vunpack.c.l.b16 %v72
    %v506 = vunpack.c.l.b16 %v73
    %v507 = vunpack.c.l.b16 %v74
    %v508 = vunpack.c.l.b16 %v75
    %v509 = vunpack.c.l.b16 %v76
    %v510 = vunpack.c.l.b16 %v77
    %v511 = vunpack.c.l.b16 %v78
    %v512 = vunpack.c.l.b16 %v79
    %v513 = vunpack.c.l.b16 %v80
    %v514 = vunpack.c.l.b16 %v81
    %v515 = vunpack.c.l.b16 %v82
    %v516 = vunpack.c.l.b16 %v83
    %v517 = vunpack.c.l.b16 %v84
    %v518 = vunpack.c.l.b16 %v85
    %v519 = vunpack.c.l.b16 %v86
    %v520 = vunpack.c.l.b16 %v87
    %v521 = vunpack.c.l.b16 %v88
    %v522 = vunpack.c.l.b16 %v89
    %v523 = vunpack.c.l.b16 %v90
    %v524 = vunpack.c.l.b16 %v91
    %v525 = vunpack.c.l.b16 %v92
    %v526 = vunpack.c.l.b16 %v93
    %v527 = vunpack.c.l.b16 %v94
    %v528 = vunpack.c.l.b16 %v95
    %v529 = vunpack.c.l.b16 %v96
    %v530 = vunpack.c.l.b16 %v97
    %v531 = vunpack.c.l.b16 %v98
    %v532 = vunpack.c.l.b16 %v99
    %v533 = vunpack.c.l.b16 %v100
    %v534 = vunpack.c.l.b16 %v101
    %v535 = vunpack.c.l.b16 %v102
    %v536 = vunpack.c.l.b16 %v103
    %v537 = vunpack.c.l.b16 %v104
    %v538 = vunpack.c.l.b16 %v105
    %v539 = vunpack.c.l.b16 %v106
    %v540 = vunpack.c.l.b16 %v107
    %v541 = vunpack.c.l.b16 %v108
    %v542 = vunpack.c.l.b16 %v109
    %v543 = vunpack.c.l.b16 %v110
    %v544 = vunpack.c.l.b16 %v111
    %v545 = vunpack.c.l.b16 %v112
    %v546 = vunpack.c.l.b16 %v113
    %v547 = vunpack.c.l.b16 %v114
    %v548 = vunpack.c.l.b16 %v115
    %v549 = vunpack.c.l.b16 %v116
    %v550 = vunpack.c.l.b16 %v117
    %v551 = vunpack.c.l.b16 %v118
    %v552 = vunpack.c.l.b16 %v119
    %v553 = vunpack.c.l.b16 %v120
    %v554 = vunpack.c.l.b16 %v121
    %v555 = vunpack.c.l.b16 %v122
    %v556 = vunpack.c.l.b16 %v123
    %v557 = vunpack.c.l.b16 %v124
    %v558 = vunpack.c.l.b16 %v125
    %v559 = vunpack.c.l.b16 %v126
    %v560 = vunpack.c.l.b16 %v127
    %v561 = vunpack.c.l.b16 %v128
    %v562 = vunpack.c.l.b16 %v129
    %v563 = vunpack.c.l.b16 %v130
    %v564 = vunpack.c.l.b16 %v131
    %v565 = vunpack.c.l.b16 %v132
    %v566 = vunpack.c.l.b16 %v133
    %v567 = vunpack.c.l.b16 %v134
    %v568 = vunpack.c.l.b16 %v135
    %v569 = vunpack.c.l.b16 %v136
    %v570 = vunpack.c.l.b16 %v137
    %v571 = vunpack.c.l.b16 %v138
    %v572 = vunpack.c.l.b16 %v139
    %v573 = vunpack.c.l.b16 %v140
    %v574 = vunpack.c.l.b16 %v141
    %v575 = vunpack.c.l.b16 %v142
    %v576 = vunpack.c.l.b16 %v143
    %v577 = vunpack.c.l.b16 %v144
    %v578 = vunpack.c.l.b16 %v145
    %v579 = vunpack.c.l.b16 %v146
    %v580 = vunpack.c.l.b16 %v147
    %v581 = vunpack.c.l.b16 %v148
    %v582 = vunpack.c.l.b16 %v149
    %v583 = vunpack.c.l.b16 %v150
    %v584 = vunpack.c.l.b16 %v151
    %v585 = vunpack.c.l.b16 %v152
    %v586 = vunpack.c.l.b16 %v153
    %v587 = vunpack.c.l.b16 %v154
    %v588 = vunpack.c.l.b16 %v155
    %v589 = vunpack.c.l.b16 %v156
    %v590 = vunpack.c.l.b16 %v157
    %v591 = vunpack.c.l.b16 %v158
    %v592 = vunpack.c.l.b16 %v159
    %v593 = vunpack.c.l.b16 %v160
    %v594 = vunpack.c.l.b16 %v161
    %v595 = vunpack.c.l.b16 %v162
    %v596 = vunpack.c.l.b16 %v163
    %v597 = vunpack.c.l.b16 %v164
    %v598 = vunpack.c.l.b16 %v165
    %v599 = vunpack.c.l.b16 %v166
    %v600 = vunpack.c.l.b16 %v167
    %v601 = vunpack.c.l.b16 %v168
    %v602 = vunpack.c.l.b16 %v169
    %v603 = vunpack.c.l.b16 %v170
    %v604 = vunpack.c.l.b16 %v171
    %v605 = vunpack.c.l.b16 %v172
    %v606 = vunpack.c.l.b16 %v173
    %v607 = vunpack.c.l.b16 %v174
    %v608 = vunpack.c.l.b16 %v175
    %v609 = vunpack.c.l.b16 %v176
    %v610 = vunpack.c.l.b16 %v177
    %v611 = vunpack.c.l.b16 %v178
    %v612 = vunpack.c.l.b16 %v179
    %v613 = vunpack.c.l.b16 %v180
    %v614 = vunpack.c.l.b16 %v181
    %v615 = vunpack.c.l.b16 %v182
    %v616 = vunpack.c.l.b16 %v183
    %v617 = vunpack.c.l.b16 %v184
    %v618 = vunpack.c.l.b16 %v185
    %v619 = vunpack.c.l.b16 %v186
    %v620 = vunpack.c.l.b16 %v187
    %v621 = vunpack.c.l.b16 %v188
    %v622 = vunpack.c.l.b16 %v189
    %v623 = vunpack.c.l.b16 %v190
    %v624 = vunpack.c.l.b16 %v191
    %v625 = vunpack.c.l.b16 %v192
    %v626 = vunpack.c.l.b16 %v193
    %v627 = vunpack.c.l.b16 %v194
    %v628 = vunpack.c.l.b16 %v195
    %v629 = vunpack.c.l.b16 %v196
    %v630 = vunpack.c.l.b16 %v197
    %v631 = vunpack.c.l.b16 %v198
    %v632 = vunpack.c.l.b16 %v199
    %v633 = vunpack.c.l.b16 %v200
    %v634 = vunpack.c.l.b16 %v201
    %v635 = vunpack.c.l.b16 %v202
    %v636 = vunpack.c.l.b16 %v203
    %v637 = vunpack.c.l.b16 %v204
    %v638 = vunpack.c.l.b16 %v205
    %v639 = vunpack.c.l.b16 %v206
    %v640 = vunpack.c.l.b16 %v207
    %v641 = vunpack.c.l.b16 %v208
    %v642 = vunpack.c.l.b16 %v209
    %v643 = vunpack.c.l.b16 %v210
    %v644 = vunpack.c.l.b16 %v211
    %v645 = vunpack.c.l.b16 %v212
    %v646 = vunpack.c.l.b16 %v213
    %v647 = vunpack.c.l.b16 %v214
    %v648 = vunpack.c.l.b16 %v215
    %v649 = vunpack.c.l.b16 %v216
    %v650 = vunpack.c.l.b16 %v217
    %v651 = vunpack.c.l.b16 %v218
    %v652 = vunpack.c.l.b16 %v219
    %v653 = vunpack.c.l.b16 %v220
    %v654 = vunpack.c.l.b16 %v221
    %v655 = vunpack.c.l.b16 %v222
    %v656 = vunpack.c.l.b16 %v223
    %v657 = vunpack.c.l.b16 %v224
    %v658 = vunpack.c.l.b16 %v225
    %v659 = vunpack.c.l.b16 %v226
    %v660 = vunpack.c.l.b16 %v227
    %v661 = vunpack.c.l.b16 %v228
    %v662 = vunpack.c.l.b16 %v229
    %v663 = vpack.c.b16 %v464, %v463
    %v664 = vpack.c.b16 %v466, %v465
    %v665 = vpack.c.b16 %v468, %v467
    %v666 = vpack.c.b16 %v470, %v469
    %v667 = vpack.c.b16 %v472, %v471
    %v668 = vpack.c.b16 %v474, %v473
    %v669 = vpack.c.b16 %v476, %v475
    %v670 = vpack.c.b16 %v478, %v477
    %v671 = vpack.c.b16 %v480, %v479
    %v672 = vpack.c.b16 %v482, %v481
    %v673 = vpack.c.b16 %v484, %v483
    %v674 = vpack.c.b16 %v486, %v485
    %v675 = vpack.c.b16 %v488, %v487
    %v676 = vpack.c.b16 %v490, %v489
    %v677 = vpack.c.b16 %v492, %v491
    %v678 = vpack.c.b16 %v494, %v493
    %v679 = vpack.c.b16 %v496, %v495
    %v680 = vpack.c.b16 %v498, %v497
    %v681 = vpack.c.b16 %v500, %v499
    %v682 = vpack.c.b16 %v502, %v501
    %v683 = vpack.c.b16 %v504, %v503
    %v684 = vpack.c.b16 %v506, %v505
    %v685 = vpack.c.b16 %v508, %v507
    %v686 = vpack.c.b16 %v510, %v509
    %v687 = vpack.c.b16 %v512, %v511
    %v688 = vpack.c.b16 %v514, %v513
    %v689 = vpack.c.b16 %v516, %v515
    %v690 = vpack.c.b16 %v518, %v517
    %v691 = vpack.c.b16 %v520, %v519
    %v692 = vpack.c.b16 %v522, %v521
    %v693 = vpack.c.b16 %v524, %v523
    %v694 = vpack.c.b16 %v526, %v525
    %v695 = vpack.c.b16 %v528, %v527
    %v696 = vpack.c.b16 %v530, %v529
    %v697 = vpack.c.b16 %v532, %v531
    %v698 = vpack.c.b16 %v534, %v533
    %v699 = vpack.c.b16 %v536, %v535
    %v700 = vpack.c.b16 %v538, %v537
    %v701 = vpack.c.b16 %v540, %v539
    %v702 = vpack.c.b16 %v542, %v541
    %v703 = vpack.c.b16 %v544, %v543
    %v704 = vpack.c.b16 %v546, %v545
    %v705 = vpack.c.b16 %v548, %v547
    %v706 = vpack.c.b16 %v550, %v549
    %v707 = vpack.c.b16 %v552, %v551
    %v708 = vpack.c.b16 %v554, %v553
    %v709 = vpack.c.b16 %v556, %v555
    %v710 = vpack.c.b16 %v558, %v557
    %v711 = vpack.c.b16 %v560, %v559
    %v712 = vpack.c.b16 %v562, %v561
    %v713 = vpack.c.b16 %v564, %v563
    %v714 = vpack.c.b16 %v566, %v565
    %v715 = vpack.c.b16 %v568, %v567
    %v716 = vpack.c.b16 %v570, %v569
    %v717 = vpack.c.b16 %v572, %v571
    %v718 = vpack.c.b16 %v574, %v573
    %v719 = vpack.c.b16 %v576, %v575
    %v720 = vpack.c.b16 %v578, %v577
    %v721 = vpack.c.b16 %v580, %v579
    %v722 = vpack.c.b16 %v582, %v581
    %v723 = vpack.c.b16 %v584, %v583
    %v724 = vpack.c.b16 %v586, %v585
    %v725 = vpack.c.b16 %v588, %v587
    %v726 = vpack.c.b16 %v590, %v589
    %v727 = vpack.c.b16 %v592, %v591
    %v728 = vpack.c.b16 %v594, %v593
    %v729 = vpack.c.b16 %v596, %v595
    %v730 = vpack.c.b16 %v598, %v597
    %v731 = vpack.c.b16 %v600, %v599
    %v732 = vpack.c.b16 %v602, %v601
    %v733 = vpack.c.b16 %v604, %v603
    %v734 = vpack.c.b16 %v606, %v605
    %v735 = vpack.c.b16 %v608, %v607
    %v736 = vpack.c.b16 %v610, %v609
    %v737 = vpack.c.b16 %v612, %v611
    %v738 = vpack.c.b16 %v614, %v613
    %v739 = vpack.c.b16 %v616, %v615
    %v740 = vpack.c.b16 %v618, %v617
    %v741 = vpack.c.b16 %v620, %v619
    %v742 = vpack.c.b16 %v622, %v621
    %v743 = vpack.c.b16 %v624, %v623
    %v744 = vpack.c.b16 %v626, %v625
    %v745 = vpack.c.b16 %v628, %v627
    %v746 = vpack.c.b16 %v630, %v629
    %v747 = vpack.c.b16 %v632, %v631
    %v748 = vpack.c.b16 %v634, %v633
    %v749 = vpack.c.b16 %v636, %v635
    %v750 = vpack.c.b16 %v638, %v637
    %v751 = vpack.c.b16 %v640, %v639
    %v752 = vpack.c.b16 %v642, %v641
    %v753 = vpack.c.b16 %v644, %v643
    %v754 = vpack.c.b16 %v646, %v645
    %v755 = vpack.c.b16 %v648, %v647
    %v756 = vpack.c.b16 %v650, %v649
    %v757 = vpack.c.b16 %v652, %v651
    %v758 = vpack.c.b16 %v654, %v653
    %v759 = vpack.c.b16 %v656, %v655
    %v760 = vpack.c.b16 %v658, %v657
    %v761 = vpack.c.b16 %v660, %v659
    %v762 = vpack.c.b16 %v662, %v661
    %vm863 = vcmask 523264
    %v864 = vsel %vm863, %v250, 0
    %866 = vmatpush.bf16.msra.mxu0 %v670
    %867 = vmatpush.bf16.msra.mxu0 %v669
    %868 = vmatpush.bf16.msra.mxu0 %v668
    %869 = vmatpush.bf16.msra.mxu0 %v667
    %870 = vmatpush.bf16.msra.mxu0 %v666
    %871 = vmatpush.bf16.msra.mxu0 %v665
    %872 = vmatpush.bf16.msra.mxu0 %v664
    %873 = vmatpush.bf16.msra.mxu0 %v663
    %874 = vmatmul.bf16.gmra.mxu0 %v236
    %v875 = vpop.f32.mrf.mxu0
    %v876 = vadd.f32 %v232, %v875
    %v877 = vpop.f32.mrf.mxu0
    %878 = vdwg.mxu0
    %879 = vmatpush.bf16.msra.mxu0 %v678
    %880 = vmatpush.bf16.msra.mxu0 %v677
    %881 = vmatpush.bf16.msra.mxu0 %v676
    %882 = vmatpush.bf16.msra.mxu0 %v675
    %883 = vmatpush.bf16.msra.mxu0 %v674
    %884 = vmatpush.bf16.msra.mxu0 %v673
    %885 = vmatpush.bf16.msra.mxu0 %v672
    %886 = vmatpush.bf16.msra.mxu0 %v671
    %887 = vmatmul.bf16.gmra.mxu0 %v237
    %v888 = vpop.f32.mrf.mxu0
    %v889 = vadd.f32 %v876, %v888
    %v890 = vpop.f32.mrf.mxu0
    %891 = vdwg.mxu0
    %892 = vmatpush.bf16.msra.mxu0 %v686
    %893 = vmatpush.bf16.msra.mxu0 %v685
    %894 = vmatpush.bf16.msra.mxu0 %v684
    %895 = vmatpush.bf16.msra.mxu0 %v683
    %896 = vmatpush.bf16.msra.mxu0 %v682
    %897 = vmatpush.bf16.msra.mxu0 %v681
    %898 = vmatpush.bf16.msra.mxu0 %v680
    %899 = vmatpush.bf16.msra.mxu0 %v679
    %900 = vmatmul.bf16.gmra.mxu0 %v238
    %v901 = vpop.f32.mrf.mxu0
    %v902 = vadd.f32 %v889, %v901
    %v903 = vpop.f32.mrf.mxu0
    %904 = vdwg.mxu0
    %905 = vmatpush.bf16.msra.mxu0 %v694
    %906 = vmatpush.bf16.msra.mxu0 %v693
    %907 = vmatpush.bf16.msra.mxu0 %v692
    %908 = vmatpush.bf16.msra.mxu0 %v691
    %909 = vmatpush.bf16.msra.mxu0 %v690
    %910 = vmatpush.bf16.msra.mxu0 %v689
    %911 = vmatpush.bf16.msra.mxu0 %v688
    %912 = vmatpush.bf16.msra.mxu0 %v687
    %913 = vmatmul.bf16.gmra.mxu0 %v239
    %v914 = vpop.f32.mrf.mxu0
    %v915 = vadd.f32 %v902, %v914
    %v916 = vpop.f32.mrf.mxu0
    %917 = vdwg.mxu0
    %918 = vmatpush.bf16.msra.mxu0 %v702
    %919 = vmatpush.bf16.msra.mxu0 %v701
    %920 = vmatpush.bf16.msra.mxu0 %v700
    %921 = vmatpush.bf16.msra.mxu0 %v699
    %922 = vmatpush.bf16.msra.mxu0 %v698
    %923 = vmatpush.bf16.msra.mxu0 %v697
    %924 = vmatpush.bf16.msra.mxu0 %v696
    %925 = vmatpush.bf16.msra.mxu0 %v695
    %926 = vmatmul.bf16.gmra.mxu0 %v240
    %v927 = vpop.f32.mrf.mxu0
    %v928 = vadd.f32 %v915, %v927
    %v929 = vpop.f32.mrf.mxu0
    %930 = vdwg.mxu0
    %931 = vmatpush.bf16.msra.mxu0 %v710
    %932 = vmatpush.bf16.msra.mxu0 %v709
    %933 = vmatpush.bf16.msra.mxu0 %v708
    %934 = vmatpush.bf16.msra.mxu0 %v707
    %935 = vmatpush.bf16.msra.mxu0 %v706
    %936 = vmatpush.bf16.msra.mxu0 %v705
    %937 = vmatpush.bf16.msra.mxu0 %v704
    %938 = vmatpush.bf16.msra.mxu0 %v703
    %939 = vmatmul.bf16.gmra.mxu0 %v241
    %v940 = vpop.f32.mrf.mxu0
    %v941 = vadd.f32 %v928, %v940
    %v942 = vpop.f32.mrf.mxu0
    %943 = vdwg.mxu0
    %944 = vmatpush.bf16.msra.mxu0 %v718
    %945 = vmatpush.bf16.msra.mxu0 %v717
    %946 = vmatpush.bf16.msra.mxu0 %v716
    %947 = vmatpush.bf16.msra.mxu0 %v715
    %948 = vmatpush.bf16.msra.mxu0 %v714
    %949 = vmatpush.bf16.msra.mxu0 %v713
    %950 = vmatpush.bf16.msra.mxu0 %v712
    %951 = vmatpush.bf16.msra.mxu0 %v711
    %952 = vmatmul.bf16.gmra.mxu0 %v242
    %v953 = vpop.f32.mrf.mxu0
    %v954 = vadd.f32 %v941, %v953
    %v955 = vpop.f32.mrf.mxu0
    %956 = vdwg.mxu0
    %957 = vmatpush.bf16.msra.mxu0 %v726
    %958 = vmatpush.bf16.msra.mxu0 %v725
    %959 = vmatpush.bf16.msra.mxu0 %v724
    %960 = vmatpush.bf16.msra.mxu0 %v723
    %961 = vmatpush.bf16.msra.mxu0 %v722
    %962 = vmatpush.bf16.msra.mxu0 %v721
    %963 = vmatpush.bf16.msra.mxu0 %v720
    %964 = vmatpush.bf16.msra.mxu0 %v719
    %965 = vmatmul.bf16.gmra.mxu0 %v243
    %v966 = vpop.f32.mrf.mxu0
    %v967 = vadd.f32 %v954, %v966
    %v968 = vpop.f32.mrf.mxu0
    %969 = vdwg.mxu0
    %970 = vmatpush.bf16.msra.mxu0 %v734
    %971 = vmatpush.bf16.msra.mxu0 %v733
    %972 = vmatpush.bf16.msra.mxu0 %v732
    %973 = vmatpush.bf16.msra.mxu0 %v731
    %974 = vmatpush.bf16.msra.mxu0 %v730
    %975 = vmatpush.bf16.msra.mxu0 %v729
    %976 = vmatpush.bf16.msra.mxu0 %v728
    %977 = vmatpush.bf16.msra.mxu0 %v727
    %978 = vmatmul.bf16.gmra.mxu0 %v246
    %v979 = vpop.f32.mrf.mxu0
    %v980 = vadd.f32 %v967, %v979
    %v981 = vpop.f32.mrf.mxu0
    %982 = vdwg.mxu0
    %983 = vmatpush.bf16.msra.mxu0 %v742
    %984 = vmatpush.bf16.msra.mxu0 %v741
    %985 = vmatpush.bf16.msra.mxu0 %v740
    %986 = vmatpush.bf16.msra.mxu0 %v739
    %987 = vmatpush.bf16.msra.mxu0 %v738
    %988 = vmatpush.bf16.msra.mxu0 %v737
    %989 = vmatpush.bf16.msra.mxu0 %v736
    %990 = vmatpush.bf16.msra.mxu0 %v735
    %991 = vmatmul.bf16.gmra.mxu0 %v247
    %v992 = vpop.f32.mrf.mxu0
    %v993 = vadd.f32 %v980, %v992
    %v994 = vpop.f32.mrf.mxu0
    %995 = vdwg.mxu0
    %996 = vmatpush.bf16.msra.mxu0 %v750
    %997 = vmatpush.bf16.msra.mxu0 %v749
    %998 = vmatpush.bf16.msra.mxu0 %v748
    %999 = vmatpush.bf16.msra.mxu0 %v747
    %1000 = vmatpush.bf16.msra.mxu0 %v746
    %1001 = vmatpush.bf16.msra.mxu0 %v745
    %1002 = vmatpush.bf16.msra.mxu0 %v744
    %1003 = vmatpush.bf16.msra.mxu0 %v743
    %1004 = vmatmul.bf16.gmra.mxu0 %v248
    %v1005 = vpop.f32.mrf.mxu0
    %v1006 = vadd.f32 %v993, %v1005
    %v1007 = vpop.f32.mrf.mxu0
    %1008 = vdwg.mxu0
    %1009 = vmatpush.bf16.msra.mxu0 %v758
    %1010 = vmatpush.bf16.msra.mxu0 %v757
    %1011 = vmatpush.bf16.msra.mxu0 %v756
    %1012 = vmatpush.bf16.msra.mxu0 %v755
    %1013 = vmatpush.bf16.msra.mxu0 %v754
    %1014 = vmatpush.bf16.msra.mxu0 %v753
    %1015 = vmatpush.bf16.msra.mxu0 %v752
    %1016 = vmatpush.bf16.msra.mxu0 %v751
    %1017 = vmatmul.bf16.gmra.mxu0 %v249
    %v1018 = vpop.f32.mrf.mxu0
    %v1019 = vadd.f32 %v1006, %v1018
    %v1020 = vpop.f32.mrf.mxu0
    %1021 = vdwg.mxu0
    %1022 = vmatpush.bf16.msra.mxu0 0
    %1023 = vmatpush.bf16.msra.mxu0 0
    %1024 = vmatpush.bf16.msra.mxu0 0
    %1025 = vmatpush.bf16.msra.mxu0 0
    %1026 = vmatpush.bf16.msra.mxu0 %v762
    %1027 = vmatpush.bf16.msra.mxu0 %v761
    %1028 = vmatpush.bf16.msra.mxu0 %v760
    %1029 = vmatpush.bf16.msra.mxu0 %v759
    %1030 = vmatmul.bf16.gmra.mxu0 %v864
    %v1031 = vpop.f32.mrf.mxu0
    %v1032 = vadd.f32 %v1019, %v1031
    %v1033 = vpop.f32.mrf.mxu0
    %1034 = vdwg.mxu0
    %v1035 = vmax.f32 %v1032, 0.0
    %v1036 = vpack.c.bf16 %v1035, %v1035
    %v1037 = vld [vmem:[%s3] sm:$0xf]
    %v1038 = vld [vmem:[%s3 + $0x4] sm:$0xf]
    %v1039 = vld [vmem:[%s3 + $0x8] sm:$0xf]
    %v1040 = vld [vmem:[%s3 + $0xc] sm:$0xf]
    %v1041 = vld [vmem:[%s3 + $0x10] sm:$0xf]
    %v1042 = vld [vmem:[%s3 + $0x14] sm:$0xf]
    %v1043 = vld [vmem:[%s3 + $0x18] sm:$0xf]
    %v1044 = vld [vmem:[%s3 + $0x1c] sm:$0xf]
    %v1045 = vld [vmem:[%s4] sm:$0x1]
    %v1047 = vperm.slane %v1045, 0
    %v1057 = vunpack.c.l.b16 %v1037
    %v1058 = vunpack.c.l.b16 %v1038
    %v1059 = vunpack.c.l.b16 %v1039
    %v1060 = vunpack.c.l.b16 %v1040
    %v1061 = vunpack.c.l.b16 %v1041
    %v1062 = vunpack.c.l.b16 %v1042
    %v1063 = vunpack.c.l.b16 %v1043
    %v1064 = vunpack.c.l.b16 %v1044
    %v1065 = vpack.c.b16 %v1058, %v1057
    %v1066 = vpack.c.b16 %v1060, %v1059
    %v1067 = vpack.c.b16 %v1062, %v1061
    %v1068 = vpack.c.b16 %v1064, %v1063
    %v1074 = vsel %vm863, %v1036, 0
    %1076 = vmatpush.bf16.msra.mxu0 0
    %1077 = vmatpush.bf16.msra.mxu0 0
    %1078 = vmatpush.bf16.msra.mxu0 0
    %1079 = vmatpush.bf16.msra.mxu0 0
    %1080 = vmatpush.bf16.msra.mxu0 %v1068
    %1081 = vmatpush.bf16.msra.mxu0 %v1067
    %1082 = vmatpush.bf16.msra.mxu0 %v1066
    %1083 = vmatpush.bf16.msra.mxu0 %v1065
    %1084 = vmatmul.bf16.gmra.mxu0 %v1074
    %v1085 = vpop.f32.mrf.mxu0
    %v1086 = vadd.f32 %v1047, %v1085
    %v1087 = vpop.f32.mrf.mxu0
    %1088 = vdwg.mxu0
    %v1089 = vmax.f32 %v1086, 0.0
    %v1090 = vpack.c.bf16 %v1089, %v1089
    %v1091 = vld [vmem:[%s5] sm:$0xf]
    %v1092 = vld [vmem:[%s5 + $0x4] sm:$0xf]
    %v1093 = vld [vmem:[%s5 + $0x8] sm:$0xf]
    %v1094 = vld [vmem:[%s5 + $0xc] sm:$0xf]
    %v1095 = vld [vmem:[%s5 + $0x10] sm:$0xf]
    %v1096 = vld [vmem:[%s5 + $0x14] sm:$0xf]
    %v1097 = vld [vmem:[%s5 + $0x18] sm:$0xf]
    %v1098 = vld [vmem:[%s5 + $0x1c] sm:$0xf]
    %v1099 = vld [vmem:[%s5 + $0x20] sm:$0xf]
    %v1100 = vld [vmem:[%s5 + $0x24] sm:$0xf]
    %v1101 = vld [vmem:[%s5 + $0x28] sm:$0xf]
    %v1102 = vld [vmem:[%s5 + $0x2c] sm:$0xf]
    %v1103 = vld [vmem:[%s5 + $0x30] sm:$0xf]
    %v1104 = vld [vmem:[%s5 + $0x34] sm:$0xf]
    %v1105 = vld [vmem:[%s5 + $0x38] sm:$0xf]
    %v1106 = vld [vmem:[%s5 + $0x3c] sm:$0xf]
    %v1107 = vld [vmem:[%s6] sm:$0x1]
    %v1109 = vperm.slane %v1107, 0
    %v1127 = vunpack.c.l.b16 %v1091
    %v1128 = vunpack.c.l.b16 %v1092
    %v1129 = vunpack.c.l.b16 %v1093
    %v1130 = vunpack.c.l.b16 %v1094
    %v1131 = vunpack.c.l.b16 %v1095
    %v1132 = vunpack.c.l.b16 %v1096
    %v1133 = vunpack.c.l.b16 %v1097
    %v1134 = vunpack.c.l.b16 %v1098
    %v1135 = vunpack.c.l.b16 %v1099
    %v1136 = vunpack.c.l.b16 %v1100
    %v1137 = vunpack.c.l.b16 %v1101
    %v1138 = vunpack.c.l.b16 %v1102
    %v1139 = vunpack.c.l.b16 %v1103
    %v1140 = vunpack.c.l.b16 %v1104
    %v1141 = vunpack.c.l.b16 %v1105
    %v1142 = vunpack.c.l.b16 %v1106
    %v1143 = vpack.c.b16 %v1128, %v1127
    %v1144 = vpack.c.b16 %v1130, %v1129
    %v1145 = vpack.c.b16 %v1132, %v1131
    %v1146 = vpack.c.b16 %v1134, %v1133
    %v1147 = vpack.c.b16 %v1136, %v1135
    %v1148 = vpack.c.b16 %v1138, %v1137
    %v1149 = vpack.c.b16 %v1140, %v1139
    %v1150 = vpack.c.b16 %v1142, %v1141
    %1159 = vmatpush.bf16.msra.mxu0 %v1150
    %1160 = vmatpush.bf16.msra.mxu0 %v1149
    %1161 = vmatpush.bf16.msra.mxu0 %v1148
    %1162 = vmatpush.bf16.msra.mxu0 %v1147
    %1163 = vmatpush.bf16.msra.mxu0 %v1146
    %1164 = vmatpush.bf16.msra.mxu0 %v1145
    %1165 = vmatpush.bf16.msra.mxu0 %v1144
    %1166 = vmatpush.bf16.msra.mxu0 %v1143
    %1167 = vmatmul.bf16.gmra.mxu0 %v1090
    %v1168 = vpop.f32.mrf.mxu0
    %v1169 = vadd.f32 %v1109, %v1168
    %v1170 = vpop.f32.mrf.mxu0
    %1171 = vdwg.mxu0
    %1172 = vst [vmem:[#allocation2] sm:$0x3] %v1169
    // Predicated region
    $region30: #{embed_mnist_net_forward.5} parent=1 // pred_check
      _
    $region31: #{embed_mnist_net_forward.5} parent=1 // pred_check_branch
      %1174 = sbr.rel (0) target = $region33
    $region32: #{embed_mnist_net_forward.5} parent=1 // pred_region
      %1176 = vsyncadd [#allocation3], 0
      %s1178 = sshll.u32 [#allocation2], 4
      %s1179 = int_to_ptr.vmem [resolvable:$true] %s1178
      %s1180 = sshll.u32 %s7, 4
      %s1181 = int_to_ptr.hbm [resolvable:$true] %s1180
      %1183 = dma.vmem_to_hbm [thread:$0]  %s1179, 32, %s1181, [#allocation3]
    $region33: #{embed_mnist_net_forward.5} parent=1 // pred_fallthru
      _
    // Predicated region
    $region34: #{embed_mnist_net_forward.5} parent=1 // pred_check
      _
    $region35: #{embed_mnist_net_forward.5} parent=1 // pred_check_branch
      %1185 = sbr.rel (0) target = $region37
    $region36: #{embed_mnist_net_forward.5} parent=1 // pred_region
      %1187 = dma.done [#allocation3], 32
    $region37: #{embed_mnist_net_forward.5} parent=1 // pred_fallthru
      _
    %1188 = vsyncpa [#allocation3], 1

</llo_original>
